<compile_context>
chip_gen: v7x
topology: tpu7x:2x2x1
jax: 0.10.0
libtpu: 0.0.40
codegen_flags: <defaults>
</compile_context>

<pallas_src>
import jax
import jax.numpy as jnp
from jax import lax
from jax.experimental import pallas as pl
from jax.experimental.pallas import tpu as pltpu

BF16 = jnp.bfloat16


def _lstm_gates(gates, c_prev, H):
    """PyTorch LSTMCell i,f,g,o gate order (all f32)."""
    i = jax.nn.sigmoid(gates[:, 0 * H:1 * H])
    f = jax.nn.sigmoid(gates[:, 1 * H:2 * H])
    g = jnp.tanh(gates[:, 2 * H:3 * H])
    o = jax.nn.sigmoid(gates[:, 3 * H:4 * H])
    c_new = f * c_prev + i * g
    h_new = o * jnp.tanh(c_new)
    return h_new, c_new


# ----------------------- fused WordEncoder (grid over words) -----------------

def _word_encoder_kernel(xp_ref, whh_ref, h_out_ref, h_scr, c_scr):
    t = pl.program_id(0)

    @pl.when(t == 0)
    def _():
        h_scr[...] = jnp.zeros_like(h_scr)
        c_scr[...] = jnp.zeros_like(c_scr)

    H = h_scr.shape[1]
    gates = (xp_ref[...].astype(jnp.float32)
             + jnp.dot(h_scr[...].astype(BF16), whh_ref[...],
                       preferred_element_type=jnp.float32))
    h_new, c_new = _lstm_gates(gates, c_scr[...], H)
    h_scr[...] = h_new
    c_scr[...] = c_new

    @pl.when(t == pl.num_programs(0) - 1)
    def _():
        h_out_ref[...] = h_new


def word_encoder(xp_seq, whh):
    """xp_seq: (W, N, 4H) bf16 precomputed x@Wih+b (N = B*S); whh bf16. -> final h (N,H) f32."""
    T, N, G = xp_seq.shape
    H = whh.shape[0]
    return pl.pallas_call(
        _word_encoder_kernel,
        out_shape=jax.ShapeDtypeStruct((N, H), jnp.float32),
        grid_spec=pltpu.PrefetchScalarGridSpec(
            num_scalar_prefetch=0,
            grid=(T,),
            in_specs=[pl.BlockSpec((None, N, G), lambda t: (t, 0, 0)),
                      pl.BlockSpec((H, G), lambda t: (0, 0))],
            out_specs=pl.BlockSpec((N, H), lambda t: (0, 0)),
            scratch_shapes=[pltpu.VMEM((N, H), jnp.float32),
                            pltpu.VMEM((N, H), jnp.float32)],
        ),
        compiler_params=pltpu.CompilerParams(
            dimension_semantics=("arbitrary",)),
    )(xp_seq, whh)


# -------------------- fused SentenceEncoder (grid over sentences) ------------

def _sentence_encoder_kernel(xp_ref, whh_ref, out_ref, h_out_ref, c_out_ref,
                             h_scr, c_scr):
    s = pl.program_id(0)

    @pl.when(s == 0)
    def _():
        h_scr[...] = jnp.zeros_like(h_scr)
        c_scr[...] = jnp.zeros_like(c_scr)

    H = h_scr.shape[1]
    gates = (xp_ref[...].astype(jnp.float32)
             + jnp.dot(h_scr[...].astype(BF16), whh_ref[...],
                       preferred_element_type=jnp.float32))
    h_new, c_new = _lstm_gates(gates, c_scr[...], H)
    h_scr[...] = h_new
    c_scr[...] = c_new
    out_ref[...] = h_new

    @pl.when(s == pl.num_programs(0) - 1)
    def _():
        h_out_ref[...] = h_new
        c_out_ref[...] = c_new


def sentence_encoder(xp_seq, whh):
    """xp_seq: (S, B, 4H) bf16. Returns (sent_out (S,B,H) f32, h (B,H), c (B,H))."""
    S, B, G = xp_seq.shape
    H = whh.shape[0]
    return pl.pallas_call(
        _sentence_encoder_kernel,
        out_shape=(jax.ShapeDtypeStruct((S, B, H), jnp.float32),
                   jax.ShapeDtypeStruct((B, H), jnp.float32),
                   jax.ShapeDtypeStruct((B, H), jnp.float32)),
        grid_spec=pltpu.PrefetchScalarGridSpec(
            num_scalar_prefetch=0,
            grid=(S,),
            in_specs=[pl.BlockSpec((None, B, G), lambda s: (s, 0, 0)),
                      pl.BlockSpec((H, G), lambda s: (0, 0))],
            out_specs=[pl.BlockSpec((None, B, H), lambda s: (s, 0, 0)),
                       pl.BlockSpec((B, H), lambda s: (0, 0)),
                       pl.BlockSpec((B, H), lambda s: (0, 0))],
            scratch_shapes=[pltpu.VMEM((B, H), jnp.float32),
                            pltpu.VMEM((B, H), jnp.float32)],
        ),
        compiler_params=pltpu.CompilerParams(
            dimension_semantics=("arbitrary",)),
    )(xp_seq, whh)


# ----- fused decoder: all summaries, word-decoder LSTM + sentence-decoder ----
# grid = (num_summaries, T) both "arbitrary"; decoder/attention weights and the
# sentence-encoder outputs stay resident in VMEM for the whole grid.

def _decoder_kernel(xp_ref, h0_ref, c0_ref, wd_whh_ref,
                    enc_out_ref, enc_feat_ref, mask_ref,
                    sd_wih_ref, sd_whh_ref, sd_b_ref,
                    sd_wdec_ref, sd_v_ref, sd_wc_ctx_ref, sd_wc_hid_ref,
                    sd_bc_ref,
                    h_out_ref,
                    wh_scr, wc_scr, sh_scr, sc_scr):
    n = pl.program_id(0)
    t = pl.program_id(1)

    @pl.when((n == 0) & (t == 0))
    def _():
        wh_scr[...] = h0_ref[...]
        wc_scr[...] = c0_ref[...]
        sh_scr[...] = h0_ref[...]
        sc_scr[...] = c0_ref[...]

    H = wh_scr.shape[1]

    # Word-decoder LSTM step (teacher forced input projection precomputed).
    gates = (xp_ref[...].astype(jnp.float32)
             + jnp.dot(wh_scr[...].astype(BF16), wd_whh_ref[...],
                       preferred_element_type=jnp.float32))
    h_new, c_new = _lstm_gates(gates, wc_scr[...], H)
    wh_scr[...] = h_new
    wc_scr[...] = c_new
    h_out_ref[...] = h_new      # consumed by the batched vocab+CE kernel

    # After the last word of a summary: fused SentenceDecoder step.
    @pl.when(t == pl.num_programs(1) - 1)
    def _():
        g2 = (jnp.dot(h_new.astype(BF16), sd_wih_ref[...],
                      preferred_element_type=jnp.float32)
              + jnp.dot(sh_scr[...].astype(BF16), sd_whh_ref[...],
                        preferred_element_type=jnp.float32)
              + sd_b_ref[...])
        s_h, s_c = _lstm_gates(g2, sc_scr[...], H)

        # Masked additive attention over sentence encodings (S, B, H).
        dec_feat = jnp.dot(s_h.astype(BF16), sd_wdec_ref[...],
                           preferred_element_type=jnp.float32)          # (B,H)
        e = jnp.tanh(enc_feat_ref[...] + dec_feat[None, :, :])          # (S,B,H)
        scores = jnp.sum(e * sd_v_ref[...], axis=2, keepdims=True)      # (S,B,1)
        scores = jnp.where(mask_ref[...] > 0.0, scores, -1e30)          # fold mask
        scores = scores - jnp.max(scores, axis=0, keepdims=True)
        a = jnp.exp(scores)
        a = a * pl.reciprocal(jnp.sum(a, axis=0, keepdims=True))        # 1 exact recip
        context = jnp.sum(a * enc_out_ref[...], axis=0)                 # (B,H)

        final = jnp.tanh(
            jnp.dot(context.astype(BF16), sd_wc_ctx_ref[...],
                    preferred_element_type=jnp.float32)
            + jnp.dot(s_h.astype(BF16), sd_wc_hid_ref[...],
                      preferred_element_type=jnp.float32)
            + sd_bc_ref[...])

        # PyTorch carries: s_hx = final; w_hx = final; s_cx = c_new; w_cx = s_cx
        sh_scr[...] = final
        wh_scr[...] = final
        sc_scr[...] = s_c
        wc_scr[...] = s_c


def fused_decoder(xp_all, h0, c0, wd_whh, enc_out, enc_feat, mask,
                  sd_wih, sd_whh, sd_b, sd_wdec, sd_v, sd_wc_ctx, sd_wc_hid,
                  sd_bc):
    """xp_all: (Nsum, T, B, 4H) bf16.  Returns per-step hidden states (Nsum,T,B,H) f32."""
    NS, T, B, G = xp_all.shape
    H = h0.shape[1]
    S = enc_out.shape[0]
    const2 = lambda shape: pl.BlockSpec(shape, lambda n, t: tuple(0 for _ in shape))
    return pl.pallas_call(
        _decoder_kernel,
        out_shape=jax.ShapeDtypeStruct((NS, T, B, H), jnp.float32),
        grid_spec=pltpu.PrefetchScalarGridSpec(
            num_scalar_prefetch=0,
            grid=(NS, T),
            in_specs=[pl.BlockSpec((None, None, B, G), lambda n, t: (n, t, 0, 0)),
                      const2((B, H)), const2((B, H)),
                      const2((H, G)),
                      const2((S, B, H)), const2((S, B, H)), const2((S, B, 1)),
                      const2((H, G)), const2((H, G)), const2((1, G)),
                      const2((H, H)), const2((1, H)),
                      const2((H, H)), const2((H, H)), const2((1, H))],
            out_specs=pl.BlockSpec((None, None, B, H), lambda n, t: (n, t, 0, 0)),
            scratch_shapes=[pltpu.VMEM((B, H), jnp.float32)] * 4,
        ),
        compiler_params=pltpu.CompilerParams(
            dimension_semantics=("arbitrary", "arbitrary")),
    )(xp_all, h0, c0, wd_whh, enc_out, enc_feat, mask,
      sd_wih, sd_whh, sd_b, sd_wdec, sd_v, sd_wc_ctx, sd_wc_hid, sd_bc)


# ------ batched vocab projection + cross-entropy, vocab axis tiled (online LSE)

def _ce_kernel(h_ref, tgt_ref, w_ref, wv_ref, bv_ref, loss_ref,
               m_scr, l_scr, t_scr):
    v = pl.program_id(0)
    tV = wv_ref.shape[1]

    @pl.when(v == 0)
    def _():
        m_scr[...] = jnp.full_like(m_scr, -1e30)
        l_scr[...] = jnp.zeros_like(l_scr)
        t_scr[...] = jnp.zeros_like(t_scr)

    # (R, tV) logits for this vocab tile — one big MXU matmul (R = Nsum*T*B rows).
    logits = (jnp.dot(h_ref[...], wv_ref[...],
                      preferred_element_type=jnp.float32) + bv_ref[...])
    col = lax.broadcasted_iota(jnp.int32, logits.shape, 1) + v * tV
    t_scr[...] += jnp.sum(jnp.where(col == tgt_ref[...], logits, 0.0),
                          axis=1, keepdims=True)
    tile_max = jnp.max(logits, axis=1, keepdims=True)
    m_new = jnp.maximum(m_scr[...], tile_max)
    l_scr[...] = (l_scr[...] * jnp.exp(m_scr[...] - m_new)
                  + jnp.sum(jnp.exp(logits - m_new), axis=1, keepdims=True))
    m_scr[...] = m_new

    @pl.when(v == pl.num_programs(0) - 1)
    def _():
        lse = m_scr[...] + jnp.log(l_scr[...])
        # w_ref already carries ignore_index mask / per-step mean weights.
        loss_ref[...] = jnp.sum((lse - t_scr[...]) * w_ref[...]).reshape(1, 1)


def ce_loss(h_rows, tgt_rows, w_rows, wv, bv, *, tile_v=128):
    """h_rows (R,H) bf16, tgt_rows (R,1) int32, w_rows (R,1) f32, wv (H,V) bf16."""
    R, H = h_rows.shape
    V = wv.shape[1]
    assert V % tile_v == 0
    return pl.pallas_call(
        _ce_kernel,
        out_shape=jax.ShapeDtypeStruct((1, 1), jnp.float32),
        grid_spec=pltpu.PrefetchScalarGridSpec(
            num_scalar_prefetch=0,
            grid=(V // tile_v,),
            in_specs=[pl.BlockSpec((R, H), lambda v: (0, 0)),
                      pl.BlockSpec((R, 1), lambda v: (0, 0)),
                      pl.BlockSpec((R, 1), lambda v: (0, 0)),
                      pl.BlockSpec((H, tile_v), lambda v: (0, v)),
                      pl.BlockSpec((1, tile_v), lambda v: (0, v))],
            out_specs=pl.BlockSpec((1, 1), lambda v: (0, 0)),
            scratch_shapes=[pltpu.VMEM((R, 1), jnp.float32)] * 3,
        ),
        compiler_params=pltpu.CompilerParams(
            dimension_semantics=("arbitrary",)),
    )(h_rows, tgt_rows, w_rows, wv, bv)


# ------------------------------ parameters -----------------------------------

def init_params(key, vocab, embed, hidden):
    ks = jax.random.split(key, 20)

    def w(k, shape, scale=0.1):
        return jax.random.normal(k, shape, jnp.float32) * scale

    p = {}
    # WordEncoder: Embedding(padding_idx=0) + LSTMCell(E -> H)
    p['we_embed'] = w(ks[0], (vocab, embed)).at[0].set(0.0)
    p['we_wih'] = w(ks[1], (embed, 4 * hidden))
    p['we_whh'] = w(ks[2], (hidden, 4 * hidden))
    p['we_b'] = w(ks[3], (1, 4 * hidden))
    # SentenceEncoder: LSTMCell(H -> H) + feature projection (H -> H)
    p['se_wih'] = w(ks[4], (hidden, 4 * hidden))
    p['se_whh'] = w(ks[5], (hidden, 4 * hidden))
    p['se_b'] = w(ks[6], (1, 4 * hidden))
    p['se_wfeat'] = w(ks[7], (hidden, hidden))
    p['se_bfeat'] = w(ks[8], (1, hidden))
    # WordDecoder: Embedding(padding_idx=0) + LSTMCell(E -> H) + Linear(H -> V)
    p['wd_embed'] = w(ks[9], (vocab, embed)).at[0].set(0.0)
    p['wd_wih'] = w(ks[10], (embed, 4 * hidden))
    p['wd_whh'] = w(ks[11], (hidden, 4 * hidden))
    p['wd_b'] = w(ks[12], (1, 4 * hidden))
    p['wd_lin_w'] = w(ks[13], (hidden, vocab))
    p['wd_lin_b'] = w(ks[14], (1, vocab))
    # SentenceDecoder: LSTMCell(H -> H) + additive attention + output projection
    p['sd_wih'] = w(ks[15], (hidden, 4 * hidden))
    p['sd_whh'] = w(ks[16], (hidden, 4 * hidden))
    p['sd_b'] = w(ks[17], (1, 4 * hidden))
    p['sd_wdec'] = w(ks[18], (hidden, hidden))
    kk = jax.random.split(ks[19], 4)
    p['sd_v'] = w(kk[0], (1, hidden))
    p['sd_wc_ctx'] = w(kk[1], (hidden, hidden))
    p['sd_wc_hid'] = w(kk[2], (hidden, hidden))
    p['sd_bc'] = w(kk[3], (1, hidden))
    return p


# ------------------------------ forward (train) -------------------------------

def hierachical_forward_train(params, articles, summaries):
    """articles: (B, S, W) int32 word ids; summaries: (Nsum, B, Wsum) int32."""
    B, S, W = articles.shape
    NS, _, Wsum = summaries.shape
    T = Wsum - 1
    H = params['we_whh'].shape[0]

    # attention mask: 1.0 where the first word of a sentence is > 0; (S, B, 1)
    mask_t = (articles[:, :, 0] > 0).astype(jnp.float32).T[:, :, None]

    # --- WordEncoder: all B*S sentences batched, one fused kernel over W ------
    tokens = articles.reshape(B * S, W)
    x_we = jnp.take(params['we_embed'], tokens.T, axis=0)            # (W, B*S, E)
    xp_we = (jnp.einsum('tne,eg->tng', x_we.astype(BF16),
                        params['we_wih'].astype(BF16),
                        preferred_element_type=jnp.float32)
             + params['we_b']).astype(BF16)
    word_hx = word_encoder(xp_we, params['we_whh'].astype(BF16))     # (B*S, H)
    word_hx = word_hx.reshape(B, S, H).transpose(1, 0, 2)            # (S, B, H)

    # --- SentenceEncoder: one fused kernel over S; feature proj hoisted out --
    xp_se = (jnp.einsum('sbh,hg->sbg', word_hx.astype(BF16),
                        params['se_wih'].astype(BF16),
                        preferred_element_type=jnp.float32)
             + params['se_b']).astype(BF16)
    sent_out, s_hx, s_cx = sentence_encoder(xp_se, params['se_whh'].astype(BF16))
    sent_feat = (jnp.einsum('sbh,hf->sbf', sent_out.astype(BF16),
                            params['se_wfeat'].astype(BF16),
                            preferred_element_type=jnp.float32)
                 + params['se_bfeat'])                               # (S, B, H)

    # --- fused decoder over all summaries (teacher forced) --------------------
    inp = summaries[:, :, :-1]                                       # (NS, B, T)
    tgt = summaries[:, :, 1:]                                        # (NS, B, T)
    x_wd = jnp.take(params['wd_embed'], inp, axis=0).transpose(0, 2, 1, 3)  # (NS,T,B,E)
    xp_wd = (jnp.einsum('ntbe,eg->ntbg', x_wd.astype(BF16),
                        params['wd_wih'].astype(BF16),
                        preferred_element_type=jnp.float32)
             + params['wd_b']).astype(BF16)

    h_all = fused_decoder(
        xp_wd, s_hx, s_cx, params['wd_whh'].astype(BF16),
        sent_out, sent_feat, mask_t,
        params['sd_wih'].astype(BF16), params['sd_whh'].astype(BF16),
        params['sd_b'],
        params['sd_wdec'].astype(BF16), params['sd_v'],
        params['sd_wc_ctx'].astype(BF16), params['sd_wc_hid'].astype(BF16),
        params['sd_bc'])                                             # (NS,T,B,H)

    # --- batched vocab projection + CE (ignore_index=0, per-step mean, summed)
    R = NS * T * B
    h_rows = h_all.reshape(R, H).astype(BF16)
    tgt_ntb = tgt.transpose(0, 2, 1)                                 # (NS, T, B)
    valid = (tgt_ntb != 0).astype(jnp.float32)
    # per-(summary, step) mean over non-ignored tokens; all-padding steps are
    # clamped to 0 instead of NaN (documented deviation from F.cross_entropy).
    cnt = jnp.maximum(jnp.sum(valid, axis=2, keepdims=True), 1.0)
    w_rows = (valid / cnt).reshape(R, 1)
    tgt_rows = tgt_ntb.reshape(R, 1).astype(jnp.int32)

    loss = ce_loss(h_rows, tgt_rows, w_rows,
                   params['wd_lin_w'].astype(BF16), params['wd_lin_b'])
    return loss[0, 0]


# ----------------------------------- main -------------------------------------

if __name__ == "__main__":
    B, S, W, Wsum = 8, 4, 8, 6      # batch, sentences/article, words/sentence
    NSUM = 2                        # summary sentences (teacher-forced)
    V, E, H = 256, 64, 128          # vocab, embed, hidden (lane-dense H)

    key = jax.random.PRNGKey(0)
    kp, ka, ks = jax.random.split(key, 3)
    params = init_params(kp, V, E, H)

    articles = jax.random.randint(ka, (B, S, W), 1, V, dtype=jnp.int32)
    # zero one sentence's leading word to exercise the attention-mask path
    articles = articles.at[1, 3, 0].set(0)

    summaries = jax.random.randint(ks, (NSUM, B, Wsum), 1, V, dtype=jnp.int32)
    # introduce some padding targets to exercise ignore_index=0
    summaries = summaries.at[0, 0, -1].set(0)
    summaries = summaries.at[1, 3, -2:].set(0)

    fwd = jax.jit(hierachical_forward_train)
    loss = fwd(params, articles, summaries)
    jax.block_until_ready(loss)
    assert jnp.isfinite(loss)
    print("KERNEL_OK")
</pallas_src>

<mosaic_0001>
module attributes {stable_mosaic.version = 11 : i64} {
  func.func @_word_encoder_kernel(%arg0: i32, %arg1: memref<1x32x512xbf16, #tpu.memory_space<vmem>>, %arg2: memref<128x512xbf16, #tpu.memory_space<vmem>>, %arg3: memref<32x128xf32, #tpu.memory_space<vmem>>, %arg4: memref<32x128xf32, #tpu.memory_space<vmem>>, %arg5: memref<32x128xf32, #tpu.memory_space<vmem>>) attributes {dimension_semantics = [#tpu.dimension_semantics<arbitrary>], iteration_bounds = array<i64: 8>, scalar_prefetch = 0 : i64, scratch_operands = 2 : i64, tpu.core_type = #tpu.core_type<tc>, window_params = [{transform_indices = @transform_0, window_bounds = array<i64: 1, 32, 512>}, {pipeline_mode = #tpu.pipeline_mode<synchronous>, transform_indices = @transform_1, window_bounds = array<i64: 128, 512>}, {pipeline_mode = #tpu.pipeline_mode<synchronous>, transform_indices = @transform_2, window_bounds = array<i64: 32, 128>}]} {
    %c0_i32 = arith.constant 0 : i32
    %0 = arith.cmpi eq, %arg0, %c0_i32 : i32
    %1 = arith.extui %0 : i1 to i32
    %c0_i32_0 = arith.constant 0 : i32
    %2 = arith.cmpi ne, %1, %c0_i32_0 : i32
    scf.if %2 {
      %cst_17 = arith.constant 0.000000e+00 : f32
      %42 = vector.broadcast %cst_17 : f32 to vector<32x128xf32>
      %c0_18 = arith.constant 0 : index
      %c0_19 = arith.constant 0 : index
      %43 = vector.load %arg4[%c0_18, %c0_19] : memref<32x128xf32, #tpu.memory_space<vmem>>, vector<32x128xf32>
      tpu.vector_store %arg4[%c0_18, %c0_19], %42 {strides = array<i32>} : memref<32x128xf32, #tpu.memory_space<vmem>>, vector<32x128xf32>,
      %cst_20 = arith.constant 0.000000e+00 : f32
      %44 = vector.broadcast %cst_20 : f32 to vector<32x128xf32>
      %c0_21 = arith.constant 0 : index
      %c0_22 = arith.constant 0 : index
      %45 = vector.load %arg5[%c0_21, %c0_22] : memref<32x128xf32, #tpu.memory_space<vmem>>, vector<32x128xf32>
      tpu.vector_store %arg5[%c0_21, %c0_22], %44 {strides = array<i32>} : memref<32x128xf32, #tpu.memory_space<vmem>>, vector<32x128xf32>,
    } else {
    }
    %c0 = arith.constant 0 : index
    %c0_1 = arith.constant 0 : index
    %c0_2 = arith.constant 0 : index
    %3 = vector.load %arg1[%c0, %c0_1, %c0_2] : memref<1x32x512xbf16, #tpu.memory_space<vmem>>, vector<1x32x512xbf16>
    %4 = vector.shape_cast %3 : vector<1x32x512xbf16> to vector<32x512xbf16>
    %5 = arith.extf %4 : vector<32x512xbf16> to vector<32x512xf32>
    %c0_3 = arith.constant 0 : index
    %c0_4 = arith.constant 0 : index
    %6 = vector.load %arg4[%c0_3, %c0_4] : memref<32x128xf32, #tpu.memory_space<vmem>>, vector<32x128xf32>
    %7 = arith.truncf %6 : vector<32x128xf32> to vector<32x128xbf16>
    %c0_5 = arith.constant 0 : index
    %c0_6 = arith.constant 0 : index
    %8 = vector.load %arg2[%c0_5, %c0_6] : memref<128x512xbf16, #tpu.memory_space<vmem>>, vector<128x512xbf16>
    %cst = arith.constant dense<0.000000e+00> : vector<32x512xf32>
    %9 = tpu.matmul %7, %8, %cst {dimension_numbers = #tpu.dot_dimension_numbers<[1], [0], [0], [1], [0, 0, 1, 1], [], []>} : vector<32x128xbf16>, vector<128x512xbf16>, vector<32x512xf32> -> vector<32x512xf32>
    %10 = arith.addf %5, %9 : vector<32x512xf32>
    %c0_7 = arith.constant 0 : index
    %c0_8 = arith.constant 0 : index
    %11 = vector.load %arg5[%c0_7, %c0_8] : memref<32x128xf32, #tpu.memory_space<vmem>>, vector<32x128xf32>
    %12 = vector.extract_strided_slice %10 {offsets = [0, 0], sizes = [32, 128], strides = [1, 1]} : vector<32x512xf32> to vector<32x128xf32>
    %13 = arith.negf %12 : vector<32x128xf32>
    %14 = math.exp %13 : vector<32x128xf32>
    %cst_9 = arith.constant 1.000000e+00 : f32
    %15 = vector.broadcast %cst_9 : f32 to vector<32x128xf32>
    %16 = arith.addf %15, %14 : vector<32x128xf32>
    %17 = arith.divf %15, %16 : vector<32x128xf32>
    %18 = vector.extract_strided_slice %10 {offsets = [0, 128], sizes = [32, 128], strides = [1, 1]} : vector<32x512xf32> to vector<32x128xf32>
    %19 = arith.negf %18 : vector<32x128xf32>
    %20 = math.exp %19 : vector<32x128xf32>
    %cst_10 = arith.constant 1.000000e+00 : f32
    %21 = vector.broadcast %cst_10 : f32 to vector<32x128xf32>
    %22 = arith.addf %21, %20 : vector<32x128xf32>
    %23 = arith.divf %21, %22 : vector<32x128xf32>
    %24 = vector.extract_strided_slice %10 {offsets = [0, 256], sizes = [32, 128], strides = [1, 1]} : vector<32x512xf32> to vector<32x128xf32>
    %25 = math.tanh %24 : vector<32x128xf32>
    %26 = vector.extract_strided_slice %10 {offsets = [0, 384], sizes = [32, 128], strides = [1, 1]} : vector<32x512xf32> to vector<32x128xf32>
    %27 = arith.negf %26 : vector<32x128xf32>
    %28 = math.exp %27 : vector<32x128xf32>
    %cst_11 = arith.constant 1.000000e+00 : f32
    %29 = vector.broadcast %cst_11 : f32 to vector<32x128xf32>
    %30 = arith.addf %29, %28 : vector<32x128xf32>
    %31 = arith.divf %29, %30 : vector<32x128xf32>
    %32 = arith.mulf %23, %11 : vector<32x128xf32>
    %33 = arith.mulf %17, %25 : vector<32x128xf32>
    %34 = arith.addf %32, %33 : vector<32x128xf32>
    %35 = math.tanh %34 : vector<32x128xf32>
    %36 = arith.mulf %31, %35 : vector<32x128xf32>
    %c0_12 = arith.constant 0 : index
    %c0_13 = arith.constant 0 : index
    %37 = vector.load %arg4[%c0_12, %c0_13] : memref<32x128xf32, #tpu.memory_space<vmem>>, vector<32x128xf32>
    tpu.vector_store %arg4[%c0_12, %c0_13], %36 {strides = array<i32>} : memref<32x128xf32, #tpu.memory_space<vmem>>, vector<32x128xf32>,
    %c0_14 = arith.constant 0 : index
    %c0_15 = arith.constant 0 : index
    %38 = vector.load %arg5[%c0_14, %c0_15] : memref<32x128xf32, #tpu.memory_space<vmem>>, vector<32x128xf32>
    tpu.vector_store %arg5[%c0_14, %c0_15], %34 {strides = array<i32>} : memref<32x128xf32, #tpu.memory_space<vmem>>, vector<32x128xf32>,
    %c7_i32 = arith.constant 7 : i32
    %39 = arith.cmpi eq, %arg0, %c7_i32 : i32
    %40 = arith.extui %39 : i1 to i32
    %c0_i32_16 = arith.constant 0 : i32
    %41 = arith.cmpi ne, %40, %c0_i32_16 : i32
    scf.if %41 {
      %c0_17 = arith.constant 0 : index
      %c0_18 = arith.constant 0 : index
      %42 = vector.load %arg3[%c0_17, %c0_18] : memref<32x128xf32, #tpu.memory_space<vmem>>, vector<32x128xf32>
      tpu.vector_store %arg3[%c0_17, %c0_18], %36 {strides = array<i32>} : memref<32x128xf32, #tpu.memory_space<vmem>>, vector<32x128xf32>,
    } else {
    }
    return
  }
  func.func @transform_0(%arg0: i32) -> (i32, i32, i32) {
    %c0_i32 = arith.constant 0 : i32
    %c0_i32_0 = arith.constant 0 : i32
    %c0_i32_1 = arith.constant 0 : i32
    return %arg0, %c0_i32, %c0_i32_0 : i32, i32, i32
  }
  func.func @transform_1(%arg0: i32) -> (i32, i32) {
    %c0_i32 = arith.constant 0 : i32
    %c0_i32_0 = arith.constant 0 : i32
    %c0_i32_1 = arith.constant 0 : i32
    return %c0_i32, %c0_i32_0 : i32, i32
  }
  func.func @transform_2(%arg0: i32) -> (i32, i32) {
    %c0_i32 = arith.constant 0 : i32
    %c0_i32_0 = arith.constant 0 : i32
    %c0_i32_1 = arith.constant 0 : i32
    return %c0_i32, %c0_i32_0 : i32, i32
  }
}

module attributes {stable_mosaic.version = 11 : i64} {
  func.func @_sentence_encoder_kernel(%arg0: i32, %arg1: memref<1x8x512xbf16, #tpu.memory_space<vmem>>, %arg2: memref<128x512xbf16, #tpu.memory_space<vmem>>, %arg3: memref<1x8x128xf32, #tpu.memory_space<vmem>>, %arg4: memref<8x128xf32, #tpu.memory_space<vmem>>, %arg5: memref<8x128xf32, #tpu.memory_space<vmem>>, %arg6: memref<8x128xf32, #tpu.memory_space<vmem>>, %arg7: memref<8x128xf32, #tpu.memory_space<vmem>>) attributes {dimension_semantics = [#tpu.dimension_semantics<arbitrary>], iteration_bounds = array<i64: 4>, scalar_prefetch = 0 : i64, scratch_operands = 2 : i64, tpu.core_type = #tpu.core_type<tc>, window_params = [{transform_indices = @transform_0, window_bounds = array<i64: 1, 8, 512>}, {pipeline_mode = #tpu.pipeline_mode<synchronous>, transform_indices = @transform_1, window_bounds = array<i64: 128, 512>}, {transform_indices = @transform_2, window_bounds = array<i64: 1, 8, 128>}, {pipeline_mode = #tpu.pipeline_mode<synchronous>, transform_indices = @transform_3, window_bounds = array<i64: 8, 128>}, {pipeline_mode = #tpu.pipeline_mode<synchronous>, transform_indices = @transform_4, window_bounds = array<i64: 8, 128>}]} {
    %c0_i32 = arith.constant 0 : i32
    %0 = arith.cmpi eq, %arg0, %c0_i32 : i32
    %1 = arith.extui %0 : i1 to i32
    %c0_i32_0 = arith.constant 0 : i32
    %2 = arith.cmpi ne, %1, %c0_i32_0 : i32
    scf.if %2 {
      %cst_20 = arith.constant 0.000000e+00 : f32
      %45 = vector.broadcast %cst_20 : f32 to vector<8x128xf32>
      %c0_21 = arith.constant 0 : index
      %c0_22 = arith.constant 0 : index
      %46 = vector.load %arg6[%c0_21, %c0_22] : memref<8x128xf32, #tpu.memory_space<vmem>>, vector<8x128xf32>
      tpu.vector_store %arg6[%c0_21, %c0_22], %45 {strides = array<i32>} : memref<8x128xf32, #tpu.memory_space<vmem>>, vector<8x128xf32>,
      %cst_23 = arith.constant 0.000000e+00 : f32
      %47 = vector.broadcast %cst_23 : f32 to vector<8x128xf32>
      %c0_24 = arith.constant 0 : index
      %c0_25 = arith.constant 0 : index
      %48 = vector.load %arg7[%c0_24, %c0_25] : memref<8x128xf32, #tpu.memory_space<vmem>>, vector<8x128xf32>
      tpu.vector_store %arg7[%c0_24, %c0_25], %47 {strides = array<i32>} : memref<8x128xf32, #tpu.memory_space<vmem>>, vector<8x128xf32>,
    } else {
    }
    %c0 = arith.constant 0 : index
    %c0_1 = arith.constant 0 : index
    %c0_2 = arith.constant 0 : index
    %3 = vector.load %arg1[%c0, %c0_1, %c0_2] : memref<1x8x512xbf16, #tpu.memory_space<vmem>>, vector<1x8x512xbf16>
    %4 = vector.shape_cast %3 : vector<1x8x512xbf16> to vector<8x512xbf16>
    %5 = arith.extf %4 : vector<8x512xbf16> to vector<8x512xf32>
    %c0_3 = arith.constant 0 : index
    %c0_4 = arith.constant 0 : index
    %6 = vector.load %arg6[%c0_3, %c0_4] : memref<8x128xf32, #tpu.memory_space<vmem>>, vector<8x128xf32>
    %7 = arith.truncf %6 : vector<8x128xf32> to vector<8x128xbf16>
    %c0_5 = arith.constant 0 : index
    %c0_6 = arith.constant 0 : index
    %8 = vector.load %arg2[%c0_5, %c0_6] : memref<128x512xbf16, #tpu.memory_space<vmem>>, vector<128x512xbf16>
    %cst = arith.constant dense<0.000000e+00> : vector<8x512xf32>
    %9 = tpu.matmul %7, %8, %cst {dimension_numbers = #tpu.dot_dimension_numbers<[1], [0], [0], [1], [0, 0, 1, 1], [], []>} : vector<8x128xbf16>, vector<128x512xbf16>, vector<8x512xf32> -> vector<8x512xf32>
    %10 = arith.addf %5, %9 : vector<8x512xf32>
    %c0_7 = arith.constant 0 : index
    %c0_8 = arith.constant 0 : index
    %11 = vector.load %arg7[%c0_7, %c0_8] : memref<8x128xf32, #tpu.memory_space<vmem>>, vector<8x128xf32>
    %12 = vector.extract_strided_slice %10 {offsets = [0, 0], sizes = [8, 128], strides = [1, 1]} : vector<8x512xf32> to vector<8x128xf32>
    %13 = arith.negf %12 : vector<8x128xf32>
    %14 = math.exp %13 : vector<8x128xf32>
    %cst_9 = arith.constant 1.000000e+00 : f32
    %15 = vector.broadcast %cst_9 : f32 to vector<8x128xf32>
    %16 = arith.addf %15, %14 : vector<8x128xf32>
    %17 = arith.divf %15, %16 : vector<8x128xf32>
    %18 = vector.extract_strided_slice %10 {offsets = [0, 128], sizes = [8, 128], strides = [1, 1]} : vector<8x512xf32> to vector<8x128xf32>
    %19 = arith.negf %18 : vector<8x128xf32>
    %20 = math.exp %19 : vector<8x128xf32>
    %cst_10 = arith.constant 1.000000e+00 : f32
    %21 = vector.broadcast %cst_10 : f32 to vector<8x128xf32>
    %22 = arith.addf %21, %20 : vector<8x128xf32>
    %23 = arith.divf %21, %22 : vector<8x128xf32>
    %24 = vector.extract_strided_slice %10 {offsets = [0, 256], sizes = [8, 128], strides = [1, 1]} : vector<8x512xf32> to vector<8x128xf32>
    %25 = math.tanh %24 : vector<8x128xf32>
    %26 = vector.extract_strided_slice %10 {offsets = [0, 384], sizes = [8, 128], strides = [1, 1]} : vector<8x512xf32> to vector<8x128xf32>
    %27 = arith.negf %26 : vector<8x128xf32>
    %28 = math.exp %27 : vector<8x128xf32>
    %cst_11 = arith.constant 1.000000e+00 : f32
    %29 = vector.broadcast %cst_11 : f32 to vector<8x128xf32>
    %30 = arith.addf %29, %28 : vector<8x128xf32>
    %31 = arith.divf %29, %30 : vector<8x128xf32>
    %32 = arith.mulf %23, %11 : vector<8x128xf32>
    %33 = arith.mulf %17, %25 : vector<8x128xf32>
    %34 = arith.addf %32, %33 : vector<8x128xf32>
    %35 = math.tanh %34 : vector<8x128xf32>
    %36 = arith.mulf %31, %35 : vector<8x128xf32>
    %c0_12 = arith.constant 0 : index
    %c0_13 = arith.constant 0 : index
    %37 = vector.load %arg6[%c0_12, %c0_13] : memref<8x128xf32, #tpu.memory_space<vmem>>, vector<8x128xf32>
    tpu.vector_store %arg6[%c0_12, %c0_13], %36 {strides = array<i32>} : memref<8x128xf32, #tpu.memory_space<vmem>>, vector<8x128xf32>,
    %c0_14 = arith.constant 0 : index
    %c0_15 = arith.constant 0 : index
    %38 = vector.load %arg7[%c0_14, %c0_15] : memref<8x128xf32, #tpu.memory_space<vmem>>, vector<8x128xf32>
    tpu.vector_store %arg7[%c0_14, %c0_15], %34 {strides = array<i32>} : memref<8x128xf32, #tpu.memory_space<vmem>>, vector<8x128xf32>,
    %c0_16 = arith.constant 0 : index
    %c0_17 = arith.constant 0 : index
    %c0_18 = arith.constant 0 : index
    %39 = vector.load %arg3[%c0_16, %c0_17, %c0_18] : memref<1x8x128xf32, #tpu.memory_space<vmem>>, vector<1x8x128xf32>
    %40 = vector.shape_cast %39 : vector<1x8x128xf32> to vector<8x128xf32>
    %41 = vector.shape_cast %36 : vector<8x128xf32> to vector<1x8x128xf32>
    tpu.vector_store %arg3[%c0_16, %c0_17, %c0_18], %41 {strides = array<i32>} : memref<1x8x128xf32, #tpu.memory_space<vmem>>, vector<1x8x128xf32>,
    %c3_i32 = arith.constant 3 : i32
    %42 = arith.cmpi eq, %arg0, %c3_i32 : i32
    %43 = arith.extui %42 : i1 to i32
    %c0_i32_19 = arith.constant 0 : i32
    %44 = arith.cmpi ne, %43, %c0_i32_19 : i32
    scf.if %44 {
      %c0_20 = arith.constant 0 : index
      %c0_21 = arith.constant 0 : index
      %45 = vector.load %arg4[%c0_20, %c0_21] : memref<8x128xf32, #tpu.memory_space<vmem>>, vector<8x128xf32>
      tpu.vector_store %arg4[%c0_20, %c0_21], %36 {strides = array<i32>} : memref<8x128xf32, #tpu.memory_space<vmem>>, vector<8x128xf32>,
      %c0_22 = arith.constant 0 : index
      %c0_23 = arith.constant 0 : index
      %46 = vector.load %arg5[%c0_22, %c0_23] : memref<8x128xf32, #tpu.memory_space<vmem>>, vector<8x128xf32>
      tpu.vector_store %arg5[%c0_22, %c0_23], %34 {strides = array<i32>} : memref<8x128xf32, #tpu.memory_space<vmem>>, vector<8x128xf32>,
    } else {
    }
    return
  }
  func.func @transform_0(%arg0: i32) -> (i32, i32, i32) {
    %c0_i32 = arith.constant 0 : i32
    %c0_i32_0 = arith.constant 0 : i32
    %c0_i32_1 = arith.constant 0 : i32
    return %arg0, %c0_i32, %c0_i32_0 : i32, i32, i32
  }
  func.func @transform_1(%arg0: i32) -> (i32, i32) {
    %c0_i32 = arith.constant 0 : i32
    %c0_i32_0 = arith.constant 0 : i32
    %c0_i32_1 = arith.constant 0 : i32
    return %c0_i32, %c0_i32_0 : i32, i32
  }
  func.func @transform_2(%arg0: i32) -> (i32, i32, i32) {
    %c0_i32 = arith.constant 0 : i32
    %c0_i32_0 = arith.constant 0 : i32
    %c0_i32_1 = arith.constant 0 : i32
    return %arg0, %c0_i32, %c0_i32_0 : i32, i32, i32
  }
  func.func @transform_3(%arg0: i32) -> (i32, i32) {
    %c0_i32 = arith.constant 0 : i32
    %c0_i32_0 = arith.constant 0 : i32
    %c0_i32_1 = arith.constant 0 : i32
    return %c0_i32, %c0_i32_0 : i32, i32
  }
  func.func @transform_4(%arg0: i32) -> (i32, i32) {
    %c0_i32 = arith.constant 0 : i32
    %c0_i32_0 = arith.constant 0 : i32
    %c0_i32_1 = arith.constant 0 : i32
    return %c0_i32, %c0_i32_0 : i32, i32
  }
}

module attributes {stable_mosaic.version = 11 : i64} {
  func.func @_decoder_kernel(%arg0: i32, %arg1: i32, %arg2: memref<1x1x8x512xbf16, #tpu.memory_space<vmem>>, %arg3: memref<8x128xf32, #tpu.memory_space<vmem>>, %arg4: memref<8x128xf32, #tpu.memory_space<vmem>>, %arg5: memref<128x512xbf16, #tpu.memory_space<vmem>>, %arg6: memref<4x8x128xf32, #tpu.memory_space<vmem>>, %arg7: memref<4x8x128xf32, #tpu.memory_space<vmem>>, %arg8: memref<4x8x1xf32, #tpu.memory_space<vmem>>, %arg9: memref<128x512xbf16, #tpu.memory_space<vmem>>, %arg10: memref<128x512xbf16, #tpu.memory_space<vmem>>, %arg11: memref<1x512xf32, #tpu.memory_space<vmem>>, %arg12: memref<128x128xbf16, #tpu.memory_space<vmem>>, %arg13: memref<1x128xf32, #tpu.memory_space<vmem>>, %arg14: memref<128x128xbf16, #tpu.memory_space<vmem>>, %arg15: memref<128x128xbf16, #tpu.memory_space<vmem>>, %arg16: memref<1x128xf32, #tpu.memory_space<vmem>>, %arg17: memref<1x1x8x128xf32, #tpu.memory_space<vmem>>, %arg18: memref<8x128xf32, #tpu.memory_space<vmem>>, %arg19: memref<8x128xf32, #tpu.memory_space<vmem>>, %arg20: memref<8x128xf32, #tpu.memory_space<vmem>>, %arg21: memref<8x128xf32, #tpu.memory_space<vmem>>) attributes {dimension_semantics = [#tpu.dimension_semantics<arbitrary>, #tpu.dimension_semantics<arbitrary>], iteration_bounds = array<i64: 2, 5>, scalar_prefetch = 0 : i64, scratch_operands = 4 : i64, tpu.core_type = #tpu.core_type<tc>, window_params = [{transform_indices = @transform_0, window_bounds = array<i64: 1, 1, 8, 512>}, {pipeline_mode = #tpu.pipeline_mode<synchronous>, transform_indices = @transform_1, window_bounds = array<i64: 8, 128>}, {pipeline_mode = #tpu.pipeline_mode<synchronous>, transform_indices = @transform_2, window_bounds = array<i64: 8, 128>}, {pipeline_mode = #tpu.pipeline_mode<synchronous>, transform_indices = @transform_3, window_bounds = array<i64: 128, 512>}, {pipeline_mode = #tpu.pipeline_mode<synchronous>, transform_indices = @transform_4, window_bounds = array<i64: 4, 8, 128>}, {pipeline_mode = #tpu.pipeline_mode<synchronous>, transform_indices = @transform_5, window_bounds = array<i64: 4, 8, 128>}, {pipeline_mode = #tpu.pipeline_mode<synchronous>, transform_indices = @transform_6, window_bounds = array<i64: 4, 8, 1>}, {pipeline_mode = #tpu.pipeline_mode<synchronous>, transform_indices = @transform_7, window_bounds = array<i64: 128, 512>}, {pipeline_mode = #tpu.pipeline_mode<synchronous>, transform_indices = @transform_8, window_bounds = array<i64: 128, 512>}, {pipeline_mode = #tpu.pipeline_mode<synchronous>, transform_indices = @transform_9, window_bounds = array<i64: 1, 512>}, {pipeline_mode = #tpu.pipeline_mode<synchronous>, transform_indices = @transform_10, window_bounds = array<i64: 128, 128>}, {pipeline_mode = #tpu.pipeline_mode<synchronous>, transform_indices = @transform_11, window_bounds = array<i64: 1, 128>}, {pipeline_mode = #tpu.pipeline_mode<synchronous>, transform_indices = @transform_12, window_bounds = array<i64: 128, 128>}, {pipeline_mode = #tpu.pipeline_mode<synchronous>, transform_indices = @transform_13, window_bounds = array<i64: 128, 128>}, {pipeline_mode = #tpu.pipeline_mode<synchronous>, transform_indices = @transform_14, window_bounds = array<i64: 1, 128>}, {transform_indices = @transform_15, window_bounds = array<i64: 1, 1, 8, 128>}]} {
    %c0_i32 = arith.constant 0 : i32
    %0 = arith.cmpi eq, %arg0, %c0_i32 : i32
    %c0_i32_0 = arith.constant 0 : i32
    %1 = arith.cmpi eq, %arg1, %c0_i32_0 : i32
    %2 = arith.andi %0, %1 : i1
    %3 = arith.extui %2 : i1 to i32
    %c0_i32_1 = arith.constant 0 : i32
    %4 = arith.cmpi ne, %3, %c0_i32_1 : i32
    scf.if %4 {
      %c0_23 = arith.constant 0 : index
      %c0_24 = arith.constant 0 : index
      %47 = vector.load %arg3[%c0_23, %c0_24] : memref<8x128xf32, #tpu.memory_space<vmem>>, vector<8x128xf32>
      %c0_25 = arith.constant 0 : index
      %c0_26 = arith.constant 0 : index
      %48 = vector.load %arg18[%c0_25, %c0_26] : memref<8x128xf32, #tpu.memory_space<vmem>>, vector<8x128xf32>
      tpu.vector_store %arg18[%c0_25, %c0_26], %47 {strides = array<i32>} : memref<8x128xf32, #tpu.memory_space<vmem>>, vector<8x128xf32>,
      %c0_27 = arith.constant 0 : index
      %c0_28 = arith.constant 0 : index
      %49 = vector.load %arg4[%c0_27, %c0_28] : memref<8x128xf32, #tpu.memory_space<vmem>>, vector<8x128xf32>
      %c0_29 = arith.constant 0 : index
      %c0_30 = arith.constant 0 : index
      %50 = vector.load %arg19[%c0_29, %c0_30] : memref<8x128xf32, #tpu.memory_space<vmem>>, vector<8x128xf32>
      tpu.vector_store %arg19[%c0_29, %c0_30], %49 {strides = array<i32>} : memref<8x128xf32, #tpu.memory_space<vmem>>, vector<8x128xf32>,
      %c0_31 = arith.constant 0 : index
      %c0_32 = arith.constant 0 : index
      %51 = vector.load %arg3[%c0_31, %c0_32] : memref<8x128xf32, #tpu.memory_space<vmem>>, vector<8x128xf32>
      %c0_33 = arith.constant 0 : index
      %c0_34 = arith.constant 0 : index
      %52 = vector.load %arg20[%c0_33, %c0_34] : memref<8x128xf32, #tpu.memory_space<vmem>>, vector<8x128xf32>
      tpu.vector_store %arg20[%c0_33, %c0_34], %51 {strides = array<i32>} : memref<8x128xf32, #tpu.memory_space<vmem>>, vector<8x128xf32>,
      %c0_35 = arith.constant 0 : index
      %c0_36 = arith.constant 0 : index
      %53 = vector.load %arg4[%c0_35, %c0_36] : memref<8x128xf32, #tpu.memory_space<vmem>>, vector<8x128xf32>
      %c0_37 = arith.constant 0 : index
      %c0_38 = arith.constant 0 : index
      %54 = vector.load %arg21[%c0_37, %c0_38] : memref<8x128xf32, #tpu.memory_space<vmem>>, vector<8x128xf32>
      tpu.vector_store %arg21[%c0_37, %c0_38], %53 {strides = array<i32>} : memref<8x128xf32, #tpu.memory_space<vmem>>, vector<8x128xf32>,
    } else {
    }
    %c0 = arith.constant 0 : index
    %c0_2 = arith.constant 0 : index
    %c0_3 = arith.constant 0 : index
    %c0_4 = arith.constant 0 : index
    %5 = vector.load %arg2[%c0, %c0_2, %c0_3, %c0_4] : memref<1x1x8x512xbf16, #tpu.memory_space<vmem>>, vector<1x1x8x512xbf16>
    %6 = vector.shape_cast %5 : vector<1x1x8x512xbf16> to vector<8x512xbf16>
    %7 = arith.extf %6 : vector<8x512xbf16> to vector<8x512xf32>
    %c0_5 = arith.constant 0 : index
    %c0_6 = arith.constant 0 : index
    %8 = vector.load %arg18[%c0_5, %c0_6] : memref<8x128xf32, #tpu.memory_space<vmem>>, vector<8x128xf32>
    %9 = arith.truncf %8 : vector<8x128xf32> to vector<8x128xbf16>
    %c0_7 = arith.constant 0 : index
    %c0_8 = arith.constant 0 : index
    %10 = vector.load %arg5[%c0_7, %c0_8] : memref<128x512xbf16, #tpu.memory_space<vmem>>, vector<128x512xbf16>
    %cst = arith.constant dense<0.000000e+00> : vector<8x512xf32>
    %11 = tpu.matmul %9, %10, %cst {dimension_numbers = #tpu.dot_dimension_numbers<[1], [0], [0], [1], [0, 0, 1, 1], [], []>} : vector<8x128xbf16>, vector<128x512xbf16>, vector<8x512xf32> -> vector<8x512xf32>
    %12 = arith.addf %7, %11 : vector<8x512xf32>
    %c0_9 = arith.constant 0 : index
    %c0_10 = arith.constant 0 : index
    %13 = vector.load %arg19[%c0_9, %c0_10] : memref<8x128xf32, #tpu.memory_space<vmem>>, vector<8x128xf32>
    %14 = vector.extract_strided_slice %12 {offsets = [0, 0], sizes = [8, 128], strides = [1, 1]} : vector<8x512xf32> to vector<8x128xf32>
    %15 = arith.negf %14 : vector<8x128xf32>
    %16 = math.exp %15 : vector<8x128xf32>
    %cst_11 = arith.constant 1.000000e+00 : f32
    %17 = vector.broadcast %cst_11 : f32 to vector<8x128xf32>
    %18 = arith.addf %17, %16 : vector<8x128xf32>
    %19 = arith.divf %17, %18 : vector<8x128xf32>
    %20 = vector.extract_strided_slice %12 {offsets = [0, 128], sizes = [8, 128], strides = [1, 1]} : vector<8x512xf32> to vector<8x128xf32>
    %21 = arith.negf %20 : vector<8x128xf32>
    %22 = math.exp %21 : vector<8x128xf32>
    %cst_12 = arith.constant 1.000000e+00 : f32
    %23 = vector.broadcast %cst_12 : f32 to vector<8x128xf32>
    %24 = arith.addf %23, %22 : vector<8x128xf32>
    %25 = arith.divf %23, %24 : vector<8x128xf32>
    %26 = vector.extract_strided_slice %12 {offsets = [0, 256], sizes = [8, 128], strides = [1, 1]} : vector<8x512xf32> to vector<8x128xf32>
    %27 = math.tanh %26 : vector<8x128xf32>
    %28 = vector.extract_strided_slice %12 {offsets = [0, 384], sizes = [8, 128], strides = [1, 1]} : vector<8x512xf32> to vector<8x128xf32>
    %29 = arith.negf %28 : vector<8x128xf32>
    %30 = math.exp %29 : vector<8x128xf32>
    %cst_13 = arith.constant 1.000000e+00 : f32
    %31 = vector.broadcast %cst_13 : f32 to vector<8x128xf32>
    %32 = arith.addf %31, %30 : vector<8x128xf32>
    %33 = arith.divf %31, %32 : vector<8x128xf32>
    %34 = arith.mulf %25, %13 : vector<8x128xf32>
    %35 = arith.mulf %19, %27 : vector<8x128xf32>
    %36 = arith.addf %34, %35 : vector<8x128xf32>
    %37 = math.tanh %36 : vector<8x128xf32>
    %38 = arith.mulf %33, %37 : vector<8x128xf32>
    %c0_14 = arith.constant 0 : index
    %c0_15 = arith.constant 0 : index
    %39 = vector.load %arg18[%c0_14, %c0_15] : memref<8x128xf32, #tpu.memory_space<vmem>>, vector<8x128xf32>
    tpu.vector_store %arg18[%c0_14, %c0_15], %38 {strides = array<i32>} : memref<8x128xf32, #tpu.memory_space<vmem>>, vector<8x128xf32>,
    %c0_16 = arith.constant 0 : index
    %c0_17 = arith.constant 0 : index
    %40 = vector.load %arg19[%c0_16, %c0_17] : memref<8x128xf32, #tpu.memory_space<vmem>>, vector<8x128xf32>
    tpu.vector_store %arg19[%c0_16, %c0_17], %36 {strides = array<i32>} : memref<8x128xf32, #tpu.memory_space<vmem>>, vector<8x128xf32>,
    %c0_18 = arith.constant 0 : index
    %c0_19 = arith.constant 0 : index
    %c0_20 = arith.constant 0 : index
    %c0_21 = arith.constant 0 : index
    %41 = vector.load %arg17[%c0_18, %c0_19, %c0_20, %c0_21] : memref<1x1x8x128xf32, #tpu.memory_space<vmem>>, vector<1x1x8x128xf32>
    %42 = vector.shape_cast %41 : vector<1x1x8x128xf32> to vector<8x128xf32>
    %43 = vector.shape_cast %38 : vector<8x128xf32> to vector<1x1x8x128xf32>
    tpu.vector_store %arg17[%c0_18, %c0_19, %c0_20, %c0_21], %43 {strides = array<i32>} : memref<1x1x8x128xf32, #tpu.memory_space<vmem>>, vector<1x1x8x128xf32>,
    %c4_i32 = arith.constant 4 : i32
    %44 = arith.cmpi eq, %arg1, %c4_i32 : i32
    %45 = arith.extui %44 : i1 to i32
    %c0_i32_22 = arith.constant 0 : i32
    %46 = arith.cmpi ne, %45, %c0_i32_22 : i32
    scf.if %46 {
      %47 = arith.truncf %38 : vector<8x128xf32> to vector<8x128xbf16>
      %c0_23 = arith.constant 0 : index
      %c0_24 = arith.constant 0 : index
      %48 = vector.load %arg9[%c0_23, %c0_24] : memref<128x512xbf16, #tpu.memory_space<vmem>>, vector<128x512xbf16>
      %cst_25 = arith.constant dense<0.000000e+00> : vector<8x512xf32>
      %49 = tpu.matmul %47, %48, %cst_25 {dimension_numbers = #tpu.dot_dimension_numbers<[1], [0], [0], [1], [0, 0, 1, 1], [], []>} : vector<8x128xbf16>, vector<128x512xbf16>, vector<8x512xf32> -> vector<8x512xf32>
      %c0_26 = arith.constant 0 : index
      %c0_27 = arith.constant 0 : index
      %50 = vector.load %arg20[%c0_26, %c0_27] : memref<8x128xf32, #tpu.memory_space<vmem>>, vector<8x128xf32>
      %51 = arith.truncf %50 : vector<8x128xf32> to vector<8x128xbf16>
      %c0_28 = arith.constant 0 : index
      %c0_29 = arith.constant 0 : index
      %52 = vector.load %arg10[%c0_28, %c0_29] : memref<128x512xbf16, #tpu.memory_space<vmem>>, vector<128x512xbf16>
      %cst_30 = arith.constant dense<0.000000e+00> : vector<8x512xf32>
      %53 = tpu.matmul %51, %52, %cst_30 {dimension_numbers = #tpu.dot_dimension_numbers<[1], [0], [0], [1], [0, 0, 1, 1], [], []>} : vector<8x128xbf16>, vector<128x512xbf16>, vector<8x512xf32> -> vector<8x512xf32>
      %54 = arith.addf %49, %53 : vector<8x512xf32>
      %c0_31 = arith.constant 0 : index
      %c0_32 = arith.constant 0 : index
      %55 = vector.load %arg11[%c0_31, %c0_32] : memref<1x512xf32, #tpu.memory_space<vmem>>, vector<1x512xf32>
      %56 = vector.broadcast %55 : vector<1x512xf32> to vector<8x512xf32>
      %57 = arith.addf %54, %56 : vector<8x512xf32>
      %c0_33 = arith.constant 0 : index
      %c0_34 = arith.constant 0 : index
      %58 = vector.load %arg21[%c0_33, %c0_34] : memref<8x128xf32, #tpu.memory_space<vmem>>, vector<8x128xf32>
      %59 = vector.extract_strided_slice %57 {offsets = [0, 0], sizes = [8, 128], strides = [1, 1]} : vector<8x512xf32> to vector<8x128xf32>
      %60 = arith.negf %59 : vector<8x128xf32>
      %61 = math.exp %60 : vector<8x128xf32>
      %cst_35 = arith.constant 1.000000e+00 : f32
      %62 = vector.broadcast %cst_35 : f32 to vector<8x128xf32>
      %63 = arith.addf %62, %61 : vector<8x128xf32>
      %64 = arith.divf %62, %63 : vector<8x128xf32>
      %65 = vector.extract_strided_slice %57 {offsets = [0, 128], sizes = [8, 128], strides = [1, 1]} : vector<8x512xf32> to vector<8x128xf32>
      %66 = arith.negf %65 : vector<8x128xf32>
      %67 = math.exp %66 : vector<8x128xf32>
      %cst_36 = arith.constant 1.000000e+00 : f32
      %68 = vector.broadcast %cst_36 : f32 to vector<8x128xf32>
      %69 = arith.addf %68, %67 : vector<8x128xf32>
      %70 = arith.divf %68, %69 : vector<8x128xf32>
      %71 = vector.extract_strided_slice %57 {offsets = [0, 256], sizes = [8, 128], strides = [1, 1]} : vector<8x512xf32> to vector<8x128xf32>
      %72 = math.tanh %71 : vector<8x128xf32>
      %73 = vector.extract_strided_slice %57 {offsets = [0, 384], sizes = [8, 128], strides = [1, 1]} : vector<8x512xf32> to vector<8x128xf32>
      %74 = arith.negf %73 : vector<8x128xf32>
      %75 = math.exp %74 : vector<8x128xf32>
      %cst_37 = arith.constant 1.000000e+00 : f32
      %76 = vector.broadcast %cst_37 : f32 to vector<8x128xf32>
      %77 = arith.addf %76, %75 : vector<8x128xf32>
      %78 = arith.divf %76, %77 : vector<8x128xf32>
      %79 = arith.mulf %70, %58 : vector<8x128xf32>
      %80 = arith.mulf %64, %72 : vector<8x128xf32>
      %81 = arith.addf %79, %80 : vector<8x128xf32>
      %82 = math.tanh %81 : vector<8x128xf32>
      %83 = arith.mulf %78, %82 : vector<8x128xf32>
      %84 = arith.truncf %83 : vector<8x128xf32> to vector<8x128xbf16>
      %c0_38 = arith.constant 0 : index
      %c0_39 = arith.constant 0 : index
      %85 = vector.load %arg12[%c0_38, %c0_39] : memref<128x128xbf16, #tpu.memory_space<vmem>>, vector<128x128xbf16>
      %cst_40 = arith.constant dense<0.000000e+00> : vector<8x128xf32>
      %86 = tpu.matmul %84, %85, %cst_40 {dimension_numbers = #tpu.dot_dimension_numbers<[1], [0], [0], [1], [0, 0, 1, 1], [], []>} : vector<8x128xbf16>, vector<128x128xbf16>, vector<8x128xf32> -> vector<8x128xf32>
      %c0_41 = arith.constant 0 : index
      %c0_42 = arith.constant 0 : index
      %c0_43 = arith.constant 0 : index
      %87 = vector.load %arg7[%c0_41, %c0_42, %c0_43] : memref<4x8x128xf32, #tpu.memory_space<vmem>>, vector<4x8x128xf32>
      %88 = vector.shape_cast %86 : vector<8x128xf32> to vector<1x8x128xf32>
      %89 = vector.broadcast %88 : vector<1x8x128xf32> to vector<4x8x128xf32>
      %90 = arith.addf %87, %89 : vector<4x8x128xf32>
      %91 = math.tanh %90 : vector<4x8x128xf32>
      %c0_44 = arith.constant 0 : index
      %c0_45 = arith.constant 0 : index
      %92 = vector.load %arg13[%c0_44, %c0_45] : memref<1x128xf32, #tpu.memory_space<vmem>>, vector<1x128xf32>
      %93 = vector.shape_cast %92 : vector<1x128xf32> to vector<1x1x128xf32>
      %94 = vector.broadcast %93 : vector<1x1x128xf32> to vector<4x8x128xf32>
      %95 = arith.mulf %91, %94 : vector<4x8x128xf32>
      %cst_46 = arith.constant dense<0.000000e+00> : vector<4x8xf32>
      %96 = vector.multi_reduction <add>, %95, %cst_46 [2] : vector<4x8x128xf32> to vector<4x8xf32>
      %97 = vector.shape_cast %96 : vector<4x8xf32> to vector<4x8x1xf32>
      %c0_47 = arith.constant 0 : index
      %c0_48 = arith.constant 0 : index
      %c0_49 = arith.constant 0 : index
      %98 = vector.load %arg8[%c0_47, %c0_48, %c0_49] : memref<4x8x1xf32, #tpu.memory_space<vmem>>, vector<4x8x1xf32>
      %cst_50 = arith.constant 0.000000e+00 : f32
      %99 = vector.broadcast %cst_50 : f32 to vector<4x8x1xf32>
      %100 = arith.cmpf ogt, %98, %99 : vector<4x8x1xf32>
      %cst_51 = arith.constant -1.000000e+30 : f32
      %101 = vector.broadcast %cst_51 : f32 to vector<4x8x1xf32>
      %102 = arith.select %100, %97, %101 : vector<4x8x1xi1>, vector<4x8x1xf32>
      %cst_52 = arith.constant dense<0xFF800000> : vector<8x1xf32>
      %103 = vector.multi_reduction <maximumf>, %102, %cst_52 [0] : vector<4x8x1xf32> to vector<8x1xf32>
      %104 = vector.shape_cast %103 : vector<8x1xf32> to vector<1x8x1xf32>
      %105 = vector.broadcast %104 : vector<1x8x1xf32> to vector<4x8x1xf32>
      %106 = arith.subf %102, %105 : vector<4x8x1xf32>
      %107 = math.exp %106 : vector<4x8x1xf32>
      %cst_53 = arith.constant dense<0.000000e+00> : vector<8x1xf32>
      %108 = vector.multi_reduction <add>, %107, %cst_53 [0] : vector<4x8x1xf32> to vector<8x1xf32>
      %109 = vector.shape_cast %108 : vector<8x1xf32> to vector<1x8x1xf32>
      %110 = tpu.reciprocal %109 : vector<1x8x1xf32> -> vector<1x8x1xf32>
      %111 = vector.broadcast %110 : vector<1x8x1xf32> to vector<4x8x1xf32>
      %112 = arith.mulf %107, %111 : vector<4x8x1xf32>
      %c0_54 = arith.constant 0 : index
      %c0_55 = arith.constant 0 : index
      %c0_56 = arith.constant 0 : index
      %113 = vector.load %arg6[%c0_54, %c0_55, %c0_56] : memref<4x8x128xf32, #tpu.memory_space<vmem>>, vector<4x8x128xf32>
      %114 = vector.broadcast %112 : vector<4x8x1xf32> to vector<4x8x128xf32>
      %115 = arith.mulf %114, %113 : vector<4x8x128xf32>
      %cst_57 = arith.constant dense<0.000000e+00> : vector<8x128xf32>
      %116 = vector.multi_reduction <add>, %115, %cst_57 [0] : vector<4x8x128xf32> to vector<8x128xf32>
      %117 = arith.truncf %116 : vector<8x128xf32> to vector<8x128xbf16>
      %c0_58 = arith.constant 0 : index
      %c0_59 = arith.constant 0 : index
      %118 = vector.load %arg14[%c0_58, %c0_59] : memref<128x128xbf16, #tpu.memory_space<vmem>>, vector<128x128xbf16>
      %cst_60 = arith.constant dense<0.000000e+00> : vector<8x128xf32>
      %119 = tpu.matmul %117, %118, %cst_60 {dimension_numbers = #tpu.dot_dimension_numbers<[1], [0], [0], [1], [0, 0, 1, 1], [], []>} : vector<8x128xbf16>, vector<128x128xbf16>, vector<8x128xf32> -> vector<8x128xf32>
      %120 = arith.truncf %83 : vector<8x128xf32> to vector<8x128xbf16>
      %c0_61 = arith.constant 0 : index
      %c0_62 = arith.constant 0 : index
      %121 = vector.load %arg15[%c0_61, %c0_62] : memref<128x128xbf16, #tpu.memory_space<vmem>>, vector<128x128xbf16>
      %cst_63 = arith.constant dense<0.000000e+00> : vector<8x128xf32>
      %122 = tpu.matmul %120, %121, %cst_63 {dimension_numbers = #tpu.dot_dimension_numbers<[1], [0], [0], [1], [0, 0, 1, 1], [], []>} : vector<8x128xbf16>, vector<128x128xbf16>, vector<8x128xf32> -> vector<8x128xf32>
      %123 = arith.addf %119, %122 : vector<8x128xf32>
      %c0_64 = arith.constant 0 : index
      %c0_65 = arith.constant 0 : index
      %124 = vector.load %arg16[%c0_64, %c0_65] : memref<1x128xf32, #tpu.memory_space<vmem>>, vector<1x128xf32>
      %125 = vector.broadcast %124 : vector<1x128xf32> to vector<8x128xf32>
      %126 = arith.addf %123, %125 : vector<8x128xf32>
      %127 = math.tanh %126 : vector<8x128xf32>
      %c0_66 = arith.constant 0 : index
      %c0_67 = arith.constant 0 : index
      %128 = vector.load %arg20[%c0_66, %c0_67] : memref<8x128xf32, #tpu.memory_space<vmem>>, vector<8x128xf32>
      tpu.vector_store %arg20[%c0_66, %c0_67], %127 {strides = array<i32>} : memref<8x128xf32, #tpu.memory_space<vmem>>, vector<8x128xf32>,
      %c0_68 = arith.constant 0 : index
      %c0_69 = arith.constant 0 : index
      %129 = vector.load %arg18[%c0_68, %c0_69] : memref<8x128xf32, #tpu.memory_space<vmem>>, vector<8x128xf32>
      tpu.vector_store %arg18[%c0_68, %c0_69], %127 {strides = array<i32>} : memref<8x128xf32, #tpu.memory_space<vmem>>, vector<8x128xf32>,
      %c0_70 = arith.constant 0 : index
      %c0_71 = arith.constant 0 : index
      %130 = vector.load %arg21[%c0_70, %c0_71] : memref<8x128xf32, #tpu.memory_space<vmem>>, vector<8x128xf32>
      tpu.vector_store %arg21[%c0_70, %c0_71], %81 {strides = array<i32>} : memref<8x128xf32, #tpu.memory_space<vmem>>, vector<8x128xf32>,
      %c0_72 = arith.constant 0 : index
      %c0_73 = arith.constant 0 : index
      %131 = vector.load %arg19[%c0_72, %c0_73] : memref<8x128xf32, #tpu.memory_space<vmem>>, vector<8x128xf32>
      tpu.vector_store %arg19[%c0_72, %c0_73], %81 {strides = array<i32>} : memref<8x128xf32, #tpu.memory_space<vmem>>, vector<8x128xf32>,
    } else {
    }
    return
  }
  func.func @transform_0(%arg0: i32, %arg1: i32) -> (i32, i32, i32, i32) {
    %c0_i32 = arith.constant 0 : i32
    %c0_i32_0 = arith.constant 0 : i32
    %c0_i32_1 = arith.constant 0 : i32
    return %arg0, %arg1, %c0_i32, %c0_i32_0 : i32, i32, i32, i32
  }
  func.func @transform_1(%arg0: i32, %arg1: i32) -> (i32, i32) {
    %c0_i32 = arith.constant 0 : i32
    %c0_i32_0 = arith.constant 0 : i32
    %c0_i32_1 = arith.constant 0 : i32
    return %c0_i32, %c0_i32_0 : i32, i32
  }
  func.func @transform_2(%arg0: i32, %arg1: i32) -> (i32, i32) {
    %c0_i32 = arith.constant 0 : i32
    %c0_i32_0 = arith.constant 0 : i32
    %c0_i32_1 = arith.constant 0 : i32
    return %c0_i32, %c0_i32_0 : i32, i32
  }
  func.func @transform_3(%arg0: i32, %arg1: i32) -> (i32, i32) {
    %c0_i32 = arith.constant 0 : i32
    %c0_i32_0 = arith.constant 0 : i32
    %c0_i32_1 = arith.constant 0 : i32
    return %c0_i32, %c0_i32_0 : i32, i32
  }
  func.func @transform_4(%arg0: i32, %arg1: i32) -> (i32, i32, i32) {
    %c0_i32 = arith.constant 0 : i32
    %c0_i32_0 = arith.constant 0 : i32
    %c0_i32_1 = arith.constant 0 : i32
    %c0_i32_2 = arith.constant 0 : i32
    return %c0_i32, %c0_i32_0, %c0_i32_1 : i32, i32, i32
  }
  func.func @transform_5(%arg0: i32, %arg1: i32) -> (i32, i32, i32) {
    %c0_i32 = arith.constant 0 : i32
    %c0_i32_0 = arith.constant 0 : i32
    %c0_i32_1 = arith.constant 0 : i32
    %c0_i32_2 = arith.constant 0 : i32
    return %c0_i32, %c0_i32_0, %c0_i32_1 : i32, i32, i32
  }
  func.func @transform_6(%arg0: i32, %arg1: i32) -> (i32, i32, i32) {
    %c0_i32 = arith.constant 0 : i32
    %c0_i32_0 = arith.constant 0 : i32
    %c0_i32_1 = arith.constant 0 : i32
    %c0_i32_2 = arith.constant 0 : i32
    return %c0_i32, %c0_i32_0, %c0_i32_1 : i32, i32, i32
  }
  func.func @transform_7(%arg0: i32, %arg1: i32) -> (i32, i32) {
    %c0_i32 = arith.constant 0 : i32
    %c0_i32_0 = arith.constant 0 : i32
    %c0_i32_1 = arith.constant 0 : i32
    return %c0_i32, %c0_i32_0 : i32, i32
  }
  func.func @transform_8(%arg0: i32, %arg1: i32) -> (i32, i32) {
    %c0_i32 = arith.constant 0 : i32
    %c0_i32_0 = arith.constant 0 : i32
    %c0_i32_1 = arith.constant 0 : i32
    return %c0_i32, %c0_i32_0 : i32, i32
  }
  func.func @transform_9(%arg0: i32, %arg1: i32) -> (i32, i32) {
    %c0_i32 = arith.constant 0 : i32
    %c0_i32_0 = arith.constant 0 : i32
    %c0_i32_1 = arith.constant 0 : i32
    return %c0_i32, %c0_i32_0 : i32, i32
  }
  func.func @transform_10(%arg0: i32, %arg1: i32) -> (i32, i32) {
    %c0_i32 = arith.constant 0 : i32
    %c0_i32_0 = arith.constant 0 : i32
    %c0_i32_1 = arith.constant 0 : i32
    return %c0_i32, %c0_i32_0 : i32, i32
  }
  func.func @transform_11(%arg0: i32, %arg1: i32) -> (i32, i32) {
    %c0_i32 = arith.constant 0 : i32
    %c0_i32_0 = arith.constant 0 : i32
    %c0_i32_1 = arith.constant 0 : i32
    return %c0_i32, %c0_i32_0 : i32, i32
  }
  func.func @transform_12(%arg0: i32, %arg1: i32) -> (i32, i32) {
    %c0_i32 = arith.constant 0 : i32
    %c0_i32_0 = arith.constant 0 : i32
    %c0_i32_1 = arith.constant 0 : i32
    return %c0_i32, %c0_i32_0 : i32, i32
  }
  func.func @transform_13(%arg0: i32, %arg1: i32) -> (i32, i32) {
    %c0_i32 = arith.constant 0 : i32
    %c0_i32_0 = arith.constant 0 : i32
    %c0_i32_1 = arith.constant 0 : i32
    return %c0_i32, %c0_i32_0 : i32, i32
  }
  func.func @transform_14(%arg0: i32, %arg1: i32) -> (i32, i32) {
    %c0_i32 = arith.constant 0 : i32
    %c0_i32_0 = arith.constant 0 : i32
    %c0_i32_1 = arith.constant 0 : i32
    return %c0_i32, %c0_i32_0 : i32, i32
  }
  func.func @transform_15(%arg0: i32, %arg1: i32) -> (i32, i32, i32, i32) {
    %c0_i32 = arith.constant 0 : i32
    %c0_i32_0 = arith.constant 0 : i32
    %c0_i32_1 = arith.constant 0 : i32
    return %arg0, %arg1, %c0_i32, %c0_i32_0 : i32, i32, i32, i32
  }
}

module attributes {stable_mosaic.version = 11 : i64} {
  func.func @_ce_kernel(%arg0: i32, %arg1: memref<80x128xbf16, #tpu.memory_space<vmem>>, %arg2: memref<80x1xi32, #tpu.memory_space<vmem>>, %arg3: memref<80x1xf32, #tpu.memory_space<vmem>>, %arg4: memref<128x128xbf16, #tpu.memory_space<vmem>>, %arg5: memref<1x128xf32, #tpu.memory_space<vmem>>, %arg6: memref<1x1xf32, #tpu.memory_space<vmem>>, %arg7: memref<80x1xf32, #tpu.memory_space<vmem>>, %arg8: memref<80x1xf32, #tpu.memory_space<vmem>>, %arg9: memref<80x1xf32, #tpu.memory_space<vmem>>) attributes {dimension_semantics = [#tpu.dimension_semantics<arbitrary>], iteration_bounds = array<i64: 2>, scalar_prefetch = 0 : i64, scratch_operands = 3 : i64, tpu.core_type = #tpu.core_type<tc>, window_params = [{pipeline_mode = #tpu.pipeline_mode<synchronous>, transform_indices = @transform_0, window_bounds = array<i64: 80, 128>}, {pipeline_mode = #tpu.pipeline_mode<synchronous>, transform_indices = @transform_1, window_bounds = array<i64: 80, 1>}, {pipeline_mode = #tpu.pipeline_mode<synchronous>, transform_indices = @transform_2, window_bounds = array<i64: 80, 1>}, {transform_indices = @transform_3, window_bounds = array<i64: 128, 128>}, {transform_indices = @transform_4, window_bounds = array<i64: 1, 128>}, {pipeline_mode = #tpu.pipeline_mode<synchronous>, transform_indices = @transform_5, window_bounds = array<i64: 1, 1>}]} {
    %c0_i32 = arith.constant 0 : i32
    %0 = arith.cmpi eq, %arg0, %c0_i32 : i32
    %1 = arith.extui %0 : i1 to i32
    %c0_i32_0 = arith.constant 0 : i32
    %2 = arith.cmpi ne, %1, %c0_i32_0 : i32
    scf.if %2 {
      %cst_27 = arith.constant -1.000000e+30 : f32
      %43 = vector.broadcast %cst_27 : f32 to vector<80x1xf32>
      %c0_28 = arith.constant 0 : index
      %c0_29 = arith.constant 0 : index
      %44 = vector.load %arg7[%c0_28, %c0_29] : memref<80x1xf32, #tpu.memory_space<vmem>>, vector<80x1xf32>
      tpu.vector_store %arg7[%c0_28, %c0_29], %43 {strides = array<i32>} : memref<80x1xf32, #tpu.memory_space<vmem>>, vector<80x1xf32>,
      %cst_30 = arith.constant 0.000000e+00 : f32
      %45 = vector.broadcast %cst_30 : f32 to vector<80x1xf32>
      %c0_31 = arith.constant 0 : index
      %c0_32 = arith.constant 0 : index
      %46 = vector.load %arg8[%c0_31, %c0_32] : memref<80x1xf32, #tpu.memory_space<vmem>>, vector<80x1xf32>
      tpu.vector_store %arg8[%c0_31, %c0_32], %45 {strides = array<i32>} : memref<80x1xf32, #tpu.memory_space<vmem>>, vector<80x1xf32>,
      %cst_33 = arith.constant 0.000000e+00 : f32
      %47 = vector.broadcast %cst_33 : f32 to vector<80x1xf32>
      %c0_34 = arith.constant 0 : index
      %c0_35 = arith.constant 0 : index
      %48 = vector.load %arg9[%c0_34, %c0_35] : memref<80x1xf32, #tpu.memory_space<vmem>>, vector<80x1xf32>
      tpu.vector_store %arg9[%c0_34, %c0_35], %47 {strides = array<i32>} : memref<80x1xf32, #tpu.memory_space<vmem>>, vector<80x1xf32>,
    } else {
    }
    %c0 = arith.constant 0 : index
    %c0_1 = arith.constant 0 : index
    %3 = vector.load %arg1[%c0, %c0_1] : memref<80x128xbf16, #tpu.memory_space<vmem>>, vector<80x128xbf16>
    %c0_2 = arith.constant 0 : index
    %c0_3 = arith.constant 0 : index
    %4 = vector.load %arg4[%c0_2, %c0_3] : memref<128x128xbf16, #tpu.memory_space<vmem>>, vector<128x128xbf16>
    %cst = arith.constant dense<0.000000e+00> : vector<80x128xf32>
    %5 = tpu.matmul %3, %4, %cst {dimension_numbers = #tpu.dot_dimension_numbers<[1], [0], [0], [1], [0, 0, 1, 1], [], []>} : vector<80x128xbf16>, vector<128x128xbf16>, vector<80x128xf32> -> vector<80x128xf32>
    %c0_4 = arith.constant 0 : index
    %c0_5 = arith.constant 0 : index
    %6 = vector.load %arg5[%c0_4, %c0_5] : memref<1x128xf32, #tpu.memory_space<vmem>>, vector<1x128xf32>
    %7 = vector.broadcast %6 : vector<1x128xf32> to vector<80x128xf32>
    %8 = arith.addf %5, %7 : vector<80x128xf32>
    %9 = tpu.iota {dimensions = array<i32: 1>} : vector<80x128xi32>
    %c128_i32 = arith.constant 128 : i32
    %10 = arith.muli %arg0, %c128_i32 : i32
    %11 = vector.broadcast %10 : i32 to vector<80x128xi32>
    %12 = arith.addi %9, %11 : vector<80x128xi32>
    %c0_6 = arith.constant 0 : index
    %c0_7 = arith.constant 0 : index
    %13 = vector.load %arg9[%c0_6, %c0_7] : memref<80x1xf32, #tpu.memory_space<vmem>>, vector<80x1xf32>
    %c0_8 = arith.constant 0 : index
    %c0_9 = arith.constant 0 : index
    %14 = vector.load %arg2[%c0_8, %c0_9] : memref<80x1xi32, #tpu.memory_space<vmem>>, vector<80x1xi32>
    %15 = vector.broadcast %14 : vector<80x1xi32> to vector<80x128xi32>
    %16 = arith.cmpi eq, %12, %15 : vector<80x128xi32>
    %cst_10 = arith.constant 0.000000e+00 : f32
    %17 = vector.broadcast %cst_10 : f32 to vector<80x128xf32>
    %18 = arith.select %16, %8, %17 : vector<80x128xi1>, vector<80x128xf32>
    %cst_11 = arith.constant dense<0.000000e+00> : vector<80xf32>
    %19 = vector.multi_reduction <add>, %18, %cst_11 [1] : vector<80x128xf32> to vector<80xf32>
    %20 = vector.shape_cast %19 : vector<80xf32> to vector<80x1xf32>
    %21 = arith.addf %13, %20 : vector<80x1xf32>
    %c0_12 = arith.constant 0 : index
    %c0_13 = arith.constant 0 : index
    %22 = vector.load %arg9[%c0_12, %c0_13] : memref<80x1xf32, #tpu.memory_space<vmem>>, vector<80x1xf32>
    tpu.vector_store %arg9[%c0_12, %c0_13], %21 {strides = array<i32>} : memref<80x1xf32, #tpu.memory_space<vmem>>, vector<80x1xf32>,
    %cst_14 = arith.constant dense<0xFF800000> : vector<80xf32>
    %23 = vector.multi_reduction <maximumf>, %8, %cst_14 [1] : vector<80x128xf32> to vector<80xf32>
    %24 = vector.shape_cast %23 : vector<80xf32> to vector<80x1xf32>
    %c0_15 = arith.constant 0 : index
    %c0_16 = arith.constant 0 : index
    %25 = vector.load %arg7[%c0_15, %c0_16] : memref<80x1xf32, #tpu.memory_space<vmem>>, vector<80x1xf32>
    %26 = arith.maximumf %25, %24 : vector<80x1xf32>
    %c0_17 = arith.constant 0 : index
    %c0_18 = arith.constant 0 : index
    %27 = vector.load %arg8[%c0_17, %c0_18] : memref<80x1xf32, #tpu.memory_space<vmem>>, vector<80x1xf32>
    %c0_19 = arith.constant 0 : index
    %c0_20 = arith.constant 0 : index
    %28 = vector.load %arg7[%c0_19, %c0_20] : memref<80x1xf32, #tpu.memory_space<vmem>>, vector<80x1xf32>
    %29 = arith.subf %28, %26 : vector<80x1xf32>
    %30 = math.exp %29 : vector<80x1xf32>
    %31 = arith.mulf %27, %30 : vector<80x1xf32>
    %32 = vector.broadcast %26 : vector<80x1xf32> to vector<80x128xf32>
    %33 = arith.subf %8, %32 : vector<80x128xf32>
    %34 = math.exp %33 : vector<80x128xf32>
    %cst_21 = arith.constant dense<0.000000e+00> : vector<80xf32>
    %35 = vector.multi_reduction <add>, %34, %cst_21 [1] : vector<80x128xf32> to vector<80xf32>
    %36 = vector.shape_cast %35 : vector<80xf32> to vector<80x1xf32>
    %37 = arith.addf %31, %36 : vector<80x1xf32>
    %c0_22 = arith.constant 0 : index
    %c0_23 = arith.constant 0 : index
    %38 = vector.load %arg8[%c0_22, %c0_23] : memref<80x1xf32, #tpu.memory_space<vmem>>, vector<80x1xf32>
    tpu.vector_store %arg8[%c0_22, %c0_23], %37 {strides = array<i32>} : memref<80x1xf32, #tpu.memory_space<vmem>>, vector<80x1xf32>,
    %c0_24 = arith.constant 0 : index
    %c0_25 = arith.constant 0 : index
    %39 = vector.load %arg7[%c0_24, %c0_25] : memref<80x1xf32, #tpu.memory_space<vmem>>, vector<80x1xf32>
    tpu.vector_store %arg7[%c0_24, %c0_25], %26 {strides = array<i32>} : memref<80x1xf32, #tpu.memory_space<vmem>>, vector<80x1xf32>,
    %c1_i32 = arith.constant 1 : i32
    %40 = arith.cmpi eq, %arg0, %c1_i32 : i32
    %41 = arith.extui %40 : i1 to i32
    %c0_i32_26 = arith.constant 0 : i32
    %42 = arith.cmpi ne, %41, %c0_i32_26 : i32
    scf.if %42 {
      %c0_27 = arith.constant 0 : index
      %c0_28 = arith.constant 0 : index
      %43 = vector.load %arg7[%c0_27, %c0_28] : memref<80x1xf32, #tpu.memory_space<vmem>>, vector<80x1xf32>
      %c0_29 = arith.constant 0 : index
      %c0_30 = arith.constant 0 : index
      %44 = vector.load %arg8[%c0_29, %c0_30] : memref<80x1xf32, #tpu.memory_space<vmem>>, vector<80x1xf32>
      %45 = math.log %44 : vector<80x1xf32>
      %46 = arith.addf %43, %45 : vector<80x1xf32>
      %c0_31 = arith.constant 0 : index
      %c0_32 = arith.constant 0 : index
      %47 = vector.load %arg9[%c0_31, %c0_32] : memref<80x1xf32, #tpu.memory_space<vmem>>, vector<80x1xf32>
      %48 = arith.subf %46, %47 : vector<80x1xf32>
      %c0_33 = arith.constant 0 : index
      %c0_34 = arith.constant 0 : index
      %49 = vector.load %arg3[%c0_33, %c0_34] : memref<80x1xf32, #tpu.memory_space<vmem>>, vector<80x1xf32>
      %50 = arith.mulf %48, %49 : vector<80x1xf32>
      %51 = vector.shape_cast %50 : vector<80x1xf32> to vector<1x80x1xf32>
      %cst_35 = arith.constant dense<0.000000e+00> : vector<1xf32>
      %52 = vector.multi_reduction <add>, %51, %cst_35 [1, 2] : vector<1x80x1xf32> to vector<1xf32>
      %53 = vector.shape_cast %52 : vector<1xf32> to vector<1x1x1xf32>
      %54 = vector.extract %53[0, 0, 0] : f32 from vector<1x1x1xf32>
      %55 = vector.broadcast %54 : f32 to vector<1x1xf32>
      %c0_36 = arith.constant 0 : index
      %c0_37 = arith.constant 0 : index
      %56 = vector.load %arg6[%c0_36, %c0_37] : memref<1x1xf32, #tpu.memory_space<vmem>>, vector<1x1xf32>
      tpu.vector_store %arg6[%c0_36, %c0_37], %55 {strides = array<i32>} : memref<1x1xf32, #tpu.memory_space<vmem>>, vector<1x1xf32>,
    } else {
    }
    return
  }
  func.func @transform_0(%arg0: i32) -> (i32, i32) {
    %c0_i32 = arith.constant 0 : i32
    %c0_i32_0 = arith.constant 0 : i32
    %c0_i32_1 = arith.constant 0 : i32
    return %c0_i32, %c0_i32_0 : i32, i32
  }
  func.func @transform_1(%arg0: i32) -> (i32, i32) {
    %c0_i32 = arith.constant 0 : i32
    %c0_i32_0 = arith.constant 0 : i32
    %c0_i32_1 = arith.constant 0 : i32
    return %c0_i32, %c0_i32_0 : i32, i32
  }
  func.func @transform_2(%arg0: i32) -> (i32, i32) {
    %c0_i32 = arith.constant 0 : i32
    %c0_i32_0 = arith.constant 0 : i32
    %c0_i32_1 = arith.constant 0 : i32
    return %c0_i32, %c0_i32_0 : i32, i32
  }
  func.func @transform_3(%arg0: i32) -> (i32, i32) {
    %c0_i32 = arith.constant 0 : i32
    %c0_i32_0 = arith.constant 0 : i32
    return %c0_i32, %arg0 : i32, i32
  }
  func.func @transform_4(%arg0: i32) -> (i32, i32) {
    %c0_i32 = arith.constant 0 : i32
    %c0_i32_0 = arith.constant 0 : i32
    return %c0_i32, %arg0 : i32, i32
  }
  func.func @transform_5(%arg0: i32) -> (i32, i32) {
    %c0_i32 = arith.constant 0 : i32
    %c0_i32_0 = arith.constant 0 : i32
    %c0_i32_1 = arith.constant 0 : i32
    return %c0_i32, %c0_i32_0 : i32, i32
  }
}

</mosaic_0001>

<llo_original>
// kernel: hierachical_forward_train.5
$region0: #{hierachical_forward_train.5}
  #allocation0 [shape = 'u32[]', space=smem, size = 0x4, offset = 0x4, fixed_abs, tag = 'smem constant byte address 0x4 - core index']
  #allocation1 [shape = 'u32[144,128]{1,0:T(1,128)}', space=vmem, size = 0x12000, scoped, tag = 'internal scratch']
  #allocation2 [shape = 'f32[8,128]{1,0:T(8,128)}', space=vmem, size = 0x1000, scoped, tag = 'scratch operand']
  #allocation3 [shape = 'f32[8,128]{1,0:T(8,128)}', space=vmem, size = 0x1000, scoped, tag = 'scratch operand']
  %s0 = inlined_call_operand.vmem [shape: bf16[4,8,512], index: 0, kind: input, shape index: {}]
  %s1 = inlined_call_operand.vmem [shape: bf16[128,512], index: 1, kind: input, shape index: {}]
  %s2 = inlined_call_operand.vmem [shape: f32[4,8,128], index: 2, kind: output, shape index: {0}]
  %s3 = inlined_call_operand.vmem [shape: f32[8,128], index: 3, kind: output, shape index: {1}]
  %s4 = inlined_call_operand.vmem [shape: f32[8,128], index: 4, kind: output, shape index: {2}]
  %5 = xla_tuple %s2, %s3, %s4
  %s6 = sld [smem:[#allocation0]]
  $region65: #{hierachical_forward_train.5} parent=0
    _
  %s8 = ssub.s32 1, %s6
  %s9 = scalar_select 0, %s8, %s6
  loop: start=0, step=1, limit=6
  $region2: #{hierachical_forward_train.5} parent=0 // loop_pre_header
    _
  $region3: #{hierachical_forward_train.5} parent=0 // loop_header
    %s11 = sphi 0, %s15
    %p12 = scmp.ge.s32.totalorder %s11, 6
    %s21 = sphi 0, %s23
    %s24 = sphi 0, %s21
    %s25 = sphi 0, %s24
    %s41 = sphi 0, %s25
    %s45 = sphi 0, %s45
    %s47 = sphi 0, %s45
    %s48 = sphi 0, %s47
    %s62 = sphi 0, %s48
    %s68 = sphi 0, %s70
    %s71 = sphi 0, %s68
    %s72 = sphi 0, %s71
    %s88 = sphi 0, %s72
    %s92 = sphi 0, %s92
    %s94 = sphi 0, %s92
    %s95 = sphi 0, %s94
    %s109 = sphi 0, %s95
    %s113 = sphi 0, %s113
    %s115 = sphi 0, %s113
    %s116 = sphi 0, %s115
    %s130 = sphi 0, %s116
  $region4: #{hierachical_forward_train.5} parent=0 // loop_header_branch
    %14 = sbr.rel (%p12) target = $region8
  $region5: #{hierachical_forward_train.5} parent=0 // loop_body
    %s16 = ssub.s32 %s11, 1
    %s17 = ssub.s32 %s11, 2
    %s18 = sadd.s32 %s11, 1
    %s19 = ssub.s32 %s11, %s18
    %p20 = scmp.eq.s32.totalorder %s19, 0
    %s22 = sadd.s32 %s21, 1
    %s23 = scalar_select %p20, %s21, %s22
    %p26 = pneg %p20
    %p27 = scmp.eq.s32.totalorder %s11, 3
    %p28 = por %p26, %p27
    %p29 = scmp.ne.s32.totalorder %s21, %s24
    %p30 = scmp.eq.s32.totalorder %s11, 0
    %p31 = por %p29, %p30
    %p32 = scmp.ne.s32.totalorder %s21, %s24
    %p33 = scmp.eq.s32.totalorder %s16, 3
    %p34 = por %p32, %p33
    %p35 = scmp.ne.s32.totalorder %s24, %s25
    %p36 = scmp.eq.s32.totalorder %s16, 0
    %p37 = por %p35, %p36
    %p38 = scmp.ne.s32.totalorder %s24, %s25
    %p39 = scmp.eq.s32.totalorder %s17, 3
    %p40 = por %p38, %p39
    %p42 = scmp.ne.s32.totalorder %s25, %s41
    %p43 = scmp.eq.s32.totalorder %s17, 0
    %p44 = por %p42, %p43
    %s46 = sadd.s32 %s45, 1
    %p49 = scmp.eq.s32.totalorder %s11, 3
    %p50 = scmp.ne.s32.totalorder %s45, %s47
    %p51 = scmp.eq.s32.totalorder %s11, 0
    %p52 = por %p50, %p51
    %p53 = scmp.ne.s32.totalorder %s45, %s47
    %p54 = scmp.eq.s32.totalorder %s16, 3
    %p55 = por %p53, %p54
    %p56 = scmp.ne.s32.totalorder %s47, %s48
    %p57 = scmp.eq.s32.totalorder %s16, 0
    %p58 = por %p56, %p57
    %p59 = scmp.ne.s32.totalorder %s47, %s48
    %p60 = scmp.eq.s32.totalorder %s17, 3
    %p61 = por %p59, %p60
    %p63 = scmp.ne.s32.totalorder %s48, %s62
    %p64 = scmp.eq.s32.totalorder %s17, 0
    %p65 = por %p63, %p64
    %s66 = ssub.s32 %s11, %s18
    %p67 = scmp.eq.s32.totalorder %s66, 0
    %s69 = sadd.s32 %s68, 1
    %s70 = scalar_select %p67, %s68, %s69
    %p73 = pneg %p67
    %p74 = scmp.eq.s32.totalorder %s11, 3
    %p75 = por %p73, %p74
    %p76 = scmp.ne.s32.totalorder %s68, %s71
    %p77 = scmp.eq.s32.totalorder %s11, 0
    %p78 = por %p76, %p77
    %p79 = scmp.ne.s32.totalorder %s68, %s71
    %p80 = scmp.eq.s32.totalorder %s16, 3
    %p81 = por %p79, %p80
    %p82 = scmp.ne.s32.totalorder %s71, %s72
    %p83 = scmp.eq.s32.totalorder %s16, 0
    %p84 = por %p82, %p83
    %p85 = scmp.ne.s32.totalorder %s71, %s72
    %p86 = scmp.eq.s32.totalorder %s17, 3
    %p87 = por %p85, %p86
    %p89 = scmp.ne.s32.totalorder %s72, %s88
    %p90 = scmp.eq.s32.totalorder %s17, 0
    %p91 = por %p89, %p90
    %s93 = sadd.s32 %s92, 1
    %p96 = scmp.eq.s32.totalorder %s11, 3
    %p97 = scmp.ne.s32.totalorder %s92, %s94
    %p98 = scmp.eq.s32.totalorder %s11, 0
    %p99 = por %p97, %p98
    %p100 = scmp.ne.s32.totalorder %s92, %s94
    %p101 = scmp.eq.s32.totalorder %s16, 3
    %p102 = por %p100, %p101
    %p103 = scmp.ne.s32.totalorder %s94, %s95
    %p104 = scmp.eq.s32.totalorder %s16, 0
    %p105 = por %p103, %p104
    %p106 = scmp.ne.s32.totalorder %s94, %s95
    %p107 = scmp.eq.s32.totalorder %s17, 3
    %p108 = por %p106, %p107
    %p110 = scmp.ne.s32.totalorder %s95, %s109
    %p111 = scmp.eq.s32.totalorder %s17, 0
    %p112 = por %p110, %p111
    %s114 = sadd.s32 %s113, 1
    %p117 = scmp.eq.s32.totalorder %s11, 3
    %p118 = scmp.ne.s32.totalorder %s113, %s115
    %p119 = scmp.eq.s32.totalorder %s11, 0
    %p120 = por %p118, %p119
    %p121 = scmp.ne.s32.totalorder %s113, %s115
    %p122 = scmp.eq.s32.totalorder %s16, 3
    %p123 = por %p121, %p122
    %p124 = scmp.ne.s32.totalorder %s115, %s116
    %p125 = scmp.eq.s32.totalorder %s16, 0
    %p126 = por %p124, %p125
    %p127 = scmp.ne.s32.totalorder %s115, %s116
    %p128 = scmp.eq.s32.totalorder %s17, 3
    %p129 = por %p127, %p128
    %p131 = scmp.ne.s32.totalorder %s116, %s130
    %p132 = scmp.eq.s32.totalorder %s17, 0
    %p133 = por %p131, %p132
    %p134 = scmp.le.s32.totalorder 1, %s11
    %p135 = scmp.lt.s32.totalorder %s11, 5
    %p136 = pnand %p134, %p135
    %p137 = pneg %p136
    // Predicated region
    $region9: #{hierachical_forward_train.5} parent=5 // pred_check
      _
    $region10: #{hierachical_forward_train.5} parent=5 // pred_check_branch
      %139 = sbr.rel (%p136) target = $region12
    $region11: #{hierachical_forward_train.5} parent=5 // pred_region
      %s140 = ssub.s32 %s11, 1
      // Predicated region
      $region13: #{hierachical_forward_train.5} parent=11 // pred_check
        %p141 = pneg %p58
      $region14: #{hierachical_forward_train.5} parent=11 // pred_check_branch
        %143 = sbr.rel (%p141) target = $region16
      $region15: #{hierachical_forward_train.5} parent=11 // pred_region
        _
      $region16: #{hierachical_forward_train.5} parent=11 // pred_fallthru
        _
    $region12: #{hierachical_forward_train.5} parent=5 // pred_fallthru
      _
    %p144 = scmp.lt.s32.totalorder %s11, 4
    // Predicated region
    $region17: #{hierachical_forward_train.5} parent=5 // pred_check
      %p145 = pneg %p144
    $region18: #{hierachical_forward_train.5} parent=5 // pred_check_branch
      %147 = sbr.rel (%p145) target = $region20
    $region19: #{hierachical_forward_train.5} parent=5 // pred_region
      // Predicated region
      $region21: #{hierachical_forward_train.5} parent=19 // pred_check
        %p148 = pneg %p31
      $region22: #{hierachical_forward_train.5} parent=19 // pred_check_branch
        %150 = sbr.rel (%p148) target = $region24
      $region23: #{hierachical_forward_train.5} parent=19 // pred_region
        %p151 = scmp.lt.s32.totalorder %s11, 3
        %s152 = scalar_select %p151, %s11, 3
        %s153 = smul.addr %s152, 4
        %s154 = smul.addr %s153, 4
        %s155 = scalar_lea.vmem %s0, %s154
      $region24: #{hierachical_forward_train.5} parent=19 // pred_fallthru
        _
    $region20: #{hierachical_forward_train.5} parent=5 // pred_fallthru
      _
    %p156 = scmp.le.s32.totalorder 1, %s11
    %p157 = scmp.lt.s32.totalorder %s11, 5
    %p158 = pnand %p156, %p157
    %p159 = pneg %p158
    // Predicated region
    $region25: #{hierachical_forward_train.5} parent=5 // pred_check
      _
    $region26: #{hierachical_forward_train.5} parent=5 // pred_check_branch
      %161 = sbr.rel (%p158) target = $region28
    $region27: #{hierachical_forward_train.5} parent=5 // pred_region
      %s162 = ssub.s32 %s11, 1
      %p163 = scmp.lt.s32.totalorder %s16, 3
      %s164 = scalar_select %p163, %s16, 3
      %s165 = smul.addr %s164, 4
      %s166 = smul.addr %s165, 4
      %s167 = scalar_lea.vmem %s0, %s166
      %p168 = pneg %p37
      %p169 = pneg %p34
      %p170 = pneg %p58
      %p171 = pneg %p55
      %p172 = pneg %p84
      %p173 = pneg %p81
      %p174 = scmp.lt.s32.totalorder %s16, 3
      %s175 = scalar_select %p174, %s16, 3
      %s176 = smul.addr %s175, 8
      %s177 = scalar_lea.vmem %s2, %s176
      %p178 = pneg %p105
      %p179 = pneg %p102
      %p180 = pneg %p126
      %p181 = pneg %p123
      %p182 = scmp.lt.s32.totalorder %s16, 3
      %s183 = scalar_select %p182, %s16, 3
      %s184 = smul.addr %s183, 4
      %s185 = smul.addr %s184, 4
      %s186 = scalar_lea.vmem %s0, %s185
      %p187 = scmp.lt.s32.totalorder %s16, 3
      %s188 = scalar_select %p187, %s16, 3
      %s189 = smul.addr %s188, 8
      %s190 = scalar_lea.vmem %s2, %s189
      %p192 = scmp.eq.s32.totalorder %s16, 0
      // Predicated region
      $region29: #{hierachical_forward_train.5} parent=27 // pred_check
        %p193 = pneg %p192
      $region30: #{hierachical_forward_train.5} parent=27 // pred_check_branch
        %195 = sbr.rel (%p193) target = $region32
      $region31: #{hierachical_forward_train.5} parent=27 // pred_region
        %196 = vst [vmem:[#allocation2] sm:$0xff] 0.0
        %197 = vst [vmem:[#allocation3] sm:$0xff] 0.0
      $region32: #{hierachical_forward_train.5} parent=27 // pred_fallthru
        _
      %v198 = vld [vmem:[%s186] sm:$0xff]
      %v199 = vld [vmem:[%s186 + $0x8] sm:$0xff]
      %v200 = vunpack.c.l.bf16 %v198
      %v201 = vunpack.c.h.bf16 %v198
      %v202 = vunpack.c.l.bf16 %v199
      %v203 = vunpack.c.h.bf16 %v199
      %v204 = vld [vmem:[#allocation2] sm:$0xff]
      %v205 = vpack.c.bf16 %v204, %v204
      %v206 = vld [vmem:[%s1] sm:$0xff]
      %v207 = vld [vmem:[%s1 + $0x8] sm:$0xff]
      %v208 = vld [vmem:[%s1 + $0x10] sm:$0xff]
      %v209 = vld [vmem:[%s1 + $0x18] sm:$0xff]
      %v210 = vld [vmem:[%s1 + $0x20] sm:$0xff]
      %v211 = vld [vmem:[%s1 + $0x28] sm:$0xff]
      %v212 = vld [vmem:[%s1 + $0x30] sm:$0xff]
      %v213 = vld [vmem:[%s1 + $0x38] sm:$0xff]
      %v214 = vld [vmem:[%s1 + $0x40] sm:$0xff]
      %v215 = vld [vmem:[%s1 + $0x48] sm:$0xff]
      %v216 = vld [vmem:[%s1 + $0x50] sm:$0xff]
      %v217 = vld [vmem:[%s1 + $0x58] sm:$0xff]
      %v218 = vld [vmem:[%s1 + $0x60] sm:$0xff]
      %v219 = vld [vmem:[%s1 + $0x68] sm:$0xff]
      %v220 = vld [vmem:[%s1 + $0x70] sm:$0xff]
      %v221 = vld [vmem:[%s1 + $0x78] sm:$0xff]
      %v222 = vld [vmem:[%s1 + $0x80] sm:$0xff]
      %v223 = vld [vmem:[%s1 + $0x88] sm:$0xff]
      %v224 = vld [vmem:[%s1 + $0x90] sm:$0xff]
      %v225 = vld [vmem:[%s1 + $0x98] sm:$0xff]
      %v226 = vld [vmem:[%s1 + $0xa0] sm:$0xff]
      %v227 = vld [vmem:[%s1 + $0xa8] sm:$0xff]
      %v228 = vld [vmem:[%s1 + $0xb0] sm:$0xff]
      %v229 = vld [vmem:[%s1 + $0xb8] sm:$0xff]
      %v230 = vld [vmem:[%s1 + $0xc0] sm:$0xff]
      %v231 = vld [vmem:[%s1 + $0xc8] sm:$0xff]
      %v232 = vld [vmem:[%s1 + $0xd0] sm:$0xff]
      %v233 = vld [vmem:[%s1 + $0xd8] sm:$0xff]
      %v234 = vld [vmem:[%s1 + $0xe0] sm:$0xff]
      %v235 = vld [vmem:[%s1 + $0xe8] sm:$0xff]
      %v236 = vld [vmem:[%s1 + $0xf0] sm:$0xff]
      %v237 = vld [vmem:[%s1 + $0xf8] sm:$0xff]
      %v270 = vunpack.c.l.b16 %v206
      %v271 = vunpack.c.h.b16 %v206
      %v272 = vunpack.c.l.b16 %v207
      %v273 = vunpack.c.h.b16 %v207
      %v274 = vunpack.c.l.b16 %v208
      %v275 = vunpack.c.h.b16 %v208
      %v276 = vunpack.c.l.b16 %v209
      %v277 = vunpack.c.h.b16 %v209
      %v278 = vunpack.c.l.b16 %v210
      %v279 = vunpack.c.h.b16 %v210
      %v280 = vunpack.c.l.b16 %v211
      %v281 = vunpack.c.h.b16 %v211
      %v282 = vunpack.c.l.b16 %v212
      %v283 = vunpack.c.h.b16 %v212
      %v284 = vunpack.c.l.b16 %v213
      %v285 = vunpack.c.h.b16 %v213
      %v286 = vunpack.c.l.b16 %v214
      %v287 = vunpack.c.h.b16 %v214
      %v288 = vunpack.c.l.b16 %v215
      %v289 = vunpack.c.h.b16 %v215
      %v290 = vunpack.c.l.b16 %v216
      %v291 = vunpack.c.h.b16 %v216
      %v292 = vunpack.c.l.b16 %v217
      %v293 = vunpack.c.h.b16 %v217
      %v294 = vunpack.c.l.b16 %v218
      %v295 = vunpack.c.h.b16 %v218
      %v296 = vunpack.c.l.b16 %v219
      %v297 = vunpack.c.h.b16 %v219
      %v298 = vunpack.c.l.b16 %v220
      %v299 = vunpack.c.h.b16 %v220
      %v300 = vunpack.c.l.b16 %v221
      %v301 = vunpack.c.h.b16 %v221
      %v302 = vunpack.c.l.b16 %v222
      %v303 = vunpack.c.h.b16 %v222
      %v304 = vunpack.c.l.b16 %v223
      %v305 = vunpack.c.h.b16 %v223
      %v306 = vunpack.c.l.b16 %v224
      %v307 = vunpack.c.h.b16 %v224
      %v308 = vunpack.c.l.b16 %v225
      %v309 = vunpack.c.h.b16 %v225
      %v310 = vunpack.c.l.b16 %v226
      %v311 = vunpack.c.h.b16 %v226
      %v312 = vunpack.c.l.b16 %v227
      %v313 = vunpack.c.h.b16 %v227
      %v314 = vunpack.c.l.b16 %v228
      %v315 = vunpack.c.h.b16 %v228
      %v316 = vunpack.c.l.b16 %v229
      %v317 = vunpack.c.h.b16 %v229
      %v318 = vunpack.c.l.b16 %v230
      %v319 = vunpack.c.h.b16 %v230
      %v320 = vunpack.c.l.b16 %v231
      %v321 = vunpack.c.h.b16 %v231
      %v322 = vunpack.c.l.b16 %v232
      %v323 = vunpack.c.h.b16 %v232
      %v324 = vunpack.c.l.b16 %v233
      %v325 = vunpack.c.h.b16 %v233
      %v326 = vunpack.c.l.b16 %v234
      %v327 = vunpack.c.h.b16 %v234
      %v328 = vunpack.c.l.b16 %v235
      %v329 = vunpack.c.h.b16 %v235
      %v330 = vunpack.c.l.b16 %v236
      %v331 = vunpack.c.h.b16 %v236
      %v332 = vunpack.c.l.b16 %v237
      %v333 = vunpack.c.h.b16 %v237
      %v334 = vpack.c.b16 %v274, %v270
      %v335 = vpack.c.b16 %v275, %v271
      %v336 = vpack.c.b16 %v276, %v272
      %v337 = vpack.c.b16 %v277, %v273
      %v338 = vpack.c.b16 %v282, %v278
      %v339 = vpack.c.b16 %v283, %v279
      %v340 = vpack.c.b16 %v284, %v280
      %v341 = vpack.c.b16 %v285, %v281
      %v342 = vpack.c.b16 %v290, %v286
      %v343 = vpack.c.b16 %v291, %v287
      %v344 = vpack.c.b16 %v292, %v288
      %v345 = vpack.c.b16 %v293, %v289
      %v346 = vpack.c.b16 %v298, %v294
      %v347 = vpack.c.b16 %v299, %v295
      %v348 = vpack.c.b16 %v300, %v296
      %v349 = vpack.c.b16 %v301, %v297
      %v350 = vpack.c.b16 %v306, %v302
      %v351 = vpack.c.b16 %v307, %v303
      %v352 = vpack.c.b16 %v308, %v304
      %v353 = vpack.c.b16 %v309, %v305
      %v354 = vpack.c.b16 %v314, %v310
      %v355 = vpack.c.b16 %v315, %v311
      %v356 = vpack.c.b16 %v316, %v312
      %v357 = vpack.c.b16 %v317, %v313
      %v358 = vpack.c.b16 %v322, %v318
      %v359 = vpack.c.b16 %v323, %v319
      %v360 = vpack.c.b16 %v324, %v320
      %v361 = vpack.c.b16 %v325, %v321
      %v362 = vpack.c.b16 %v330, %v326
      %v363 = vpack.c.b16 %v331, %v327
      %v364 = vpack.c.b16 %v332, %v328
      %v365 = vpack.c.b16 %v333, %v329
      %398 = vmatprep.subr.bf16.mxu0 %v335
      %399 = vmatpush1.bf16.msra.mxu0 %v334
      %400 = vmatprep.subr.bf16.mxu0 %v339
      %401 = vmatpush1.bf16.msra.mxu0 %v338
      %402 = vmatprep.subr.bf16.mxu0 %v343
      %403 = vmatpush1.bf16.msra.mxu0 %v342
      %404 = vmatprep.subr.bf16.mxu0 %v347
      %405 = vmatpush1.bf16.msra.mxu0 %v346
      %406 = vmatprep.subr.bf16.mxu0 %v351
      %407 = vmatpush1.bf16.msra.mxu0 %v350
      %408 = vmatprep.subr.bf16.mxu0 %v355
      %409 = vmatpush1.bf16.msra.mxu0 %v354
      %410 = vmatprep.subr.bf16.mxu0 %v359
      %411 = vmatpush1.bf16.msra.mxu0 %v358
      %412 = vmatprep.subr.bf16.mxu0 %v363
      %413 = vmatpush1.bf16.msra.mxu0 %v362
      %414 = vmatprep.subr.bf16.mxu0 0
      %415 = vmatpush1.bf16.msra.mxu0 0
      %416 = vmatprep.subr.bf16.mxu0 0
      %417 = vmatpush1.bf16.msra.mxu0 0
      %418 = vmatprep.subr.bf16.mxu0 0
      %419 = vmatpush1.bf16.msra.mxu0 0
      %420 = vmatprep.subr.bf16.mxu0 0
      %421 = vmatpush1.bf16.msra.mxu0 0
      %422 = vmatprep.subr.bf16.mxu0 0
      %423 = vmatpush1.bf16.msra.mxu0 0
      %424 = vmatprep.subr.bf16.mxu0 0
      %425 = vmatpush1.bf16.msra.mxu0 0
      %426 = vmatprep.subr.bf16.mxu0 0
      %427 = vmatpush1.bf16.msra.mxu0 0
      %428 = vmatprep.subr.bf16.mxu0 0
      %429 = vmatpush1.bf16.msra.mxu0 0
      %430 = vmatprep.mubr.bf16.mxu0 0
      %431 = vmatmul.mubr.bf16.gmra.mrb[0].mxu0 %v205
      %v432 = vpop.f32.mrb[0].mxu0
      %v433 = vadd.f32 0.0, %v432
      %v434 = vpop.f32.mrb[0].mxu0
      %v435 = vadd.f32 0.0, %v434
      %v436 = vpop.f32.mrb[0].mxu0
      %v437 = vpop.f32.mrb[0].mxu0
      %438 = vdwg.mxu0
      %439 = vmatprep.subr.bf16.mxu0 %v337
      %440 = vmatpush1.bf16.msra.mxu0 %v336
      %441 = vmatprep.subr.bf16.mxu0 %v341
      %442 = vmatpush1.bf16.msra.mxu0 %v340
      %443 = vmatprep.subr.bf16.mxu0 %v345
      %444 = vmatpush1.bf16.msra.mxu0 %v344
      %445 = vmatprep.subr.bf16.mxu0 %v349
      %446 = vmatpush1.bf16.msra.mxu0 %v348
      %447 = vmatprep.subr.bf16.mxu0 %v353
      %448 = vmatpush1.bf16.msra.mxu0 %v352
      %449 = vmatprep.subr.bf16.mxu0 %v357
      %450 = vmatpush1.bf16.msra.mxu0 %v356
      %451 = vmatprep.subr.bf16.mxu0 %v361
      %452 = vmatpush1.bf16.msra.mxu0 %v360
      %453 = vmatprep.subr.bf16.mxu0 %v365
      %454 = vmatpush1.bf16.msra.mxu0 %v364
      %455 = vmatprep.subr.bf16.mxu0 0
      %456 = vmatpush1.bf16.msra.mxu0 0
      %457 = vmatprep.subr.bf16.mxu0 0
      %458 = vmatpush1.bf16.msra.mxu0 0
      %459 = vmatprep.subr.bf16.mxu0 0
      %460 = vmatpush1.bf16.msra.mxu0 0
      %461 = vmatprep.subr.bf16.mxu0 0
      %462 = vmatpush1.bf16.msra.mxu0 0
      %463 = vmatprep.subr.bf16.mxu0 0
      %464 = vmatpush1.bf16.msra.mxu0 0
      %465 = vmatprep.subr.bf16.mxu0 0
      %466 = vmatpush1.bf16.msra.mxu0 0
      %467 = vmatprep.subr.bf16.mxu0 0
      %468 = vmatpush1.bf16.msra.mxu0 0
      %469 = vmatprep.subr.bf16.mxu0 0
      %470 = vmatpush1.bf16.msra.mxu0 0
      %471 = vmatprep.mubr.bf16.mxu0 0
      %472 = vmatmul.mubr.bf16.gmra.mrb[0].mxu0 %v205
      %v473 = vpop.f32.mrb[0].mxu0
      %v474 = vadd.f32 0.0, %v473
      %v475 = vpop.f32.mrb[0].mxu0
      %v476 = vadd.f32 0.0, %v475
      %v477 = vpop.f32.mrb[0].mxu0
      %v478 = vpop.f32.mrb[0].mxu0
      %479 = vdwg.mxu0
      %v480 = vadd.f32 %v200, %v433
      %v481 = vadd.f32 %v201, %v435
      %v482 = vadd.f32 %v202, %v474
      %v483 = vadd.f32 %v203, %v476
      %v484 = vld [vmem:[#allocation3] sm:$0xff]
      %v485 = vxor.u32 %v480, 2147483648
      %v486 = vmul.f32 %v485, 1.442695
      %v487 = vpow.pop %v486
      %v488 = vadd.f32 %v487, 1.0
      %v489 = vrcp.pop %v488
      %v490 = vmul.f32 1.0, %v489
      %v491 = vxor.u32 %v481, 2147483648
      %v492 = vmul.f32 %v491, 1.442695
      %v493 = vpow.pop %v492
      %v494 = vadd.f32 %v493, 1.0
      %v495 = vrcp.pop %v494
      %v496 = vmul.f32 1.0, %v495
      %v497 = vtanh.pop %v482
      %v498 = vxor.u32 %v483, 2147483648
      %v499 = vmul.f32 %v498, 1.442695
      %v500 = vpow.pop %v499
      %v501 = vadd.f32 %v500, 1.0
      %v502 = vrcp.pop %v501
      %v503 = vmul.f32 1.0, %v502
      %v504 = vmul.f32 %v496, %v484
      %v505 = vmul.f32 %v490, %v497
      %v506 = vadd.f32 %v504, %v505
      %v507 = vtanh.pop %v506
      %v508 = vmul.f32 %v503, %v507
      %509 = vst [vmem:[#allocation2] sm:$0xff] %v508
      %510 = vst [vmem:[#allocation3] sm:$0xff] %v506
      %511 = vst [vmem:[%s190] sm:$0xff] %v508
      %p512 = scmp.eq.s32.totalorder %s16, 3
      // Predicated region
      $region33: #{hierachical_forward_train.5} parent=27 // pred_check
        %p513 = pneg %p512
      $region34: #{hierachical_forward_train.5} parent=27 // pred_check_branch
        %515 = sbr.rel (%p513) target = $region36
      $region35: #{hierachical_forward_train.5} parent=27 // pred_region
        %516 = vst [vmem:[%s3] sm:$0xff] %v508
        %517 = vst [vmem:[%s4] sm:$0xff] %v506
      $region36: #{hierachical_forward_train.5} parent=27 // pred_fallthru
        _
      %p518 = scmp.lt.s32.totalorder %s16, 3
      %s519 = scalar_select %p518, %s16, 3
      %s520 = smul.addr %s519, 8
      %s521 = scalar_lea.vmem %s2, %s520
      // Predicated region
      $region37: #{hierachical_forward_train.5} parent=27 // pred_check
        %p522 = pneg %p81
      $region38: #{hierachical_forward_train.5} parent=27 // pred_check_branch
        %524 = sbr.rel (%p522) target = $region40
      $region39: #{hierachical_forward_train.5} parent=27 // pred_region
        _
      $region40: #{hierachical_forward_train.5} parent=27 // pred_fallthru
        _
      // Predicated region
      $region41: #{hierachical_forward_train.5} parent=27 // pred_check
        %p525 = pneg %p102
      $region42: #{hierachical_forward_train.5} parent=27 // pred_check_branch
        %527 = sbr.rel (%p525) target = $region44
      $region43: #{hierachical_forward_train.5} parent=27 // pred_region
        _
      $region44: #{hierachical_forward_train.5} parent=27 // pred_fallthru
        _
      // Predicated region
      $region45: #{hierachical_forward_train.5} parent=27 // pred_check
        %p528 = pneg %p123
      $region46: #{hierachical_forward_train.5} parent=27 // pred_check_branch
        %530 = sbr.rel (%p528) target = $region48
      $region47: #{hierachical_forward_train.5} parent=27 // pred_region
        _
      $region48: #{hierachical_forward_train.5} parent=27 // pred_fallthru
        _
      // Predicated region
      $region49: #{hierachical_forward_train.5} parent=27 // pred_check
        %p531 = pneg %p102
      $region50: #{hierachical_forward_train.5} parent=27 // pred_check_branch
        %533 = sbr.rel (%p531) target = $region52
      $region51: #{hierachical_forward_train.5} parent=27 // pred_region
        _
      $region52: #{hierachical_forward_train.5} parent=27 // pred_fallthru
        _
      // Predicated region
      $region53: #{hierachical_forward_train.5} parent=27 // pred_check
        %p534 = pneg %p123
      $region54: #{hierachical_forward_train.5} parent=27 // pred_check_branch
        %536 = sbr.rel (%p534) target = $region56
      $region55: #{hierachical_forward_train.5} parent=27 // pred_region
        _
      $region56: #{hierachical_forward_train.5} parent=27 // pred_fallthru
        _
    $region28: #{hierachical_forward_train.5} parent=5 // pred_fallthru
      _
    %p537 = scmp.le.s32.totalorder 2, %s11
    // Predicated region
    $region57: #{hierachical_forward_train.5} parent=5 // pred_check
      %p538 = pneg %p537
    $region58: #{hierachical_forward_train.5} parent=5 // pred_check_branch
      %540 = sbr.rel (%p538) target = $region60
    $region59: #{hierachical_forward_train.5} parent=5 // pred_region
      %s541 = ssub.s32 %s11, 2
      // Predicated region
      $region61: #{hierachical_forward_train.5} parent=59 // pred_check
        %p542 = pneg %p87
      $region62: #{hierachical_forward_train.5} parent=59 // pred_check_branch
        %544 = sbr.rel (%p542) target = $region64
      $region63: #{hierachical_forward_train.5} parent=59 // pred_region
        %p545 = scmp.lt.s32.totalorder %s17, 3
        %s546 = scalar_select %p545, %s17, 3
        %s547 = smul.addr %s546, 8
        %s548 = scalar_lea.vmem %s2, %s547
      $region64: #{hierachical_forward_train.5} parent=59 // pred_fallthru
        _
    $region60: #{hierachical_forward_train.5} parent=5 // pred_fallthru
      _
  $region6: #{hierachical_forward_train.5} parent=0 // loop_footer
    %s15 = sadd.s32 1, %s11
  $region7: #{hierachical_forward_train.5} parent=0 // loop_footer_branch
    %10 = sbr.rel target = $region3
  $region8: #{hierachical_forward_train.5} parent=0 // loop_exit
    _

// kernel: hierachical_forward_train.4
$region0: #{hierachical_forward_train.4}
  #allocation0 [shape = 'u32[]', space=smem, size = 0x4, offset = 0x4, fixed_abs, tag = 'smem constant byte address 0x4 - core index']
  #allocation1 [shape = 'u32[144,128]{1,0:T(1,128)}', space=vmem, size = 0x12000, scoped, tag = 'internal scratch']
  #allocation2 [shape = 'f32[32,128]{1,0:T(8,128)}', space=vmem, size = 0x4000, scoped, tag = 'scratch operand']
  #allocation3 [shape = 'f32[32,128]{1,0:T(8,128)}', space=vmem, size = 0x4000, scoped, tag = 'scratch operand']
  %s0 = inlined_call_operand.vmem [shape: bf16[8,32,512], index: 0, kind: input, shape index: {}]
  %s1 = inlined_call_operand.vmem [shape: bf16[128,512], index: 1, kind: input, shape index: {}]
  %s2 = inlined_call_operand.vmem [shape: f32[32,128], index: 2, kind: output, shape index: {}]
  %s3 = sld [smem:[#allocation0]]
  $region49: #{hierachical_forward_train.4} parent=0
    _
  %s5 = ssub.s32 1, %s3
  %s6 = scalar_select 0, %s5, %s3
  loop: start=0, step=1, limit=10
  $region2: #{hierachical_forward_train.4} parent=0 // loop_pre_header
    _
  $region3: #{hierachical_forward_train.4} parent=0 // loop_header
    %s8 = sphi 0, %s12
    %p9 = scmp.ge.s32.totalorder %s8, 10
    %s18 = sphi 0, %s20
    %s21 = sphi 0, %s18
    %s22 = sphi 0, %s21
    %s38 = sphi 0, %s22
    %s42 = sphi 0, %s42
    %s44 = sphi 0, %s42
    %s45 = sphi 0, %s44
    %s59 = sphi 0, %s45
    %s63 = sphi 0, %s63
    %s65 = sphi 0, %s63
    %s66 = sphi 0, %s65
    %s80 = sphi 0, %s66
  $region4: #{hierachical_forward_train.4} parent=0 // loop_header_branch
    %11 = sbr.rel (%p9) target = $region8
  $region5: #{hierachical_forward_train.4} parent=0 // loop_body
    %s13 = ssub.s32 %s8, 1
    %s14 = ssub.s32 %s8, 2
    %s15 = sadd.s32 %s8, 1
    %s16 = ssub.s32 %s8, %s15
    %p17 = scmp.eq.s32.totalorder %s16, 0
    %s19 = sadd.s32 %s18, 1
    %s20 = scalar_select %p17, %s18, %s19
    %p23 = pneg %p17
    %p24 = scmp.eq.s32.totalorder %s8, 7
    %p25 = por %p23, %p24
    %p26 = scmp.ne.s32.totalorder %s18, %s21
    %p27 = scmp.eq.s32.totalorder %s8, 0
    %p28 = por %p26, %p27
    %p29 = scmp.ne.s32.totalorder %s18, %s21
    %p30 = scmp.eq.s32.totalorder %s13, 7
    %p31 = por %p29, %p30
    %p32 = scmp.ne.s32.totalorder %s21, %s22
    %p33 = scmp.eq.s32.totalorder %s13, 0
    %p34 = por %p32, %p33
    %p35 = scmp.ne.s32.totalorder %s21, %s22
    %p36 = scmp.eq.s32.totalorder %s14, 7
    %p37 = por %p35, %p36
    %p39 = scmp.ne.s32.totalorder %s22, %s38
    %p40 = scmp.eq.s32.totalorder %s14, 0
    %p41 = por %p39, %p40
    %s43 = sadd.s32 %s42, 1
    %p46 = scmp.eq.s32.totalorder %s8, 7
    %p47 = scmp.ne.s32.totalorder %s42, %s44
    %p48 = scmp.eq.s32.totalorder %s8, 0
    %p49 = por %p47, %p48
    %p50 = scmp.ne.s32.totalorder %s42, %s44
    %p51 = scmp.eq.s32.totalorder %s13, 7
    %p52 = por %p50, %p51
    %p53 = scmp.ne.s32.totalorder %s44, %s45
    %p54 = scmp.eq.s32.totalorder %s13, 0
    %p55 = por %p53, %p54
    %p56 = scmp.ne.s32.totalorder %s44, %s45
    %p57 = scmp.eq.s32.totalorder %s14, 7
    %p58 = por %p56, %p57
    %p60 = scmp.ne.s32.totalorder %s45, %s59
    %p61 = scmp.eq.s32.totalorder %s14, 0
    %p62 = por %p60, %p61
    %s64 = sadd.s32 %s63, 1
    %p67 = scmp.eq.s32.totalorder %s8, 7
    %p68 = scmp.ne.s32.totalorder %s63, %s65
    %p69 = scmp.eq.s32.totalorder %s8, 0
    %p70 = por %p68, %p69
    %p71 = scmp.ne.s32.totalorder %s63, %s65
    %p72 = scmp.eq.s32.totalorder %s13, 7
    %p73 = por %p71, %p72
    %p74 = scmp.ne.s32.totalorder %s65, %s66
    %p75 = scmp.eq.s32.totalorder %s13, 0
    %p76 = por %p74, %p75
    %p77 = scmp.ne.s32.totalorder %s65, %s66
    %p78 = scmp.eq.s32.totalorder %s14, 7
    %p79 = por %p77, %p78
    %p81 = scmp.ne.s32.totalorder %s66, %s80
    %p82 = scmp.eq.s32.totalorder %s14, 0
    %p83 = por %p81, %p82
    %p84 = scmp.le.s32.totalorder 1, %s8
    %p85 = scmp.lt.s32.totalorder %s8, 9
    %p86 = pnand %p84, %p85
    %p87 = pneg %p86
    // Predicated region
    $region9: #{hierachical_forward_train.4} parent=5 // pred_check
      _
    $region10: #{hierachical_forward_train.4} parent=5 // pred_check_branch
      %89 = sbr.rel (%p86) target = $region12
    $region11: #{hierachical_forward_train.4} parent=5 // pred_region
      %s90 = ssub.s32 %s8, 1
      // Predicated region
      $region13: #{hierachical_forward_train.4} parent=11 // pred_check
        %p91 = pneg %p55
      $region14: #{hierachical_forward_train.4} parent=11 // pred_check_branch
        %93 = sbr.rel (%p91) target = $region16
      $region15: #{hierachical_forward_train.4} parent=11 // pred_region
        _
      $region16: #{hierachical_forward_train.4} parent=11 // pred_fallthru
        _
    $region12: #{hierachical_forward_train.4} parent=5 // pred_fallthru
      _
    %p94 = scmp.lt.s32.totalorder %s8, 8
    // Predicated region
    $region17: #{hierachical_forward_train.4} parent=5 // pred_check
      %p95 = pneg %p94
    $region18: #{hierachical_forward_train.4} parent=5 // pred_check_branch
      %97 = sbr.rel (%p95) target = $region20
    $region19: #{hierachical_forward_train.4} parent=5 // pred_region
      // Predicated region
      $region21: #{hierachical_forward_train.4} parent=19 // pred_check
        %p98 = pneg %p28
      $region22: #{hierachical_forward_train.4} parent=19 // pred_check_branch
        %100 = sbr.rel (%p98) target = $region24
      $region23: #{hierachical_forward_train.4} parent=19 // pred_region
        %p101 = scmp.lt.s32.totalorder %s8, 7
        %s102 = scalar_select %p101, %s8, 7
        %s103 = smul.addr %s102, 16
        %s104 = smul.addr %s103, 4
        %s105 = scalar_lea.vmem %s0, %s104
      $region24: #{hierachical_forward_train.4} parent=19 // pred_fallthru
        _
    $region20: #{hierachical_forward_train.4} parent=5 // pred_fallthru
      _
    %p106 = scmp.le.s32.totalorder 1, %s8
    %p107 = scmp.lt.s32.totalorder %s8, 9
    %p108 = pnand %p106, %p107
    %p109 = pneg %p108
    // Predicated region
    $region25: #{hierachical_forward_train.4} parent=5 // pred_check
      _
    $region26: #{hierachical_forward_train.4} parent=5 // pred_check_branch
      %111 = sbr.rel (%p108) target = $region28
    $region27: #{hierachical_forward_train.4} parent=5 // pred_region
      %s112 = ssub.s32 %s8, 1
      %p113 = scmp.lt.s32.totalorder %s13, 7
      %s114 = scalar_select %p113, %s13, 7
      %s115 = smul.addr %s114, 16
      %s116 = smul.addr %s115, 4
      %s117 = scalar_lea.vmem %s0, %s116
      %p118 = pneg %p34
      %p119 = pneg %p31
      %p120 = pneg %p55
      %p121 = pneg %p52
      %p122 = pneg %p76
      %p123 = pneg %p73
      %p124 = scmp.lt.s32.totalorder %s13, 7
      %s125 = scalar_select %p124, %s13, 7
      %s126 = smul.addr %s125, 16
      %s127 = smul.addr %s126, 4
      %s128 = scalar_lea.vmem %s0, %s127
      %p130 = scmp.eq.s32.totalorder %s13, 0
      // Predicated region
      $region29: #{hierachical_forward_train.4} parent=27 // pred_check
        %p131 = pneg %p130
      $region30: #{hierachical_forward_train.4} parent=27 // pred_check_branch
        %133 = sbr.rel (%p131) target = $region32
      $region31: #{hierachical_forward_train.4} parent=27 // pred_region
        %134 = vst [vmem:[#allocation2] sm:$0xff] 0.0
        %135 = vst [vmem:[#allocation2 + $0x8] sm:$0xff] 0.0
        %136 = vst [vmem:[#allocation2 + $0x10] sm:$0xff] 0.0
        %137 = vst [vmem:[#allocation2 + $0x18] sm:$0xff] 0.0
        %138 = vst [vmem:[#allocation3] sm:$0xff] 0.0
        %139 = vst [vmem:[#allocation3 + $0x8] sm:$0xff] 0.0
        %140 = vst [vmem:[#allocation3 + $0x10] sm:$0xff] 0.0
        %141 = vst [vmem:[#allocation3 + $0x18] sm:$0xff] 0.0
      $region32: #{hierachical_forward_train.4} parent=27 // pred_fallthru
        _
      %v142 = vld [vmem:[%s128] sm:$0xff]
      %v143 = vld [vmem:[%s128 + $0x8] sm:$0xff]
      %v144 = vld [vmem:[%s128 + $0x10] sm:$0xff]
      %v145 = vld [vmem:[%s128 + $0x18] sm:$0xff]
      %v146 = vld [vmem:[%s128 + $0x20] sm:$0xff]
      %v147 = vld [vmem:[%s128 + $0x28] sm:$0xff]
      %v148 = vld [vmem:[%s128 + $0x30] sm:$0xff]
      %v149 = vld [vmem:[%s128 + $0x38] sm:$0xff]
      %v150 = vunpack.c.l.bf16 %v142
      %v151 = vunpack.c.h.bf16 %v142
      %v152 = vunpack.c.l.bf16 %v143
      %v153 = vunpack.c.h.bf16 %v143
      %v154 = vunpack.c.l.bf16 %v144
      %v155 = vunpack.c.h.bf16 %v144
      %v156 = vunpack.c.l.bf16 %v145
      %v157 = vunpack.c.h.bf16 %v145
      %v158 = vunpack.c.l.bf16 %v146
      %v159 = vunpack.c.h.bf16 %v146
      %v160 = vunpack.c.l.bf16 %v147
      %v161 = vunpack.c.h.bf16 %v147
      %v162 = vunpack.c.l.bf16 %v148
      %v163 = vunpack.c.h.bf16 %v148
      %v164 = vunpack.c.l.bf16 %v149
      %v165 = vunpack.c.h.bf16 %v149
      %v166 = vld [vmem:[#allocation2] sm:$0xff]
      %v167 = vld [vmem:[#allocation2 + $0x8] sm:$0xff]
      %v168 = vld [vmem:[#allocation2 + $0x10] sm:$0xff]
      %v169 = vld [vmem:[#allocation2 + $0x18] sm:$0xff]
      %v170 = vpack.c.bf16 %v167, %v166
      %v171 = vpack.c.bf16 %v169, %v168
      %v172 = vld [vmem:[%s1] sm:$0xff]
      %v173 = vld [vmem:[%s1 + $0x8] sm:$0xff]
      %v174 = vld [vmem:[%s1 + $0x10] sm:$0xff]
      %v175 = vld [vmem:[%s1 + $0x18] sm:$0xff]
      %v176 = vld [vmem:[%s1 + $0x20] sm:$0xff]
      %v177 = vld [vmem:[%s1 + $0x28] sm:$0xff]
      %v178 = vld [vmem:[%s1 + $0x30] sm:$0xff]
      %v179 = vld [vmem:[%s1 + $0x38] sm:$0xff]
      %v180 = vld [vmem:[%s1 + $0x40] sm:$0xff]
      %v181 = vld [vmem:[%s1 + $0x48] sm:$0xff]
      %v182 = vld [vmem:[%s1 + $0x50] sm:$0xff]
      %v183 = vld [vmem:[%s1 + $0x58] sm:$0xff]
      %v184 = vld [vmem:[%s1 + $0x60] sm:$0xff]
      %v185 = vld [vmem:[%s1 + $0x68] sm:$0xff]
      %v186 = vld [vmem:[%s1 + $0x70] sm:$0xff]
      %v187 = vld [vmem:[%s1 + $0x78] sm:$0xff]
      %v188 = vld [vmem:[%s1 + $0x80] sm:$0xff]
      %v189 = vld [vmem:[%s1 + $0x88] sm:$0xff]
      %v190 = vld [vmem:[%s1 + $0x90] sm:$0xff]
      %v191 = vld [vmem:[%s1 + $0x98] sm:$0xff]
      %v192 = vld [vmem:[%s1 + $0xa0] sm:$0xff]
      %v193 = vld [vmem:[%s1 + $0xa8] sm:$0xff]
      %v194 = vld [vmem:[%s1 + $0xb0] sm:$0xff]
      %v195 = vld [vmem:[%s1 + $0xb8] sm:$0xff]
      %v196 = vld [vmem:[%s1 + $0xc0] sm:$0xff]
      %v197 = vld [vmem:[%s1 + $0xc8] sm:$0xff]
      %v198 = vld [vmem:[%s1 + $0xd0] sm:$0xff]
      %v199 = vld [vmem:[%s1 + $0xd8] sm:$0xff]
      %v200 = vld [vmem:[%s1 + $0xe0] sm:$0xff]
      %v201 = vld [vmem:[%s1 + $0xe8] sm:$0xff]
      %v202 = vld [vmem:[%s1 + $0xf0] sm:$0xff]
      %v203 = vld [vmem:[%s1 + $0xf8] sm:$0xff]
      %v236 = vunpack.c.l.b16 %v172
      %v237 = vunpack.c.h.b16 %v172
      %v238 = vunpack.c.l.b16 %v173
      %v239 = vunpack.c.h.b16 %v173
      %v240 = vunpack.c.l.b16 %v174
      %v241 = vunpack.c.h.b16 %v174
      %v242 = vunpack.c.l.b16 %v175
      %v243 = vunpack.c.h.b16 %v175
      %v244 = vunpack.c.l.b16 %v176
      %v245 = vunpack.c.h.b16 %v176
      %v246 = vunpack.c.l.b16 %v177
      %v247 = vunpack.c.h.b16 %v177
      %v248 = vunpack.c.l.b16 %v178
      %v249 = vunpack.c.h.b16 %v178
      %v250 = vunpack.c.l.b16 %v179
      %v251 = vunpack.c.h.b16 %v179
      %v252 = vunpack.c.l.b16 %v180
      %v253 = vunpack.c.h.b16 %v180
      %v254 = vunpack.c.l.b16 %v181
      %v255 = vunpack.c.h.b16 %v181
      %v256 = vunpack.c.l.b16 %v182
      %v257 = vunpack.c.h.b16 %v182
      %v258 = vunpack.c.l.b16 %v183
      %v259 = vunpack.c.h.b16 %v183
      %v260 = vunpack.c.l.b16 %v184
      %v261 = vunpack.c.h.b16 %v184
      %v262 = vunpack.c.l.b16 %v185
      %v263 = vunpack.c.h.b16 %v185
      %v264 = vunpack.c.l.b16 %v186
      %v265 = vunpack.c.h.b16 %v186
      %v266 = vunpack.c.l.b16 %v187
      %v267 = vunpack.c.h.b16 %v187
      %v268 = vunpack.c.l.b16 %v188
      %v269 = vunpack.c.h.b16 %v188
      %v270 = vunpack.c.l.b16 %v189
      %v271 = vunpack.c.h.b16 %v189
      %v272 = vunpack.c.l.b16 %v190
      %v273 = vunpack.c.h.b16 %v190
      %v274 = vunpack.c.l.b16 %v191
      %v275 = vunpack.c.h.b16 %v191
      %v276 = vunpack.c.l.b16 %v192
      %v277 = vunpack.c.h.b16 %v192
      %v278 = vunpack.c.l.b16 %v193
      %v279 = vunpack.c.h.b16 %v193
      %v280 = vunpack.c.l.b16 %v194
      %v281 = vunpack.c.h.b16 %v194
      %v282 = vunpack.c.l.b16 %v195
      %v283 = vunpack.c.h.b16 %v195
      %v284 = vunpack.c.l.b16 %v196
      %v285 = vunpack.c.h.b16 %v196
      %v286 = vunpack.c.l.b16 %v197
      %v287 = vunpack.c.h.b16 %v197
      %v288 = vunpack.c.l.b16 %v198
      %v289 = vunpack.c.h.b16 %v198
      %v290 = vunpack.c.l.b16 %v199
      %v291 = vunpack.c.h.b16 %v199
      %v292 = vunpack.c.l.b16 %v200
      %v293 = vunpack.c.h.b16 %v200
      %v294 = vunpack.c.l.b16 %v201
      %v295 = vunpack.c.h.b16 %v201
      %v296 = vunpack.c.l.b16 %v202
      %v297 = vunpack.c.h.b16 %v202
      %v298 = vunpack.c.l.b16 %v203
      %v299 = vunpack.c.h.b16 %v203
      %v300 = vpack.c.b16 %v240, %v236
      %v301 = vpack.c.b16 %v241, %v237
      %v302 = vpack.c.b16 %v242, %v238
      %v303 = vpack.c.b16 %v243, %v239
      %v304 = vpack.c.b16 %v248, %v244
      %v305 = vpack.c.b16 %v249, %v245
      %v306 = vpack.c.b16 %v250, %v246
      %v307 = vpack.c.b16 %v251, %v247
      %v308 = vpack.c.b16 %v256, %v252
      %v309 = vpack.c.b16 %v257, %v253
      %v310 = vpack.c.b16 %v258, %v254
      %v311 = vpack.c.b16 %v259, %v255
      %v312 = vpack.c.b16 %v264, %v260
      %v313 = vpack.c.b16 %v265, %v261
      %v314 = vpack.c.b16 %v266, %v262
      %v315 = vpack.c.b16 %v267, %v263
      %v316 = vpack.c.b16 %v272, %v268
      %v317 = vpack.c.b16 %v273, %v269
      %v318 = vpack.c.b16 %v274, %v270
      %v319 = vpack.c.b16 %v275, %v271
      %v320 = vpack.c.b16 %v280, %v276
      %v321 = vpack.c.b16 %v281, %v277
      %v322 = vpack.c.b16 %v282, %v278
      %v323 = vpack.c.b16 %v283, %v279
      %v324 = vpack.c.b16 %v288, %v284
      %v325 = vpack.c.b16 %v289, %v285
      %v326 = vpack.c.b16 %v290, %v286
      %v327 = vpack.c.b16 %v291, %v287
      %v328 = vpack.c.b16 %v296, %v292
      %v329 = vpack.c.b16 %v297, %v293
      %v330 = vpack.c.b16 %v298, %v294
      %v331 = vpack.c.b16 %v299, %v295
      %364 = vmatprep.subr.bf16.mxu0 %v301
      %365 = vmatpush1.bf16.msra.mxu0 %v300
      %366 = vmatprep.subr.bf16.mxu0 %v305
      %367 = vmatpush1.bf16.msra.mxu0 %v304
      %368 = vmatprep.subr.bf16.mxu0 %v309
      %369 = vmatpush1.bf16.msra.mxu0 %v308
      %370 = vmatprep.subr.bf16.mxu0 %v313
      %371 = vmatpush1.bf16.msra.mxu0 %v312
      %372 = vmatprep.subr.bf16.mxu0 %v317
      %373 = vmatpush1.bf16.msra.mxu0 %v316
      %374 = vmatprep.subr.bf16.mxu0 %v321
      %375 = vmatpush1.bf16.msra.mxu0 %v320
      %376 = vmatprep.subr.bf16.mxu0 %v325
      %377 = vmatpush1.bf16.msra.mxu0 %v324
      %378 = vmatprep.subr.bf16.mxu0 %v329
      %379 = vmatpush1.bf16.msra.mxu0 %v328
      %380 = vmatprep.subr.bf16.mxu0 0
      %381 = vmatpush1.bf16.msra.mxu0 0
      %382 = vmatprep.subr.bf16.mxu0 0
      %383 = vmatpush1.bf16.msra.mxu0 0
      %384 = vmatprep.subr.bf16.mxu0 0
      %385 = vmatpush1.bf16.msra.mxu0 0
      %386 = vmatprep.subr.bf16.mxu0 0
      %387 = vmatpush1.bf16.msra.mxu0 0
      %388 = vmatprep.subr.bf16.mxu0 0
      %389 = vmatpush1.bf16.msra.mxu0 0
      %390 = vmatprep.subr.bf16.mxu0 0
      %391 = vmatpush1.bf16.msra.mxu0 0
      %392 = vmatprep.subr.bf16.mxu0 0
      %393 = vmatpush1.bf16.msra.mxu0 0
      %394 = vmatprep.subr.bf16.mxu0 0
      %395 = vmatpush1.bf16.msra.mxu0 0
      %396 = vmatprep.mubr.bf16.mxu0 0
      %397 = vmatmul.mubr.bf16.gmra.mrb[0].mxu0 %v170
      %v398 = vpop.f32.mrb[0].mxu0
      %v399 = vadd.f32 0.0, %v398
      %v400 = vpop.f32.mrb[0].mxu0
      %v401 = vadd.f32 0.0, %v400
      %v402 = vpop.f32.mrb[0].mxu0
      %v403 = vadd.f32 0.0, %v402
      %v404 = vpop.f32.mrb[0].mxu0
      %v405 = vadd.f32 0.0, %v404
      %406 = vmatprep.mubr.bf16.mxu0 0
      %407 = vmatmul.mubr.bf16.gmra.mrb[0].mxu0 %v171
      %v408 = vpop.f32.mrb[0].mxu0
      %v409 = vadd.f32 0.0, %v408
      %v410 = vpop.f32.mrb[0].mxu0
      %v411 = vadd.f32 0.0, %v410
      %v412 = vpop.f32.mrb[0].mxu0
      %v413 = vadd.f32 0.0, %v412
      %v414 = vpop.f32.mrb[0].mxu0
      %v415 = vadd.f32 0.0, %v414
      %416 = vdwg.mxu0
      %417 = vmatprep.subr.bf16.mxu0 %v303
      %418 = vmatpush1.bf16.msra.mxu0 %v302
      %419 = vmatprep.subr.bf16.mxu0 %v307
      %420 = vmatpush1.bf16.msra.mxu0 %v306
      %421 = vmatprep.subr.bf16.mxu0 %v311
      %422 = vmatpush1.bf16.msra.mxu0 %v310
      %423 = vmatprep.subr.bf16.mxu0 %v315
      %424 = vmatpush1.bf16.msra.mxu0 %v314
      %425 = vmatprep.subr.bf16.mxu0 %v319
      %426 = vmatpush1.bf16.msra.mxu0 %v318
      %427 = vmatprep.subr.bf16.mxu0 %v323
      %428 = vmatpush1.bf16.msra.mxu0 %v322
      %429 = vmatprep.subr.bf16.mxu0 %v327
      %430 = vmatpush1.bf16.msra.mxu0 %v326
      %431 = vmatprep.subr.bf16.mxu0 %v331
      %432 = vmatpush1.bf16.msra.mxu0 %v330
      %433 = vmatprep.subr.bf16.mxu0 0
      %434 = vmatpush1.bf16.msra.mxu0 0
      %435 = vmatprep.subr.bf16.mxu0 0
      %436 = vmatpush1.bf16.msra.mxu0 0
      %437 = vmatprep.subr.bf16.mxu0 0
      %438 = vmatpush1.bf16.msra.mxu0 0
      %439 = vmatprep.subr.bf16.mxu0 0
      %440 = vmatpush1.bf16.msra.mxu0 0
      %441 = vmatprep.subr.bf16.mxu0 0
      %442 = vmatpush1.bf16.msra.mxu0 0
      %443 = vmatprep.subr.bf16.mxu0 0
      %444 = vmatpush1.bf16.msra.mxu0 0
      %445 = vmatprep.subr.bf16.mxu0 0
      %446 = vmatpush1.bf16.msra.mxu0 0
      %447 = vmatprep.subr.bf16.mxu0 0
      %448 = vmatpush1.bf16.msra.mxu0 0
      %449 = vmatprep.mubr.bf16.mxu0 0
      %450 = vmatmul.mubr.bf16.gmra.mrb[0].mxu0 %v170
      %v451 = vpop.f32.mrb[0].mxu0
      %v452 = vadd.f32 0.0, %v451
      %v453 = vpop.f32.mrb[0].mxu0
      %v454 = vadd.f32 0.0, %v453
      %v455 = vpop.f32.mrb[0].mxu0
      %v456 = vadd.f32 0.0, %v455
      %v457 = vpop.f32.mrb[0].mxu0
      %v458 = vadd.f32 0.0, %v457
      %459 = vmatprep.mubr.bf16.mxu0 0
      %460 = vmatmul.mubr.bf16.gmra.mrb[0].mxu0 %v171
      %v461 = vpop.f32.mrb[0].mxu0
      %v462 = vadd.f32 0.0, %v461
      %v463 = vpop.f32.mrb[0].mxu0
      %v464 = vadd.f32 0.0, %v463
      %v465 = vpop.f32.mrb[0].mxu0
      %v466 = vadd.f32 0.0, %v465
      %v467 = vpop.f32.mrb[0].mxu0
      %v468 = vadd.f32 0.0, %v467
      %469 = vdwg.mxu0
      %v470 = vadd.f32 %v150, %v399
      %v471 = vadd.f32 %v151, %v401
      %v472 = vadd.f32 %v152, %v452
      %v473 = vadd.f32 %v153, %v454
      %v474 = vadd.f32 %v154, %v403
      %v475 = vadd.f32 %v155, %v405
      %v476 = vadd.f32 %v156, %v456
      %v477 = vadd.f32 %v157, %v458
      %v478 = vadd.f32 %v158, %v409
      %v479 = vadd.f32 %v159, %v411
      %v480 = vadd.f32 %v160, %v462
      %v481 = vadd.f32 %v161, %v464
      %v482 = vadd.f32 %v162, %v413
      %v483 = vadd.f32 %v163, %v415
      %v484 = vadd.f32 %v164, %v466
      %v485 = vadd.f32 %v165, %v468
      %v486 = vld [vmem:[#allocation3] sm:$0xff]
      %v487 = vld [vmem:[#allocation3 + $0x8] sm:$0xff]
      %v488 = vld [vmem:[#allocation3 + $0x10] sm:$0xff]
      %v489 = vld [vmem:[#allocation3 + $0x18] sm:$0xff]
      %v490 = vxor.u32 %v470, 2147483648
      %v491 = vxor.u32 %v474, 2147483648
      %v492 = vxor.u32 %v478, 2147483648
      %v493 = vxor.u32 %v482, 2147483648
      %v494 = vmul.f32 %v490, 1.442695
      %v495 = vpow.pop %v494
      %v496 = vmul.f32 %v491, 1.442695
      %v497 = vpow.pop %v496
      %v498 = vmul.f32 %v492, 1.442695
      %v499 = vpow.pop %v498
      %v500 = vmul.f32 %v493, 1.442695
      %v501 = vpow.pop %v500
      %v502 = vadd.f32 %v495, 1.0
      %v503 = vadd.f32 %v497, 1.0
      %v504 = vadd.f32 %v499, 1.0
      %v505 = vadd.f32 %v501, 1.0
      %v506 = vrcp.pop %v502
      %v507 = vmul.f32 1.0, %v506
      %v508 = vrcp.pop %v503
      %v509 = vmul.f32 1.0, %v508
      %v510 = vrcp.pop %v504
      %v511 = vmul.f32 1.0, %v510
      %v512 = vrcp.pop %v505
      %v513 = vmul.f32 1.0, %v512
      %v514 = vxor.u32 %v471, 2147483648
      %v515 = vxor.u32 %v475, 2147483648
      %v516 = vxor.u32 %v479, 2147483648
      %v517 = vxor.u32 %v483, 2147483648
      %v518 = vmul.f32 %v514, 1.442695
      %v519 = vpow.pop %v518
      %v520 = vmul.f32 %v515, 1.442695
      %v521 = vpow.pop %v520
      %v522 = vmul.f32 %v516, 1.442695
      %v523 = vpow.pop %v522
      %v524 = vmul.f32 %v517, 1.442695
      %v525 = vpow.pop %v524
      %v526 = vadd.f32 %v519, 1.0
      %v527 = vadd.f32 %v521, 1.0
      %v528 = vadd.f32 %v523, 1.0
      %v529 = vadd.f32 %v525, 1.0
      %v530 = vrcp.pop %v526
      %v531 = vmul.f32 1.0, %v530
      %v532 = vrcp.pop %v527
      %v533 = vmul.f32 1.0, %v532
      %v534 = vrcp.pop %v528
      %v535 = vmul.f32 1.0, %v534
      %v536 = vrcp.pop %v529
      %v537 = vmul.f32 1.0, %v536
      %v538 = vtanh.pop %v472
      %v539 = vtanh.pop %v476
      %v540 = vtanh.pop %v480
      %v541 = vtanh.pop %v484
      %v542 = vxor.u32 %v473, 2147483648
      %v543 = vxor.u32 %v477, 2147483648
      %v544 = vxor.u32 %v481, 2147483648
      %v545 = vxor.u32 %v485, 2147483648
      %v546 = vmul.f32 %v542, 1.442695
      %v547 = vpow.pop %v546
      %v548 = vmul.f32 %v543, 1.442695
      %v549 = vpow.pop %v548
      %v550 = vmul.f32 %v544, 1.442695
      %v551 = vpow.pop %v550
      %v552 = vmul.f32 %v545, 1.442695
      %v553 = vpow.pop %v552
      %v554 = vadd.f32 %v547, 1.0
      %v555 = vadd.f32 %v549, 1.0
      %v556 = vadd.f32 %v551, 1.0
      %v557 = vadd.f32 %v553, 1.0
      %v558 = vrcp.pop %v554
      %v559 = vmul.f32 1.0, %v558
      %v560 = vrcp.pop %v555
      %v561 = vmul.f32 1.0, %v560
      %v562 = vrcp.pop %v556
      %v563 = vmul.f32 1.0, %v562
      %v564 = vrcp.pop %v557
      %v565 = vmul.f32 1.0, %v564
      %v566 = vmul.f32 %v531, %v486
      %v567 = vmul.f32 %v533, %v487
      %v568 = vmul.f32 %v535, %v488
      %v569 = vmul.f32 %v537, %v489
      %v570 = vmul.f32 %v507, %v538
      %v571 = vmul.f32 %v509, %v539
      %v572 = vmul.f32 %v511, %v540
      %v573 = vmul.f32 %v513, %v541
      %v574 = vadd.f32 %v566, %v570
      %v575 = vadd.f32 %v567, %v571
      %v576 = vadd.f32 %v568, %v572
      %v577 = vadd.f32 %v569, %v573
      %v578 = vtanh.pop %v574
      %v579 = vtanh.pop %v575
      %v580 = vtanh.pop %v576
      %v581 = vtanh.pop %v577
      %v582 = vmul.f32 %v559, %v578
      %v583 = vmul.f32 %v561, %v579
      %v584 = vmul.f32 %v563, %v580
      %v585 = vmul.f32 %v565, %v581
      %586 = vst [vmem:[#allocation2] sm:$0xff] %v582
      %587 = vst [vmem:[#allocation2 + $0x8] sm:$0xff] %v583
      %588 = vst [vmem:[#allocation2 + $0x10] sm:$0xff] %v584
      %589 = vst [vmem:[#allocation2 + $0x18] sm:$0xff] %v585
      %590 = vst [vmem:[#allocation3] sm:$0xff] %v574
      %591 = vst [vmem:[#allocation3 + $0x8] sm:$0xff] %v575
      %592 = vst [vmem:[#allocation3 + $0x10] sm:$0xff] %v576
      %593 = vst [vmem:[#allocation3 + $0x18] sm:$0xff] %v577
      %p594 = scmp.eq.s32.totalorder %s13, 7
      // Predicated region
      $region33: #{hierachical_forward_train.4} parent=27 // pred_check
        %p595 = pneg %p594
      $region34: #{hierachical_forward_train.4} parent=27 // pred_check_branch
        %597 = sbr.rel (%p595) target = $region36
      $region35: #{hierachical_forward_train.4} parent=27 // pred_region
        %598 = vst [vmem:[%s2] sm:$0xff] %v582
        %599 = vst [vmem:[%s2 + $0x8] sm:$0xff] %v583
        %600 = vst [vmem:[%s2 + $0x10] sm:$0xff] %v584
        %601 = vst [vmem:[%s2 + $0x18] sm:$0xff] %v585
      $region36: #{hierachical_forward_train.4} parent=27 // pred_fallthru
        _
      // Predicated region
      $region37: #{hierachical_forward_train.4} parent=27 // pred_check
        %p602 = pneg %p73
      $region38: #{hierachical_forward_train.4} parent=27 // pred_check_branch
        %604 = sbr.rel (%p602) target = $region40
      $region39: #{hierachical_forward_train.4} parent=27 // pred_region
        _
      $region40: #{hierachical_forward_train.4} parent=27 // pred_fallthru
        _
      // Predicated region
      $region41: #{hierachical_forward_train.4} parent=27 // pred_check
        %p605 = pneg %p73
      $region42: #{hierachical_forward_train.4} parent=27 // pred_check_branch
        %607 = sbr.rel (%p605) target = $region44
      $region43: #{hierachical_forward_train.4} parent=27 // pred_region
        _
      $region44: #{hierachical_forward_train.4} parent=27 // pred_fallthru
        _
    $region28: #{hierachical_forward_train.4} parent=5 // pred_fallthru
      _
    %p608 = scmp.le.s32.totalorder 2, %s8
    // Predicated region
    $region45: #{hierachical_forward_train.4} parent=5 // pred_check
      %p609 = pneg %p608
    $region46: #{hierachical_forward_train.4} parent=5 // pred_check_branch
      %611 = sbr.rel (%p609) target = $region48
    $region47: #{hierachical_forward_train.4} parent=5 // pred_region
      %s612 = ssub.s32 %s8, 2
    $region48: #{hierachical_forward_train.4} parent=5 // pred_fallthru
      _
  $region6: #{hierachical_forward_train.4} parent=0 // loop_footer
    %s12 = sadd.s32 1, %s8
  $region7: #{hierachical_forward_train.4} parent=0 // loop_footer_branch
    %7 = sbr.rel target = $region3
  $region8: #{hierachical_forward_train.4} parent=0 // loop_exit
    _

// kernel: hierachical_forward_train.7
$region0: #{hierachical_forward_train.7}
  #allocation0 [shape = 'u32[]', space=smem, size = 0x4, offset = 0x4, fixed_abs, tag = 'smem constant byte address 0x4 - core index']
  #allocation1 [shape = 'u32[144,128]{1,0:T(1,128)}', space=vmem, size = 0x12000, scoped, tag = 'internal scratch']
  #allocation2 [shape = 'f32[80,1]{1,0:T(8,128)}', space=vmem, size = 0xa000, scoped, tag = 'scratch operand']
  #allocation3 [shape = 'f32[80,1]{1,0:T(8,128)}', space=vmem, size = 0xa000, scoped, tag = 'scratch operand']
  #allocation4 [shape = 'f32[80,1]{1,0:T(8,128)}', space=vmem, size = 0xa000, scoped, tag = 'scratch operand']
  %s0 = inlined_call_operand.vmem [shape: bf16[80,128], index: 0, kind: input, shape index: {}]
  %s1 = inlined_call_operand.vmem [shape: s32[80,1], index: 1, kind: input, shape index: {}]
  %s2 = inlined_call_operand.vmem [shape: f32[80,1], index: 2, kind: input, shape index: {}]
  %s3 = inlined_call_operand.vmem [shape: bf16[128,256], index: 3, kind: input, shape index: {}]
  %s4 = inlined_call_operand.vmem [shape: f32[1,256], index: 4, kind: input, shape index: {}]
  %s5 = inlined_call_operand.hbm [shape: f32[1,1], index: 5, kind: output, shape index: {}]
  %s6 = sld [smem:[#allocation0]]
  $region102: #{hierachical_forward_train.7} parent=0
    _
  %s8 = ssub.s32 1, %s6
  %s9 = scalar_select 0, %s8, %s6
  $region1: #{hierachical_forward_train.7} parent=0
    #allocation5 [shape = 'u8[65536]{0}', space=vmem, size = 0x10000, scoped, tag = 'input window, operand 3']
    #allocation6 [shape = 'u8[512]{0}', space=vmem, size = 0x400, scoped, tag = 'output window, operand 0, single buffered']
    #allocation7 [shape = 's32[2]{0}', space=sflag, size = 0x8, scoped, tag = 'scoped memory for hierachical_forward_train.7']
    %10 = vsyncpa [#allocation7], 0
    loop: start=0, step=1, limit=4
    $region2: #{hierachical_forward_train.7} parent=1 // loop_pre_header
      _
    $region3: #{hierachical_forward_train.7} parent=1 // loop_header
      %s12 = sphi 0, %s16
      %p13 = scmp.ge.s32.totalorder %s12, 4
      %s20 = sphi 0, %s20
      %s22 = sphi 0, %s20
      %s23 = sphi 0, %s22
      %s37 = sphi 0, %s23
      %s41 = sphi 0, %s41
      %s43 = sphi 0, %s41
      %s44 = sphi 0, %s43
      %s58 = sphi 0, %s44
      %s62 = sphi 0, %s62
      %s64 = sphi 0, %s62
      %s65 = sphi 0, %s64
      %s79 = sphi 0, %s65
      %s85 = sphi 0, %s87
      %s88 = sphi 0, %s85
      %s89 = sphi 0, %s88
      %s105 = sphi 0, %s89
      %s111 = sphi 0, %s113
      %s114 = sphi 0, %s111
      %s115 = sphi 0, %s114
      %s131 = sphi 0, %s115
      %s135 = sphi 0, %s135
      %s137 = sphi 0, %s135
      %s138 = sphi 0, %s137
      %s152 = sphi 0, %s138
    $region4: #{hierachical_forward_train.7} parent=1 // loop_header_branch
      %15 = sbr.rel (%p13) target = $region8
    $region5: #{hierachical_forward_train.7} parent=1 // loop_body
      %s17 = ssub.s32 %s12, 1
      %s18 = ssub.s32 %s12, 2
      %s19 = sadd.s32 %s12, 1
      %s21 = sadd.s32 %s20, 1
      %p24 = scmp.eq.s32.totalorder %s12, 1
      %p25 = scmp.ne.s32.totalorder %s20, %s22
      %p26 = scmp.eq.s32.totalorder %s12, 0
      %p27 = por %p25, %p26
      %p28 = scmp.ne.s32.totalorder %s20, %s22
      %p29 = scmp.eq.s32.totalorder %s17, 1
      %p30 = por %p28, %p29
      %p31 = scmp.ne.s32.totalorder %s22, %s23
      %p32 = scmp.eq.s32.totalorder %s17, 0
      %p33 = por %p31, %p32
      %p34 = scmp.ne.s32.totalorder %s22, %s23
      %p35 = scmp.eq.s32.totalorder %s18, 1
      %p36 = por %p34, %p35
      %p38 = scmp.ne.s32.totalorder %s23, %s37
      %p39 = scmp.eq.s32.totalorder %s18, 0
      %p40 = por %p38, %p39
      %s42 = sadd.s32 %s41, 1
      %p45 = scmp.eq.s32.totalorder %s12, 1
      %p46 = scmp.ne.s32.totalorder %s41, %s43
      %p47 = scmp.eq.s32.totalorder %s12, 0
      %p48 = por %p46, %p47
      %p49 = scmp.ne.s32.totalorder %s41, %s43
      %p50 = scmp.eq.s32.totalorder %s17, 1
      %p51 = por %p49, %p50
      %p52 = scmp.ne.s32.totalorder %s43, %s44
      %p53 = scmp.eq.s32.totalorder %s17, 0
      %p54 = por %p52, %p53
      %p55 = scmp.ne.s32.totalorder %s43, %s44
      %p56 = scmp.eq.s32.totalorder %s18, 1
      %p57 = por %p55, %p56
      %p59 = scmp.ne.s32.totalorder %s44, %s58
      %p60 = scmp.eq.s32.totalorder %s18, 0
      %p61 = por %p59, %p60
      %s63 = sadd.s32 %s62, 1
      %p66 = scmp.eq.s32.totalorder %s12, 1
      %p67 = scmp.ne.s32.totalorder %s62, %s64
      %p68 = scmp.eq.s32.totalorder %s12, 0
      %p69 = por %p67, %p68
      %p70 = scmp.ne.s32.totalorder %s62, %s64
      %p71 = scmp.eq.s32.totalorder %s17, 1
      %p72 = por %p70, %p71
      %p73 = scmp.ne.s32.totalorder %s64, %s65
      %p74 = scmp.eq.s32.totalorder %s17, 0
      %p75 = por %p73, %p74
      %p76 = scmp.ne.s32.totalorder %s64, %s65
      %p77 = scmp.eq.s32.totalorder %s18, 1
      %p78 = por %p76, %p77
      %p80 = scmp.ne.s32.totalorder %s65, %s79
      %p81 = scmp.eq.s32.totalorder %s18, 0
      %p82 = por %p80, %p81
      %s83 = ssub.s32 %s12, %s19
      %p84 = scmp.eq.s32.totalorder %s83, 0
      %s86 = sadd.s32 %s85, 1
      %s87 = scalar_select %p84, %s85, %s86
      %p90 = pneg %p84
      %p91 = scmp.eq.s32.totalorder %s12, 1
      %p92 = por %p90, %p91
      %p93 = scmp.ne.s32.totalorder %s85, %s88
      %p94 = scmp.eq.s32.totalorder %s12, 0
      %p95 = por %p93, %p94
      %p96 = scmp.ne.s32.totalorder %s85, %s88
      %p97 = scmp.eq.s32.totalorder %s17, 1
      %p98 = por %p96, %p97
      %p99 = scmp.ne.s32.totalorder %s88, %s89
      %p100 = scmp.eq.s32.totalorder %s17, 0
      %p101 = por %p99, %p100
      %p102 = scmp.ne.s32.totalorder %s88, %s89
      %p103 = scmp.eq.s32.totalorder %s18, 1
      %p104 = por %p102, %p103
      %p106 = scmp.ne.s32.totalorder %s89, %s105
      %p107 = scmp.eq.s32.totalorder %s18, 0
      %p108 = por %p106, %p107
      %s109 = ssub.s32 %s12, %s19
      %p110 = scmp.eq.s32.totalorder %s109, 0
      %s112 = sadd.s32 %s111, 1
      %s113 = scalar_select %p110, %s111, %s112
      %p116 = pneg %p110
      %p117 = scmp.eq.s32.totalorder %s12, 1
      %p118 = por %p116, %p117
      %p119 = scmp.ne.s32.totalorder %s111, %s114
      %p120 = scmp.eq.s32.totalorder %s12, 0
      %p121 = por %p119, %p120
      %p122 = scmp.ne.s32.totalorder %s111, %s114
      %p123 = scmp.eq.s32.totalorder %s17, 1
      %p124 = por %p122, %p123
      %p125 = scmp.ne.s32.totalorder %s114, %s115
      %p126 = scmp.eq.s32.totalorder %s17, 0
      %p127 = por %p125, %p126
      %p128 = scmp.ne.s32.totalorder %s114, %s115
      %p129 = scmp.eq.s32.totalorder %s18, 1
      %p130 = por %p128, %p129
      %p132 = scmp.ne.s32.totalorder %s115, %s131
      %p133 = scmp.eq.s32.totalorder %s18, 0
      %p134 = por %p132, %p133
      %s136 = sadd.s32 %s135, 1
      %p139 = scmp.eq.s32.totalorder %s12, 1
      %p140 = scmp.ne.s32.totalorder %s135, %s137
      %p141 = scmp.eq.s32.totalorder %s12, 0
      %p142 = por %p140, %p141
      %p143 = scmp.ne.s32.totalorder %s135, %s137
      %p144 = scmp.eq.s32.totalorder %s17, 1
      %p145 = por %p143, %p144
      %p146 = scmp.ne.s32.totalorder %s137, %s138
      %p147 = scmp.eq.s32.totalorder %s17, 0
      %p148 = por %p146, %p147
      %p149 = scmp.ne.s32.totalorder %s137, %s138
      %p150 = scmp.eq.s32.totalorder %s18, 1
      %p151 = por %p149, %p150
      %p153 = scmp.ne.s32.totalorder %s138, %s152
      %p154 = scmp.eq.s32.totalorder %s18, 0
      %p155 = por %p153, %p154
      %p156 = scmp.le.s32.totalorder 1, %s12
      %p157 = scmp.lt.s32.totalorder %s12, 3
      %p158 = pnand %p156, %p157
      %p159 = pneg %p158
      // Predicated region
      $region9: #{hierachical_forward_train.7} parent=5 // pred_check
        _
      $region10: #{hierachical_forward_train.7} parent=5 // pred_check_branch
        %161 = sbr.rel (%p158) target = $region12
      $region11: #{hierachical_forward_train.7} parent=5 // pred_region
        %s162 = ssub.s32 %s12, 1
        // Predicated region
        $region13: #{hierachical_forward_train.7} parent=11 // pred_check
          %p163 = pneg %p33
        $region14: #{hierachical_forward_train.7} parent=11 // pred_check_branch
          %165 = sbr.rel (%p163) target = $region16
        $region15: #{hierachical_forward_train.7} parent=11 // pred_region
          _
        $region16: #{hierachical_forward_train.7} parent=11 // pred_fallthru
          _
        // Predicated region
        $region17: #{hierachical_forward_train.7} parent=11 // pred_check
          %p166 = pneg %p54
        $region18: #{hierachical_forward_train.7} parent=11 // pred_check_branch
          %168 = sbr.rel (%p166) target = $region20
        $region19: #{hierachical_forward_train.7} parent=11 // pred_region
          _
        $region20: #{hierachical_forward_train.7} parent=11 // pred_fallthru
          _
        // Predicated region
        $region21: #{hierachical_forward_train.7} parent=11 // pred_check
          %p169 = pneg %p75
        $region22: #{hierachical_forward_train.7} parent=11 // pred_check_branch
          %171 = sbr.rel (%p169) target = $region24
        $region23: #{hierachical_forward_train.7} parent=11 // pred_region
          _
        $region24: #{hierachical_forward_train.7} parent=11 // pred_fallthru
          _
      $region12: #{hierachical_forward_train.7} parent=5 // pred_fallthru
        _
      %p172 = scmp.lt.s32.totalorder %s12, 2
      // Predicated region
      $region25: #{hierachical_forward_train.7} parent=5 // pred_check
        %p173 = pneg %p172
      $region26: #{hierachical_forward_train.7} parent=5 // pred_check_branch
        %175 = sbr.rel (%p173) target = $region28
      $region27: #{hierachical_forward_train.7} parent=5 // pred_region
        // Predicated region
        $region29: #{hierachical_forward_train.7} parent=27 // pred_check
          %p176 = pneg %p95
        $region30: #{hierachical_forward_train.7} parent=27 // pred_check_branch
          %178 = sbr.rel (%p176) target = $region32
        $region31: #{hierachical_forward_train.7} parent=27 // pred_region
          %s179 = sand.u32 %s85, 1
          %s180 = sand.u32 %s85, 1
          %s181 = smul.addr %s180, 64
          %s182 = scalar_lea.vmem [#allocation5], %s181
          %s183 = smul.addr %s12, 4
          %s184 = scalar_lea.vmem %s3, %s183
          // Predicated region
          $region33: #{hierachical_forward_train.7} parent=31 // pred_check
            _
          $region34: #{hierachical_forward_train.7} parent=31 // pred_check_branch
            %186 = sbr.rel (0) target = $region36
          $region35: #{hierachical_forward_train.7} parent=31 // pred_region
            // Predicated region
            $region37: #{hierachical_forward_train.7} parent=35 // pred_check
              _
            $region38: #{hierachical_forward_train.7} parent=35 // pred_check_branch
              %188 = sbr.rel target = $region40
            $region39: #{hierachical_forward_train.7} parent=35 // pred_region
              // Predicated region
              $region52: #{hierachical_forward_train.7} parent=39 // pred_check
                _
              $region53: #{hierachical_forward_train.7} parent=39 // pred_check_branch
                %233 = sbr.rel (0) target = $region55
              $region54: #{hierachical_forward_train.7} parent=39 // pred_region
                loop: start=0, step=1, limit=1
                $region56: #{hierachical_forward_train.7} parent=54 // loop_pre_header
                  _
                $region57: #{hierachical_forward_train.7} parent=54 // loop_header
                  %s235 = sphi 0, %s239
                  %p236 = scmp.ge.s32.totalorder %s235, 1
                  %s240 = sphi %s184, %s184
                  %s241 = sphi %s182, %s182
                $region58: #{hierachical_forward_train.7} parent=54 // loop_header_branch
                  %238 = sbr.rel (%p236) target = $region62
                $region59: #{hierachical_forward_train.7} parent=54 // loop_body
                  _
                $region60: #{hierachical_forward_train.7} parent=54 // loop_footer
                  %s239 = sadd.s32 1, %s235
                $region61: #{hierachical_forward_train.7} parent=54 // loop_footer_branch
                  %234 = sbr.rel target = $region57
                $region62: #{hierachical_forward_train.7} parent=54 // loop_exit
                  _
                loop: start=0, step=1, limit=1
                $region63: #{hierachical_forward_train.7} parent=54 // loop_pre_header
                  _
                $region64: #{hierachical_forward_train.7} parent=54 // loop_header
                  %s244 = sphi 0, %s248
                  %p245 = scmp.ge.s32.totalorder %s244, 1
                  %s249 = sphi %s184, %s184
                  %s250 = sphi %s182, %s182
                $region65: #{hierachical_forward_train.7} parent=54 // loop_header_branch
                  %247 = sbr.rel (%p245) target = $region69
                $region66: #{hierachical_forward_train.7} parent=54 // loop_body
                  %v251 = vld [vmem:[%s249] sm:$0xf]
                  %252 = vst [vmem:[%s250] sm:$0xf] %v251
                  %v253 = vld [vmem:[%s249 + $0x8] sm:$0xf]
                  %254 = vst [vmem:[%s250 + $0x4] sm:$0xf] %v253
                  %v255 = vld [vmem:[%s249 + $0x10] sm:$0xf]
                  %256 = vst [vmem:[%s250 + $0x8] sm:$0xf] %v255
                  %v257 = vld [vmem:[%s249 + $0x18] sm:$0xf]
                  %258 = vst [vmem:[%s250 + $0xc] sm:$0xf] %v257
                  %v259 = vld [vmem:[%s249 + $0x20] sm:$0xf]
                  %260 = vst [vmem:[%s250 + $0x10] sm:$0xf] %v259
                  %v261 = vld [vmem:[%s249 + $0x28] sm:$0xf]
                  %262 = vst [vmem:[%s250 + $0x14] sm:$0xf] %v261
                  %v263 = vld [vmem:[%s249 + $0x30] sm:$0xf]
                  %264 = vst [vmem:[%s250 + $0x18] sm:$0xf] %v263
                  %v265 = vld [vmem:[%s249 + $0x38] sm:$0xf]
                  %266 = vst [vmem:[%s250 + $0x1c] sm:$0xf] %v265
                  %v267 = vld [vmem:[%s249 + $0x40] sm:$0xf]
                  %268 = vst [vmem:[%s250 + $0x20] sm:$0xf] %v267
                  %v269 = vld [vmem:[%s249 + $0x48] sm:$0xf]
                  %270 = vst [vmem:[%s250 + $0x24] sm:$0xf] %v269
                  %v271 = vld [vmem:[%s249 + $0x50] sm:$0xf]
                  %272 = vst [vmem:[%s250 + $0x28] sm:$0xf] %v271
                  %v273 = vld [vmem:[%s249 + $0x58] sm:$0xf]
                  %274 = vst [vmem:[%s250 + $0x2c] sm:$0xf] %v273
                  %v275 = vld [vmem:[%s249 + $0x60] sm:$0xf]
                  %276 = vst [vmem:[%s250 + $0x30] sm:$0xf] %v275
                  %v277 = vld [vmem:[%s249 + $0x68] sm:$0xf]
                  %278 = vst [vmem:[%s250 + $0x34] sm:$0xf] %v277
                  %v279 = vld [vmem:[%s249 + $0x70] sm:$0xf]
                  %280 = vst [vmem:[%s250 + $0x38] sm:$0xf] %v279
                  %v281 = vld [vmem:[%s249 + $0x78] sm:$0xf]
                  %282 = vst [vmem:[%s250 + $0x3c] sm:$0xf] %v281
                $region67: #{hierachical_forward_train.7} parent=54 // loop_footer
                  %s248 = sadd.s32 1, %s244
                $region68: #{hierachical_forward_train.7} parent=54 // loop_footer_branch
                  %243 = sbr.rel target = $region64
                $region69: #{hierachical_forward_train.7} parent=54 // loop_exit
                  _
              $region55: #{hierachical_forward_train.7} parent=39 // pred_fallthru
                _
            $region40: #{hierachical_forward_train.7} parent=35 // pred_fallthru
              _
            // Predicated region
            $region41: #{hierachical_forward_train.7} parent=35 // pred_check
              _
            $region42: #{hierachical_forward_train.7} parent=35 // pred_check_branch
              %190 = sbr.rel (0) target = $region44
            $region43: #{hierachical_forward_train.7} parent=35 // pred_region
              loop: start=0, step=1, limit=1
              $region45: #{hierachical_forward_train.7} parent=43 // loop_pre_header
                _
              $region46: #{hierachical_forward_train.7} parent=43 // loop_header
                %s193 = sphi 0, %s197
                %p194 = scmp.ge.s32.totalorder %s193, 1
                %s198 = sphi %s184, %s184
                %s199 = sphi %s182, %s182
              $region47: #{hierachical_forward_train.7} parent=43 // loop_header_branch
                %196 = sbr.rel (%p194) target = $region51
              $region48: #{hierachical_forward_train.7} parent=43 // loop_body
                %v200 = vld [vmem:[%s198] sm:$0xf]
                %201 = vst [vmem:[%s199] sm:$0xf] %v200
                %v202 = vld [vmem:[%s198 + $0x8] sm:$0xf]
                %203 = vst [vmem:[%s199 + $0x4] sm:$0xf] %v202
                %v204 = vld [vmem:[%s198 + $0x10] sm:$0xf]
                %205 = vst [vmem:[%s199 + $0x8] sm:$0xf] %v204
                %v206 = vld [vmem:[%s198 + $0x18] sm:$0xf]
                %207 = vst [vmem:[%s199 + $0xc] sm:$0xf] %v206
                %v208 = vld [vmem:[%s198 + $0x20] sm:$0xf]
                %209 = vst [vmem:[%s199 + $0x10] sm:$0xf] %v208
                %v210 = vld [vmem:[%s198 + $0x28] sm:$0xf]
                %211 = vst [vmem:[%s199 + $0x14] sm:$0xf] %v210
                %v212 = vld [vmem:[%s198 + $0x30] sm:$0xf]
                %213 = vst [vmem:[%s199 + $0x18] sm:$0xf] %v212
                %v214 = vld [vmem:[%s198 + $0x38] sm:$0xf]
                %215 = vst [vmem:[%s199 + $0x1c] sm:$0xf] %v214
                %v216 = vld [vmem:[%s198 + $0x40] sm:$0xf]
                %217 = vst [vmem:[%s199 + $0x20] sm:$0xf] %v216
                %v218 = vld [vmem:[%s198 + $0x48] sm:$0xf]
                %219 = vst [vmem:[%s199 + $0x24] sm:$0xf] %v218
                %v220 = vld [vmem:[%s198 + $0x50] sm:$0xf]
                %221 = vst [vmem:[%s199 + $0x28] sm:$0xf] %v220
                %v222 = vld [vmem:[%s198 + $0x58] sm:$0xf]
                %223 = vst [vmem:[%s199 + $0x2c] sm:$0xf] %v222
                %v224 = vld [vmem:[%s198 + $0x60] sm:$0xf]
                %225 = vst [vmem:[%s199 + $0x30] sm:$0xf] %v224
                %v226 = vld [vmem:[%s198 + $0x68] sm:$0xf]
                %227 = vst [vmem:[%s199 + $0x34] sm:$0xf] %v226
                %v228 = vld [vmem:[%s198 + $0x70] sm:$0xf]
                %229 = vst [vmem:[%s199 + $0x38] sm:$0xf] %v228
                %v230 = vld [vmem:[%s198 + $0x78] sm:$0xf]
                %231 = vst [vmem:[%s199 + $0x3c] sm:$0xf] %v230
              $region49: #{hierachical_forward_train.7} parent=43 // loop_footer
                %s197 = sadd.s32 1, %s193
              $region50: #{hierachical_forward_train.7} parent=43 // loop_footer_branch
                %192 = sbr.rel target = $region46
              $region51: #{hierachical_forward_train.7} parent=43 // loop_exit
                _
            $region44: #{hierachical_forward_train.7} parent=35 // pred_fallthru
              _
          $region36: #{hierachical_forward_train.7} parent=31 // pred_fallthru
            _
          %283 = vnop
        $region32: #{hierachical_forward_train.7} parent=27 // pred_fallthru
          _
        // Predicated region
        $region70: #{hierachical_forward_train.7} parent=27 // pred_check
          %p284 = pneg %p121
        $region71: #{hierachical_forward_train.7} parent=27 // pred_check_branch
          %286 = sbr.rel (%p284) target = $region73
        $region72: #{hierachical_forward_train.7} parent=27 // pred_region
          %p287 = scmp.lt.s32.totalorder %s12, 1
          %s288 = scalar_select %p287, %s12, 1
          %s289 = scalar_lea.vmem %s4, %s288
        $region73: #{hierachical_forward_train.7} parent=27 // pred_fallthru
          _
      $region28: #{hierachical_forward_train.7} parent=5 // pred_fallthru
        _
      %p290 = scmp.le.s32.totalorder 1, %s12
      %p291 = scmp.lt.s32.totalorder %s12, 3
      %p292 = pnand %p290, %p291
      %p293 = pneg %p292
      // Predicated region
      $region74: #{hierachical_forward_train.7} parent=5 // pred_check
        _
      $region75: #{hierachical_forward_train.7} parent=5 // pred_check_branch
        %295 = sbr.rel (%p292) target = $region77
      $region76: #{hierachical_forward_train.7} parent=5 // pred_region
        %s296 = ssub.s32 %s12, 1
        %s297 = sand.u32 %s88, 1
        %s298 = sand.u32 %s88, 1
        %s299 = smul.addr %s298, 64
        %s300 = scalar_lea.vmem [#allocation5], %s299
        // Predicated region
        $region78: #{hierachical_forward_train.7} parent=76 // pred_check
          %p301 = pneg %p101
        $region79: #{hierachical_forward_train.7} parent=76 // pred_check_branch
          %303 = sbr.rel (%p301) target = $region81
        $region80: #{hierachical_forward_train.7} parent=76 // pred_region
          _
        $region81: #{hierachical_forward_train.7} parent=76 // pred_fallthru
          _
        %p304 = pneg %p33
        %p305 = pneg %p30
        %p306 = pneg %p54
        %p307 = pneg %p51
        %p308 = pneg %p75
        %p309 = pneg %p72
        %s310 = sand.u32 %s88, 1
        %s311 = sand.u32 %s88, 1
        %s312 = smul.addr %s311, 64
        %s313 = scalar_lea.vmem [#allocation5], %s312
        %p314 = pneg %p101
        %p315 = pneg %p98
        %p316 = scmp.lt.s32.totalorder %s17, 1
        %s317 = scalar_select %p316, %s17, 1
        %s318 = scalar_lea.vmem %s4, %s317
        %p319 = pneg %p127
        %p320 = pneg %p124
        %p321 = pneg %p148
        %p322 = pneg %p145
        %p323 = scmp.lt.s32.totalorder %s17, 1
        %s324 = scalar_select %p323, %s17, 1
        %s325 = scalar_lea.vmem %s4, %s324
        %p327 = scmp.eq.s32.totalorder %s17, 0
        // Predicated region
        $region82: #{hierachical_forward_train.7} parent=76 // pred_check
          %p328 = pneg %p327
        $region83: #{hierachical_forward_train.7} parent=76 // pred_check_branch
          %330 = sbr.rel (%p328) target = $region85
        $region84: #{hierachical_forward_train.7} parent=76 // pred_region
          %vm331 = vcmask 7168
          %332 = vst.msk [vmem:[#allocation2] sm:$0xff] %vm331, -1e+30
          %333 = vst.msk [vmem:[#allocation2 + $0x8] sm:$0xff] %vm331, -1e+30
          %334 = vst.msk [vmem:[#allocation2 + $0x10] sm:$0xff] %vm331, -1e+30
          %335 = vst.msk [vmem:[#allocation2 + $0x18] sm:$0xff] %vm331, -1e+30
          %336 = vst.msk [vmem:[#allocation2 + $0x20] sm:$0xff] %vm331, -1e+30
          %337 = vst.msk [vmem:[#allocation2 + $0x28] sm:$0xff] %vm331, -1e+30
          %338 = vst.msk [vmem:[#allocation2 + $0x30] sm:$0xff] %vm331, -1e+30
          %339 = vst.msk [vmem:[#allocation2 + $0x38] sm:$0xff] %vm331, -1e+30
          %340 = vst.msk [vmem:[#allocation2 + $0x40] sm:$0xff] %vm331, -1e+30
          %341 = vst.msk [vmem:[#allocation2 + $0x48] sm:$0xff] %vm331, -1e+30
          %342 = vst.msk [vmem:[#allocation3] sm:$0xff] %vm331, 0.0
          %343 = vst.msk [vmem:[#allocation3 + $0x8] sm:$0xff] %vm331, 0.0
          %344 = vst.msk [vmem:[#allocation3 + $0x10] sm:$0xff] %vm331, 0.0
          %345 = vst.msk [vmem:[#allocation3 + $0x18] sm:$0xff] %vm331, 0.0
          %346 = vst.msk [vmem:[#allocation3 + $0x20] sm:$0xff] %vm331, 0.0
          %347 = vst.msk [vmem:[#allocation3 + $0x28] sm:$0xff] %vm331, 0.0
          %348 = vst.msk [vmem:[#allocation3 + $0x30] sm:$0xff] %vm331, 0.0
          %349 = vst.msk [vmem:[#allocation3 + $0x38] sm:$0xff] %vm331, 0.0
          %350 = vst.msk [vmem:[#allocation3 + $0x40] sm:$0xff] %vm331, 0.0
          %351 = vst.msk [vmem:[#allocation3 + $0x48] sm:$0xff] %vm331, 0.0
          %352 = vst.msk [vmem:[#allocation4] sm:$0xff] %vm331, 0.0
          %353 = vst.msk [vmem:[#allocation4 + $0x8] sm:$0xff] %vm331, 0.0
          %354 = vst.msk [vmem:[#allocation4 + $0x10] sm:$0xff] %vm331, 0.0
          %355 = vst.msk [vmem:[#allocation4 + $0x18] sm:$0xff] %vm331, 0.0
          %356 = vst.msk [vmem:[#allocation4 + $0x20] sm:$0xff] %vm331, 0.0
          %357 = vst.msk [vmem:[#allocation4 + $0x28] sm:$0xff] %vm331, 0.0
          %358 = vst.msk [vmem:[#allocation4 + $0x30] sm:$0xff] %vm331, 0.0
          %359 = vst.msk [vmem:[#allocation4 + $0x38] sm:$0xff] %vm331, 0.0
          %360 = vst.msk [vmem:[#allocation4 + $0x40] sm:$0xff] %vm331, 0.0
          %361 = vst.msk [vmem:[#allocation4 + $0x48] sm:$0xff] %vm331, 0.0
        $region85: #{hierachical_forward_train.7} parent=76 // pred_fallthru
          _
        %v362 = vld [vmem:[%s0] sm:$0xf]
        %v363 = vld [vmem:[%s0 + $0x4] sm:$0xf]
        %v364 = vld [vmem:[%s0 + $0x8] sm:$0xf]
        %v365 = vld [vmem:[%s0 + $0xc] sm:$0xf]
        %v366 = vld [vmem:[%s0 + $0x10] sm:$0xf]
        %v367 = vld [vmem:[%s0 + $0x14] sm:$0xf]
        %v368 = vld [vmem:[%s0 + $0x18] sm:$0xf]
        %v369 = vld [vmem:[%s0 + $0x1c] sm:$0xf]
        %v370 = vld [vmem:[%s0 + $0x20] sm:$0xf]
        %v371 = vld [vmem:[%s0 + $0x24] sm:$0xf]
        %v372 = vld [vmem:[%s300] sm:$0xf]
        %v373 = vld [vmem:[%s300 + $0x4] sm:$0xf]
        %v374 = vld [vmem:[%s300 + $0x8] sm:$0xf]
        %v375 = vld [vmem:[%s300 + $0xc] sm:$0xf]
        %v376 = vld [vmem:[%s300 + $0x10] sm:$0xf]
        %v377 = vld [vmem:[%s300 + $0x14] sm:$0xf]
        %v378 = vld [vmem:[%s300 + $0x18] sm:$0xf]
        %v379 = vld [vmem:[%s300 + $0x1c] sm:$0xf]
        %v380 = vld [vmem:[%s300 + $0x20] sm:$0xf]
        %v381 = vld [vmem:[%s300 + $0x24] sm:$0xf]
        %v382 = vld [vmem:[%s300 + $0x28] sm:$0xf]
        %v383 = vld [vmem:[%s300 + $0x2c] sm:$0xf]
        %v384 = vld [vmem:[%s300 + $0x30] sm:$0xf]
        %v385 = vld [vmem:[%s300 + $0x34] sm:$0xf]
        %v386 = vld [vmem:[%s300 + $0x38] sm:$0xf]
        %v387 = vld [vmem:[%s300 + $0x3c] sm:$0xf]
        %v388 = vld [vmem:[%s325] sm:$0x1]
        %v390 = vlaneseq
        %v391 = vshrl.u32 %v390, 7
        %v392 = vsub.s32 0, %v391
        %v393 = vrot.slane %v388, %v392
        %v405 = vunpack.c.l.b16 %v362
        %v406 = vunpack.c.l.b16 %v363
        %v407 = vunpack.c.l.b16 %v364
        %v408 = vunpack.c.l.b16 %v365
        %v409 = vunpack.c.l.b16 %v366
        %v410 = vunpack.c.l.b16 %v367
        %v411 = vunpack.c.l.b16 %v368
        %v412 = vunpack.c.l.b16 %v369
        %v413 = vunpack.c.l.b16 %v370
        %v414 = vunpack.c.l.b16 %v371
        %v415 = vpack.c.b16 %v406, %v405
        %v416 = vpack.c.b16 %v408, %v407
        %v417 = vpack.c.b16 %v410, %v409
        %v418 = vpack.c.b16 %v412, %v411
        %v419 = vpack.c.b16 %v414, %v413
        %v441 = vunpack.c.l.b16 %v372
        %v442 = vunpack.c.l.b16 %v373
        %v443 = vunpack.c.l.b16 %v374
        %v444 = vunpack.c.l.b16 %v375
        %v445 = vunpack.c.l.b16 %v376
        %v446 = vunpack.c.l.b16 %v377
        %v447 = vunpack.c.l.b16 %v378
        %v448 = vunpack.c.l.b16 %v379
        %v449 = vunpack.c.l.b16 %v380
        %v450 = vunpack.c.l.b16 %v381
        %v451 = vunpack.c.l.b16 %v382
        %v452 = vunpack.c.l.b16 %v383
        %v453 = vunpack.c.l.b16 %v384
        %v454 = vunpack.c.l.b16 %v385
        %v455 = vunpack.c.l.b16 %v386
        %v456 = vunpack.c.l.b16 %v387
        %v457 = vpack.c.b16 %v442, %v441
        %v458 = vpack.c.b16 %v444, %v443
        %v459 = vpack.c.b16 %v446, %v445
        %v460 = vpack.c.b16 %v448, %v447
        %v461 = vpack.c.b16 %v450, %v449
        %v462 = vpack.c.b16 %v452, %v451
        %v463 = vpack.c.b16 %v454, %v453
        %v464 = vpack.c.b16 %v456, %v455
        %473 = vmatprep.subr.bf16.mxu0 0
        %474 = vmatpush1.bf16.msra.mxu0 %v457
        %475 = vmatprep.subr.bf16.mxu0 0
        %476 = vmatpush1.bf16.msra.mxu0 %v458
        %477 = vmatprep.subr.bf16.mxu0 0
        %478 = vmatpush1.bf16.msra.mxu0 %v459
        %479 = vmatprep.subr.bf16.mxu0 0
        %480 = vmatpush1.bf16.msra.mxu0 %v460
        %481 = vmatprep.subr.bf16.mxu0 0
        %482 = vmatpush1.bf16.msra.mxu0 %v461
        %483 = vmatprep.subr.bf16.mxu0 0
        %484 = vmatpush1.bf16.msra.mxu0 %v462
        %485 = vmatprep.subr.bf16.mxu0 0
        %486 = vmatpush1.bf16.msra.mxu0 %v463
        %487 = vmatprep.subr.bf16.mxu0 0
        %488 = vmatpush1.bf16.msra.mxu0 %v464
        %489 = vmatprep.subr.bf16.mxu0 0
        %490 = vmatpush1.bf16.msra.mxu0 0
        %491 = vmatprep.subr.bf16.mxu0 0
        %492 = vmatpush1.bf16.msra.mxu0 0
        %493 = vmatprep.subr.bf16.mxu0 0
        %494 = vmatpush1.bf16.msra.mxu0 0
        %495 = vmatprep.subr.bf16.mxu0 0
        %496 = vmatpush1.bf16.msra.mxu0 0
        %497 = vmatprep.subr.bf16.mxu0 0
        %498 = vmatpush1.bf16.msra.mxu0 0
        %499 = vmatprep.subr.bf16.mxu0 0
        %500 = vmatpush1.bf16.msra.mxu0 0
        %501 = vmatprep.subr.bf16.mxu0 0
        %502 = vmatpush1.bf16.msra.mxu0 0
        %503 = vmatprep.subr.bf16.mxu0 0
        %504 = vmatpush1.bf16.msra.mxu0 0
        %505 = vmatprep.mubr.bf16.mxu0 0
        %506 = vmatmul.mubr.bf16.gmra.mrb[0].mxu0 %v415
        %v507 = vpop.f32.mrb[0].mxu0
        %v508 = vadd.f32 %v393, %v507
        %v509 = vpop.f32.mrb[0].mxu0
        %v510 = vpop.f32.mrb[0].mxu0
        %v511 = vadd.f32 %v393, %v510
        %v512 = vpop.f32.mrb[0].mxu0
        %513 = vmatprep.mubr.bf16.mxu0 0
        %514 = vmatmul.mubr.bf16.gmra.mrb[0].mxu0 %v416
        %v515 = vpop.f32.mrb[0].mxu0
        %v516 = vadd.f32 %v393, %v515
        %v517 = vpop.f32.mrb[0].mxu0
        %v518 = vpop.f32.mrb[0].mxu0
        %v519 = vadd.f32 %v393, %v518
        %v520 = vpop.f32.mrb[0].mxu0
        %521 = vmatprep.mubr.bf16.mxu0 0
        %522 = vmatmul.mubr.bf16.gmra.mrb[0].mxu0 %v417
        %v523 = vpop.f32.mrb[0].mxu0
        %v524 = vadd.f32 %v393, %v523
        %v525 = vpop.f32.mrb[0].mxu0
        %v526 = vpop.f32.mrb[0].mxu0
        %v527 = vadd.f32 %v393, %v526
        %v528 = vpop.f32.mrb[0].mxu0
        %529 = vmatprep.mubr.bf16.mxu0 0
        %530 = vmatmul.mubr.bf16.gmra.mrb[0].mxu0 %v418
        %v531 = vpop.f32.mrb[0].mxu0
        %v532 = vadd.f32 %v393, %v531
        %v533 = vpop.f32.mrb[0].mxu0
        %v534 = vpop.f32.mrb[0].mxu0
        %v535 = vadd.f32 %v393, %v534
        %v536 = vpop.f32.mrb[0].mxu0
        %537 = vmatprep.mubr.bf16.mxu0 0
        %538 = vmatmul.mubr.bf16.gmra.mrb[0].mxu0 %v419
        %v539 = vpop.f32.mrb[0].mxu0
        %v540 = vadd.f32 %v393, %v539
        %v541 = vpop.f32.mrb[0].mxu0
        %v542 = vpop.f32.mrb[0].mxu0
        %v543 = vadd.f32 %v393, %v542
        %v544 = vpop.f32.mrb[0].mxu0
        %545 = vdwg.mxu0
        %v546 = vlaneseq
        %v547 = vand.u32 %v546, 127
        %s548 = smul.u32 %s17, 128
        %v549 = vstv %s548
        %v550 = vadd.s32 %v547, %v549
        %v551 = vld [vmem:[#allocation4] sm:$0xff]
        %v552 = vld [vmem:[#allocation4 + $0x8] sm:$0xff]
        %v553 = vld [vmem:[#allocation4 + $0x10] sm:$0xff]
        %v554 = vld [vmem:[#allocation4 + $0x18] sm:$0xff]
        %v555 = vld [vmem:[#allocation4 + $0x20] sm:$0xff]
        %v556 = vld [vmem:[#allocation4 + $0x28] sm:$0xff]
        %v557 = vld [vmem:[#allocation4 + $0x30] sm:$0xff]
        %v558 = vld [vmem:[#allocation4 + $0x38] sm:$0xff]
        %v559 = vld [vmem:[#allocation4 + $0x40] sm:$0xff]
        %v560 = vld [vmem:[#allocation4 + $0x48] sm:$0xff]
        %v561 = vld [vmem:[%s1] sm:$0xff]
        %v562 = vld [vmem:[%s1 + $0x8] sm:$0xff]
        %v563 = vld [vmem:[%s1 + $0x10] sm:$0xff]
        %v564 = vld [vmem:[%s1 + $0x18] sm:$0xff]
        %v565 = vld [vmem:[%s1 + $0x20] sm:$0xff]
        %v566 = vld [vmem:[%s1 + $0x28] sm:$0xff]
        %v567 = vld [vmem:[%s1 + $0x30] sm:$0xff]
        %v568 = vld [vmem:[%s1 + $0x38] sm:$0xff]
        %v569 = vld [vmem:[%s1 + $0x40] sm:$0xff]
        %v570 = vld [vmem:[%s1 + $0x48] sm:$0xff]
        %571 = vset.pattern.permute.xlu0 0
        %572 = vperm.xlu0 %571, %v561
        %v573 = vpop.permute.xlu0 %572
        %574 = vset.pattern.permute.xlu0 0
        %575 = vperm.xlu0 %574, %v562
        %v576 = vpop.permute.xlu0 %575
        %577 = vset.pattern.permute.xlu0 0
        %578 = vperm.xlu0 %577, %v563
        %v579 = vpop.permute.xlu0 %578
        %580 = vset.pattern.permute.xlu0 0
        %581 = vperm.xlu0 %580, %v564
        %v582 = vpop.permute.xlu0 %581
        %583 = vset.pattern.permute.xlu0 0
        %584 = vperm.xlu0 %583, %v565
        %v585 = vpop.permute.xlu0 %584
        %586 = vset.pattern.permute.xlu0 0
        %587 = vperm.xlu0 %586, %v566
        %v588 = vpop.permute.xlu0 %587
        %589 = vset.pattern.permute.xlu0 0
        %590 = vperm.xlu0 %589, %v567
        %v591 = vpop.permute.xlu0 %590
        %592 = vset.pattern.permute.xlu0 0
        %593 = vperm.xlu0 %592, %v568
        %v594 = vpop.permute.xlu0 %593
        %595 = vset.pattern.permute.xlu0 0
        %596 = vperm.xlu0 %595, %v569
        %v597 = vpop.permute.xlu0 %596
        %598 = vset.pattern.permute.xlu0 0
        %599 = vperm.xlu0 %598, %v570
        %v600 = vpop.permute.xlu0 %599
        %vm601 = vcmp.eq.s32.totalorder %v550, %v573
        %vm602 = vcmp.eq.s32.totalorder %v550, %v576
        %vm603 = vcmp.eq.s32.totalorder %v550, %v579
        %vm604 = vcmp.eq.s32.totalorder %v550, %v582
        %vm605 = vcmp.eq.s32.totalorder %v550, %v585
        %vm606 = vcmp.eq.s32.totalorder %v550, %v588
        %vm607 = vcmp.eq.s32.totalorder %v550, %v591
        %vm608 = vcmp.eq.s32.totalorder %v550, %v594
        %vm609 = vcmp.eq.s32.totalorder %v550, %v597
        %vm610 = vcmp.eq.s32.totalorder %v550, %v600
        %v611 = vsel %vm601, %v508, 0.0
        %v612 = vsel %vm602, %v511, 0.0
        %v613 = vsel %vm603, %v516, 0.0
        %v614 = vsel %vm604, %v519, 0.0
        %v615 = vsel %vm605, %v524, 0.0
        %v616 = vsel %vm606, %v527, 0.0
        %v617 = vsel %vm607, %v532, 0.0
        %v618 = vsel %vm608, %v535, 0.0
        %v619 = vsel %vm609, %v540, 0.0
        %v620 = vsel %vm610, %v543, 0.0
        %621 = vadd.xlane.f32.xlu0 %v611
        %v622 = vpop.xlane.xlu0 %621
        %623 = vadd.xlane.f32.xlu0 %v612
        %v624 = vpop.xlane.xlu0 %623
        %625 = vadd.xlane.f32.xlu0 %v613
        %v626 = vpop.xlane.xlu0 %625
        %627 = vadd.xlane.f32.xlu0 %v614
        %v628 = vpop.xlane.xlu0 %627
        %629 = vadd.xlane.f32.xlu0 %v615
        %v630 = vpop.xlane.xlu0 %629
        %631 = vadd.xlane.f32.xlu0 %v616
        %v632 = vpop.xlane.xlu0 %631
        %633 = vadd.xlane.f32.xlu0 %v617
        %v634 = vpop.xlane.xlu0 %633
        %635 = vadd.xlane.f32.xlu0 %v618
        %v636 = vpop.xlane.xlu0 %635
        %637 = vadd.xlane.f32.xlu0 %v619
        %v638 = vpop.xlane.xlu0 %637
        %639 = vadd.xlane.f32.xlu0 %v620
        %v640 = vpop.xlane.xlu0 %639
        %v641 = vadd.f32 %v551, %v622
        %v642 = vadd.f32 %v552, %v624
        %v643 = vadd.f32 %v553, %v626
        %v644 = vadd.f32 %v554, %v628
        %v645 = vadd.f32 %v555, %v630
        %v646 = vadd.f32 %v556, %v632
        %v647 = vadd.f32 %v557, %v634
        %v648 = vadd.f32 %v558, %v636
        %v649 = vadd.f32 %v559, %v638
        %v650 = vadd.f32 %v560, %v640
        %vm651 = vcmask 7168
        %652 = vst.msk [vmem:[#allocation4] sm:$0xff] %vm651, %v641
        %653 = vst.msk [vmem:[#allocation4 + $0x8] sm:$0xff] %vm651, %v642
        %654 = vst.msk [vmem:[#allocation4 + $0x10] sm:$0xff] %vm651, %v643
        %655 = vst.msk [vmem:[#allocation4 + $0x18] sm:$0xff] %vm651, %v644
        %656 = vst.msk [vmem:[#allocation4 + $0x20] sm:$0xff] %vm651, %v645
        %657 = vst.msk [vmem:[#allocation4 + $0x28] sm:$0xff] %vm651, %v646
        %658 = vst.msk [vmem:[#allocation4 + $0x30] sm:$0xff] %vm651, %v647
        %659 = vst.msk [vmem:[#allocation4 + $0x38] sm:$0xff] %vm651, %v648
        %660 = vst.msk [vmem:[#allocation4 + $0x40] sm:$0xff] %vm651, %v649
        %661 = vst.msk [vmem:[#allocation4 + $0x48] sm:$0xff] %vm651, %v650
        %662 = vmax.xlane.f32.xlu0 %v508
        %v663 = vpop.xlane.xlu0 %662
        %664 = vmax.xlane.f32.xlu0 %v511
        %v665 = vpop.xlane.xlu0 %664
        %666 = vmax.xlane.f32.xlu0 %v516
        %v667 = vpop.xlane.xlu0 %666
        %668 = vmax.xlane.f32.xlu0 %v519
        %v669 = vpop.xlane.xlu0 %668
        %670 = vmax.xlane.f32.xlu0 %v524
        %v671 = vpop.xlane.xlu0 %670
        %672 = vmax.xlane.f32.xlu0 %v527
        %v673 = vpop.xlane.xlu0 %672
        %674 = vmax.xlane.f32.xlu0 %v532
        %v675 = vpop.xlane.xlu0 %674
        %676 = vmax.xlane.f32.xlu0 %v535
        %v677 = vpop.xlane.xlu0 %676
        %678 = vmax.xlane.f32.xlu0 %v540
        %v679 = vpop.xlane.xlu0 %678
        %680 = vmax.xlane.f32.xlu0 %v543
        %v681 = vpop.xlane.xlu0 %680
        %v682 = vld [vmem:[#allocation2] sm:$0xff]
        %v683 = vld [vmem:[#allocation2 + $0x8] sm:$0xff]
        %v684 = vld [vmem:[#allocation2 + $0x10] sm:$0xff]
        %v685 = vld [vmem:[#allocation2 + $0x18] sm:$0xff]
        %v686 = vld [vmem:[#allocation2 + $0x20] sm:$0xff]
        %v687 = vld [vmem:[#allocation2 + $0x28] sm:$0xff]
        %v688 = vld [vmem:[#allocation2 + $0x30] sm:$0xff]
        %v689 = vld [vmem:[#allocation2 + $0x38] sm:$0xff]
        %v690 = vld [vmem:[#allocation2 + $0x40] sm:$0xff]
        %v691 = vld [vmem:[#allocation2 + $0x48] sm:$0xff]
        %v692 = vmax.f32 %v682, %v663
        %v693 = vmax.f32 %v683, %v665
        %v694 = vmax.f32 %v684, %v667
        %v695 = vmax.f32 %v685, %v669
        %v696 = vmax.f32 %v686, %v671
        %v697 = vmax.f32 %v687, %v673
        %v698 = vmax.f32 %v688, %v675
        %v699 = vmax.f32 %v689, %v677
        %v700 = vmax.f32 %v690, %v679
        %v701 = vmax.f32 %v691, %v681
        %v702 = vld [vmem:[#allocation3] sm:$0xff]
        %v703 = vld [vmem:[#allocation3 + $0x8] sm:$0xff]
        %v704 = vld [vmem:[#allocation3 + $0x10] sm:$0xff]
        %v705 = vld [vmem:[#allocation3 + $0x18] sm:$0xff]
        %v706 = vld [vmem:[#allocation3 + $0x20] sm:$0xff]
        %v707 = vld [vmem:[#allocation3 + $0x28] sm:$0xff]
        %v708 = vld [vmem:[#allocation3 + $0x30] sm:$0xff]
        %v709 = vld [vmem:[#allocation3 + $0x38] sm:$0xff]
        %v710 = vld [vmem:[#allocation3 + $0x40] sm:$0xff]
        %v711 = vld [vmem:[#allocation3 + $0x48] sm:$0xff]
        %v712 = vsub.f32 %v682, %v692
        %v713 = vsub.f32 %v683, %v693
        %v714 = vsub.f32 %v684, %v694
        %v715 = vsub.f32 %v685, %v695
        %v716 = vsub.f32 %v686, %v696
        %v717 = vsub.f32 %v687, %v697
        %v718 = vsub.f32 %v688, %v698
        %v719 = vsub.f32 %v689, %v699
        %v720 = vsub.f32 %v690, %v700
        %v721 = vsub.f32 %v691, %v701
        %v722 = vmul.f32 %v712, 1.442695
        %v723 = vpow.pop %v722
        %v724 = vmul.f32 %v713, 1.442695
        %v725 = vpow.pop %v724
        %v726 = vmul.f32 %v714, 1.442695
        %v727 = vpow.pop %v726
        %v728 = vmul.f32 %v715, 1.442695
        %v729 = vpow.pop %v728
        %v730 = vmul.f32 %v716, 1.442695
        %v731 = vpow.pop %v730
        %v732 = vmul.f32 %v717, 1.442695
        %v733 = vpow.pop %v732
        %v734 = vmul.f32 %v718, 1.442695
        %v735 = vpow.pop %v734
        %v736 = vmul.f32 %v719, 1.442695
        %v737 = vpow.pop %v736
        %v738 = vmul.f32 %v720, 1.442695
        %v739 = vpow.pop %v738
        %v740 = vmul.f32 %v721, 1.442695
        %v741 = vpow.pop %v740
        %v742 = vmul.f32 %v702, %v723
        %v743 = vmul.f32 %v703, %v725
        %v744 = vmul.f32 %v704, %v727
        %v745 = vmul.f32 %v705, %v729
        %v746 = vmul.f32 %v706, %v731
        %v747 = vmul.f32 %v707, %v733
        %v748 = vmul.f32 %v708, %v735
        %v749 = vmul.f32 %v709, %v737
        %v750 = vmul.f32 %v710, %v739
        %v751 = vmul.f32 %v711, %v741
        %753 = vset.pattern.permute.xlu0 0
        %754 = vperm.xlu0 %753, %v692
        %v755 = vpop.permute.xlu0 %754
        %758 = vset.pattern.permute.xlu0 0
        %759 = vperm.xlu0 %758, %v693
        %v760 = vpop.permute.xlu0 %759
        %763 = vset.pattern.permute.xlu0 0
        %764 = vperm.xlu0 %763, %v694
        %v765 = vpop.permute.xlu0 %764
        %768 = vset.pattern.permute.xlu0 0
        %769 = vperm.xlu0 %768, %v695
        %v770 = vpop.permute.xlu0 %769
        %773 = vset.pattern.permute.xlu0 0
        %774 = vperm.xlu0 %773, %v696
        %v775 = vpop.permute.xlu0 %774
        %778 = vset.pattern.permute.xlu0 0
        %779 = vperm.xlu0 %778, %v697
        %v780 = vpop.permute.xlu0 %779
        %783 = vset.pattern.permute.xlu0 0
        %784 = vperm.xlu0 %783, %v698
        %v785 = vpop.permute.xlu0 %784
        %788 = vset.pattern.permute.xlu0 0
        %789 = vperm.xlu0 %788, %v699
        %v790 = vpop.permute.xlu0 %789
        %793 = vset.pattern.permute.xlu0 0
        %794 = vperm.xlu0 %793, %v700
        %v795 = vpop.permute.xlu0 %794
        %798 = vset.pattern.permute.xlu0 0
        %799 = vperm.xlu0 %798, %v701
        %v800 = vpop.permute.xlu0 %799
        %v802 = vsub.f32 %v508, %v755
        %v803 = vsub.f32 %v511, %v760
        %v804 = vsub.f32 %v516, %v765
        %v805 = vsub.f32 %v519, %v770
        %v806 = vsub.f32 %v524, %v775
        %v807 = vsub.f32 %v527, %v780
        %v808 = vsub.f32 %v532, %v785
        %v809 = vsub.f32 %v535, %v790
        %v810 = vsub.f32 %v540, %v795
        %v811 = vsub.f32 %v543, %v800
        %v812 = vmul.f32 %v802, 1.442695
        %v813 = vpow.pop %v812
        %v814 = vmul.f32 %v803, 1.442695
        %v815 = vpow.pop %v814
        %v816 = vmul.f32 %v804, 1.442695
        %v817 = vpow.pop %v816
        %v818 = vmul.f32 %v805, 1.442695
        %v819 = vpow.pop %v818
        %v820 = vmul.f32 %v806, 1.442695
        %v821 = vpow.pop %v820
        %v822 = vmul.f32 %v807, 1.442695
        %v823 = vpow.pop %v822
        %v824 = vmul.f32 %v808, 1.442695
        %v825 = vpow.pop %v824
        %v826 = vmul.f32 %v809, 1.442695
        %v827 = vpow.pop %v826
        %v828 = vmul.f32 %v810, 1.442695
        %v829 = vpow.pop %v828
        %v830 = vmul.f32 %v811, 1.442695
        %v831 = vpow.pop %v830
        %832 = vadd.xlane.f32.xlu0 %v813
        %v833 = vpop.xlane.xlu0 %832
        %834 = vadd.xlane.f32.xlu0 %v815
        %v835 = vpop.xlane.xlu0 %834
        %836 = vadd.xlane.f32.xlu0 %v817
        %v837 = vpop.xlane.xlu0 %836
        %838 = vadd.xlane.f32.xlu0 %v819
        %v839 = vpop.xlane.xlu0 %838
        %840 = vadd.xlane.f32.xlu0 %v821
        %v841 = vpop.xlane.xlu0 %840
        %842 = vadd.xlane.f32.xlu0 %v823
        %v843 = vpop.xlane.xlu0 %842
        %844 = vadd.xlane.f32.xlu0 %v825
        %v845 = vpop.xlane.xlu0 %844
        %846 = vadd.xlane.f32.xlu0 %v827
        %v847 = vpop.xlane.xlu0 %846
        %848 = vadd.xlane.f32.xlu0 %v829
        %v849 = vpop.xlane.xlu0 %848
        %850 = vadd.xlane.f32.xlu0 %v831
        %v851 = vpop.xlane.xlu0 %850
        %v852 = vadd.f32 %v742, %v833
        %v853 = vadd.f32 %v743, %v835
        %v854 = vadd.f32 %v744, %v837
        %v855 = vadd.f32 %v745, %v839
        %v856 = vadd.f32 %v746, %v841
        %v857 = vadd.f32 %v747, %v843
        %v858 = vadd.f32 %v748, %v845
        %v859 = vadd.f32 %v749, %v847
        %v860 = vadd.f32 %v750, %v849
        %v861 = vadd.f32 %v751, %v851
        %862 = vst.msk [vmem:[#allocation3] sm:$0xff] %vm651, %v852
        %863 = vst.msk [vmem:[#allocation3 + $0x8] sm:$0xff] %vm651, %v853
        %864 = vst.msk [vmem:[#allocation3 + $0x10] sm:$0xff] %vm651, %v854
        %865 = vst.msk [vmem:[#allocation3 + $0x18] sm:$0xff] %vm651, %v855
        %866 = vst.msk [vmem:[#allocation3 + $0x20] sm:$0xff] %vm651, %v856
        %867 = vst.msk [vmem:[#allocation3 + $0x28] sm:$0xff] %vm651, %v857
        %868 = vst.msk [vmem:[#allocation3 + $0x30] sm:$0xff] %vm651, %v858
        %869 = vst.msk [vmem:[#allocation3 + $0x38] sm:$0xff] %vm651, %v859
        %870 = vst.msk [vmem:[#allocation3 + $0x40] sm:$0xff] %vm651, %v860
        %871 = vst.msk [vmem:[#allocation3 + $0x48] sm:$0xff] %vm651, %v861
        %872 = vst.msk [vmem:[#allocation2] sm:$0xff] %vm651, %v692
        %873 = vst.msk [vmem:[#allocation2 + $0x8] sm:$0xff] %vm651, %v693
        %874 = vst.msk [vmem:[#allocation2 + $0x10] sm:$0xff] %vm651, %v694
        %875 = vst.msk [vmem:[#allocation2 + $0x18] sm:$0xff] %vm651, %v695
        %876 = vst.msk [vmem:[#allocation2 + $0x20] sm:$0xff] %vm651, %v696
        %877 = vst.msk [vmem:[#allocation2 + $0x28] sm:$0xff] %vm651, %v697
        %878 = vst.msk [vmem:[#allocation2 + $0x30] sm:$0xff] %vm651, %v698
        %879 = vst.msk [vmem:[#allocation2 + $0x38] sm:$0xff] %vm651, %v699
        %880 = vst.msk [vmem:[#allocation2 + $0x40] sm:$0xff] %vm651, %v700
        %881 = vst.msk [vmem:[#allocation2 + $0x48] sm:$0xff] %vm651, %v701
        %p882 = scmp.eq.s32.totalorder %s17, 1
        // Predicated region
        $region86: #{hierachical_forward_train.7} parent=76 // pred_check
          %p883 = pneg %p882
        $region87: #{hierachical_forward_train.7} parent=76 // pred_check_branch
          %885 = sbr.rel (%p883) target = $region89
        $region88: #{hierachical_forward_train.7} parent=76 // pred_region
          %v886 = vld [vmem:[#allocation2] sm:$0xff]
          %v887 = vld [vmem:[#allocation2 + $0x8] sm:$0xff]
          %v888 = vld [vmem:[#allocation2 + $0x10] sm:$0xff]
          %v889 = vld [vmem:[#allocation2 + $0x18] sm:$0xff]
          %v890 = vld [vmem:[#allocation2 + $0x20] sm:$0xff]
          %v891 = vld [vmem:[#allocation2 + $0x28] sm:$0xff]
          %v892 = vld [vmem:[#allocation2 + $0x30] sm:$0xff]
          %v893 = vld [vmem:[#allocation2 + $0x38] sm:$0xff]
          %v894 = vld [vmem:[#allocation2 + $0x40] sm:$0xff]
          %v895 = vld [vmem:[#allocation2 + $0x48] sm:$0xff]
          %v896 = vld [vmem:[#allocation3] sm:$0xff]
          %v897 = vld [vmem:[#allocation3 + $0x8] sm:$0xff]
          %v898 = vld [vmem:[#allocation3 + $0x10] sm:$0xff]
          %v899 = vld [vmem:[#allocation3 + $0x18] sm:$0xff]
          %v900 = vld [vmem:[#allocation3 + $0x20] sm:$0xff]
          %v901 = vld [vmem:[#allocation3 + $0x28] sm:$0xff]
          %v902 = vld [vmem:[#allocation3 + $0x30] sm:$0xff]
          %v903 = vld [vmem:[#allocation3 + $0x38] sm:$0xff]
          %v904 = vld [vmem:[#allocation3 + $0x40] sm:$0xff]
          %v905 = vld [vmem:[#allocation3 + $0x48] sm:$0xff]
          %v906 = vlog2.pop %v896
          %v907 = vmul.f32 %v906, 0.6931472
          %v908 = vlog2.pop %v897
          %v909 = vmul.f32 %v908, 0.6931472
          %v910 = vlog2.pop %v898
          %v911 = vmul.f32 %v910, 0.6931472
          %v912 = vlog2.pop %v899
          %v913 = vmul.f32 %v912, 0.6931472
          %v914 = vlog2.pop %v900
          %v915 = vmul.f32 %v914, 0.6931472
          %v916 = vlog2.pop %v901
          %v917 = vmul.f32 %v916, 0.6931472
          %v918 = vlog2.pop %v902
          %v919 = vmul.f32 %v918, 0.6931472
          %v920 = vlog2.pop %v903
          %v921 = vmul.f32 %v920, 0.6931472
          %v922 = vlog2.pop %v904
          %v923 = vmul.f32 %v922, 0.6931472
          %v924 = vlog2.pop %v905
          %v925 = vmul.f32 %v924, 0.6931472
          %v926 = vadd.f32 %v886, %v907
          %v927 = vadd.f32 %v887, %v909
          %v928 = vadd.f32 %v888, %v911
          %v929 = vadd.f32 %v889, %v913
          %v930 = vadd.f32 %v890, %v915
          %v931 = vadd.f32 %v891, %v917
          %v932 = vadd.f32 %v892, %v919
          %v933 = vadd.f32 %v893, %v921
          %v934 = vadd.f32 %v894, %v923
          %v935 = vadd.f32 %v895, %v925
          %v936 = vld [vmem:[#allocation4] sm:$0xff]
          %v937 = vld [vmem:[#allocation4 + $0x8] sm:$0xff]
          %v938 = vld [vmem:[#allocation4 + $0x10] sm:$0xff]
          %v939 = vld [vmem:[#allocation4 + $0x18] sm:$0xff]
          %v940 = vld [vmem:[#allocation4 + $0x20] sm:$0xff]
          %v941 = vld [vmem:[#allocation4 + $0x28] sm:$0xff]
          %v942 = vld [vmem:[#allocation4 + $0x30] sm:$0xff]
          %v943 = vld [vmem:[#allocation4 + $0x38] sm:$0xff]
          %v944 = vld [vmem:[#allocation4 + $0x40] sm:$0xff]
          %v945 = vld [vmem:[#allocation4 + $0x48] sm:$0xff]
          %v946 = vsub.f32 %v926, %v936
          %v947 = vsub.f32 %v927, %v937
          %v948 = vsub.f32 %v928, %v938
          %v949 = vsub.f32 %v929, %v939
          %v950 = vsub.f32 %v930, %v940
          %v951 = vsub.f32 %v931, %v941
          %v952 = vsub.f32 %v932, %v942
          %v953 = vsub.f32 %v933, %v943
          %v954 = vsub.f32 %v934, %v944
          %v955 = vsub.f32 %v935, %v945
          %v956 = vld [vmem:[%s2] sm:$0xff]
          %v957 = vld [vmem:[%s2 + $0x8] sm:$0xff]
          %v958 = vld [vmem:[%s2 + $0x10] sm:$0xff]
          %v959 = vld [vmem:[%s2 + $0x18] sm:$0xff]
          %v960 = vld [vmem:[%s2 + $0x20] sm:$0xff]
          %v961 = vld [vmem:[%s2 + $0x28] sm:$0xff]
          %v962 = vld [vmem:[%s2 + $0x30] sm:$0xff]
          %v963 = vld [vmem:[%s2 + $0x38] sm:$0xff]
          %v964 = vld [vmem:[%s2 + $0x40] sm:$0xff]
          %v965 = vld [vmem:[%s2 + $0x48] sm:$0xff]
          %v966 = vmul.f32 %v946, %v956
          %v967 = vmul.f32 %v947, %v957
          %v968 = vmul.f32 %v948, %v958
          %v969 = vmul.f32 %v949, %v959
          %v970 = vmul.f32 %v950, %v960
          %v971 = vmul.f32 %v951, %v961
          %v972 = vmul.f32 %v952, %v962
          %v973 = vmul.f32 %v953, %v963
          %v974 = vmul.f32 %v954, %v964
          %v975 = vmul.f32 %v955, %v965
          %v976 = vsel %vm651, %v966, 0.0
          %v977 = vsel %vm651, %v967, 0.0
          %v978 = vadd.f32 %v976, %v977
          %v979 = vsel %vm651, %v968, 0.0
          %v980 = vadd.f32 %v978, %v979
          %v981 = vsel %vm651, %v969, 0.0
          %v982 = vadd.f32 %v980, %v981
          %v983 = vsel %vm651, %v970, 0.0
          %v984 = vadd.f32 %v982, %v983
          %v985 = vsel %vm651, %v971, 0.0
          %v986 = vadd.f32 %v984, %v985
          %v987 = vsel %vm651, %v972, 0.0
          %v988 = vadd.f32 %v986, %v987
          %v989 = vsel %vm651, %v973, 0.0
          %v990 = vadd.f32 %v988, %v989
          %v991 = vsel %vm651, %v974, 0.0
          %v992 = vadd.f32 %v990, %v991
          %v993 = vsel %vm651, %v975, 0.0
          %v994 = vadd.f32 %v992, %v993
          %995 = vadd.xlane.f32.xlu0 %v994
          %v996 = vpop.xlane.xlu0 %995
          %v997 = vrot.slane %v996, 4
          %v998 = vadd.f32 %v996, %v997
          %v999 = vrot.slane %v998, 2
          %v1000 = vadd.f32 %v998, %v999
          %v1001 = vrot.slane %v1000, 1
          %v1002 = vadd.f32 %v1000, %v1001
          %s1003 = vtos %v1002
          %v1004 = vstv %s1003
          %vm1005 = vcmask 0
          %1006 = vst.msk [vmem:[#allocation6] sm:$0x1] %vm1005, %v1004
        $region89: #{hierachical_forward_train.7} parent=76 // pred_fallthru
          _
        // Predicated region
        $region90: #{hierachical_forward_train.7} parent=76 // pred_check
          %p1007 = pneg %p145
        $region91: #{hierachical_forward_train.7} parent=76 // pred_check_branch
          %1009 = sbr.rel (%p1007) target = $region93
        $region92: #{hierachical_forward_train.7} parent=76 // pred_region
          %s1011 = ssub.s32 16, 16
          %1012 = vsyncadd [#allocation7], %s1011
          %s1014 = sshll.u32 [#allocation6], 4
          %s1015 = int_to_ptr.vmem [resolvable:$true] %s1014
          %1017 = dma.vmem_to_hbm [thread:$0]  %s1015, 16, %s5, [#allocation7]
        $region93: #{hierachical_forward_train.7} parent=76 // pred_fallthru
          _
        // Predicated region
        $region94: #{hierachical_forward_train.7} parent=76 // pred_check
          %p1018 = pneg %p145
        $region95: #{hierachical_forward_train.7} parent=76 // pred_check_branch
          %1020 = sbr.rel (%p1018) target = $region97
        $region96: #{hierachical_forward_train.7} parent=76 // pred_region
          %1021 = dma.done [#allocation7], 16
        $region97: #{hierachical_forward_train.7} parent=76 // pred_fallthru
          _
      $region77: #{hierachical_forward_train.7} parent=5 // pred_fallthru
        _
      %p1022 = scmp.le.s32.totalorder 2, %s12
      // Predicated region
      $region98: #{hierachical_forward_train.7} parent=5 // pred_check
        %p1023 = pneg %p1022
      $region99: #{hierachical_forward_train.7} parent=5 // pred_check_branch
        %1025 = sbr.rel (%p1023) target = $region101
      $region100: #{hierachical_forward_train.7} parent=5 // pred_region
        %s1026 = ssub.s32 %s12, 2
      $region101: #{hierachical_forward_train.7} parent=5 // pred_fallthru
        _
    $region6: #{hierachical_forward_train.7} parent=1 // loop_footer
      %s16 = sadd.s32 1, %s12
    $region7: #{hierachical_forward_train.7} parent=1 // loop_footer_branch
      %11 = sbr.rel target = $region3
    $region8: #{hierachical_forward_train.7} parent=1 // loop_exit
      _
    %1027 = vsyncpa [#allocation7], 1
    %s1028 = scalar_lea.sflag [#allocation7], 1
    %1029 = vsyncpa %s1028, 1

// kernel: hierachical_forward_train.6
$region0: #{hierachical_forward_train.6}
  #allocation0 [shape = 'u32[]', space=smem, size = 0x4, offset = 0x4, fixed_abs, tag = 'smem constant byte address 0x4 - core index']
  #allocation1 [shape = 'u32[144,128]{1,0:T(1,128)}', space=vmem, size = 0x12000, scoped, tag = 'internal scratch']
  #allocation2 [shape = 'f32[8,128]{1,0:T(8,128)}', space=vmem, size = 0x1000, scoped, tag = 'scratch operand']
  #allocation3 [shape = 'f32[8,128]{1,0:T(8,128)}', space=vmem, size = 0x1000, scoped, tag = 'scratch operand']
  #allocation4 [shape = 'f32[8,128]{1,0:T(8,128)}', space=vmem, size = 0x1000, scoped, tag = 'scratch operand']
  #allocation5 [shape = 'f32[8,128]{1,0:T(8,128)}', space=vmem, size = 0x1000, scoped, tag = 'scratch operand']
  %s0 = inlined_call_operand.vmem [shape: bf16[2,5,8,512], index: 0, kind: input, shape index: {}]
  %s1 = inlined_call_operand.vmem [shape: f32[8,128], index: 1, kind: input, shape index: {}]
  %s2 = inlined_call_operand.vmem [shape: f32[8,128], index: 2, kind: input, shape index: {}]
  %s3 = inlined_call_operand.vmem [shape: bf16[128,512], index: 3, kind: input, shape index: {}]
  %s4 = inlined_call_operand.vmem [shape: f32[4,8,128], index: 4, kind: input, shape index: {}]
  %s5 = inlined_call_operand.vmem [shape: f32[4,8,128], index: 5, kind: input, shape index: {}]
  %s6 = inlined_call_operand.vmem [shape: f32[4,8,1], index: 6, kind: input, shape index: {}]
  %s7 = inlined_call_operand.vmem [shape: bf16[128,512], index: 7, kind: input, shape index: {}]
  %s8 = inlined_call_operand.vmem [shape: bf16[128,512], index: 8, kind: input, shape index: {}]
  %s9 = inlined_call_operand.vmem [shape: f32[1,512], index: 9, kind: input, shape index: {}]
  %s10 = inlined_call_operand.vmem [shape: bf16[128,128], index: 10, kind: input, shape index: {}]
  %s11 = inlined_call_operand.vmem [shape: f32[1,128], index: 11, kind: input, shape index: {}]
  %s12 = inlined_call_operand.vmem [shape: bf16[128,128], index: 12, kind: input, shape index: {}]
  %s13 = inlined_call_operand.vmem [shape: bf16[128,128], index: 13, kind: input, shape index: {}]
  %s14 = inlined_call_operand.vmem [shape: f32[1,128], index: 14, kind: input, shape index: {}]
  %s15 = inlined_call_operand.vmem [shape: f32[2,5,8,128], index: 15, kind: output, shape index: {}]
  %s16 = sld [smem:[#allocation0]]
  $region101: #{hierachical_forward_train.6} parent=0
    _
  %s18 = ssub.s32 1, %s16
  %s19 = scalar_select 0, %s18, %s16
  loop: start=0, step=1, limit=12
  $region2: #{hierachical_forward_train.6} parent=0 // loop_pre_header
    _
  $region3: #{hierachical_forward_train.6} parent=0 // loop_header
    %s21 = sphi 0, %s25
    %p22 = scmp.ge.s32.totalorder %s21, 12
    %s28 = sphi 0, %s40
    %s29 = sphi 0, %s36
    %s30 = sphi 0, %s28
    %s31 = sphi 0, %s29
    %s32 = sphi 0, %s30
    %s33 = sphi 0, %s31
    %s45 = sphi 0, %s47
    %s48 = sphi 0, %s45
    %s49 = sphi 0, %s48
    %s65 = sphi 0, %s49
    %s69 = sphi 0, %s69
    %s71 = sphi 0, %s69
    %s72 = sphi 0, %s71
    %s86 = sphi 0, %s72
    %s90 = sphi 0, %s90
    %s92 = sphi 0, %s90
    %s93 = sphi 0, %s92
    %s107 = sphi 0, %s93
    %s111 = sphi 0, %s111
    %s113 = sphi 0, %s111
    %s114 = sphi 0, %s113
    %s128 = sphi 0, %s114
    %s132 = sphi 0, %s132
    %s134 = sphi 0, %s132
    %s135 = sphi 0, %s134
    %s149 = sphi 0, %s135
    %s153 = sphi 0, %s153
    %s155 = sphi 0, %s153
    %s156 = sphi 0, %s155
    %s170 = sphi 0, %s156
    %s174 = sphi 0, %s174
    %s176 = sphi 0, %s174
    %s177 = sphi 0, %s176
    %s191 = sphi 0, %s177
    %s195 = sphi 0, %s195
    %s197 = sphi 0, %s195
    %s198 = sphi 0, %s197
    %s212 = sphi 0, %s198
    %s216 = sphi 0, %s216
    %s218 = sphi 0, %s216
    %s219 = sphi 0, %s218
    %s233 = sphi 0, %s219
    %s237 = sphi 0, %s237
    %s239 = sphi 0, %s237
    %s240 = sphi 0, %s239
    %s254 = sphi 0, %s240
    %s258 = sphi 0, %s258
    %s260 = sphi 0, %s258
    %s261 = sphi 0, %s260
    %s275 = sphi 0, %s261
    %s279 = sphi 0, %s279
    %s281 = sphi 0, %s279
    %s282 = sphi 0, %s281
    %s296 = sphi 0, %s282
    %s300 = sphi 0, %s300
    %s302 = sphi 0, %s300
    %s303 = sphi 0, %s302
    %s317 = sphi 0, %s303
    %s321 = sphi 0, %s321
    %s323 = sphi 0, %s321
    %s324 = sphi 0, %s323
    %s338 = sphi 0, %s324
    %s342 = sphi 0, %s342
    %s344 = sphi 0, %s342
    %s345 = sphi 0, %s344
    %s359 = sphi 0, %s345
    %s367 = sphi 0, %s369
    %s370 = sphi 0, %s367
    %s371 = sphi 0, %s370
    %s387 = sphi 0, %s371
  $region4: #{hierachical_forward_train.6} parent=0 // loop_header_branch
    %24 = sbr.rel (%p22) target = $region8
  $region5: #{hierachical_forward_train.6} parent=0 // loop_body
    %s26 = ssub.s32 %s21, 1
    %s27 = ssub.s32 %s21, 2
    %s34 = sadd.s32 1, %s29
    %p35 = scmp.ge.s32.totalorder %s34, 5
    %s36 = scalar_select %p35, 0, %s34
    %s37 = sadd.s32 1, %s28
    %s38 = scalar_select %p35, %s37, %s28
    %p39 = scmp.ge.s32.totalorder %s38, 2
    %s40 = scalar_select %p39, 0, %s38
    %s41 = ssub.s32 %s28, %s40
    %s42 = ssub.s32 %s29, %s36
    %s43 = sor.u32 %s41, %s42
    %p44 = scmp.eq.s32.totalorder %s43, 0
    %s46 = sadd.s32 %s45, 1
    %s47 = scalar_select %p44, %s45, %s46
    %p50 = pneg %p44
    %p51 = scmp.eq.s32.totalorder %s21, 9
    %p52 = por %p50, %p51
    %p53 = scmp.ne.s32.totalorder %s45, %s48
    %p54 = scmp.eq.s32.totalorder %s21, 0
    %p55 = por %p53, %p54
    %p56 = scmp.ne.s32.totalorder %s45, %s48
    %p57 = scmp.eq.s32.totalorder %s26, 9
    %p58 = por %p56, %p57
    %p59 = scmp.ne.s32.totalorder %s48, %s49
    %p60 = scmp.eq.s32.totalorder %s26, 0
    %p61 = por %p59, %p60
    %p62 = scmp.ne.s32.totalorder %s48, %s49
    %p63 = scmp.eq.s32.totalorder %s27, 9
    %p64 = por %p62, %p63
    %p66 = scmp.ne.s32.totalorder %s49, %s65
    %p67 = scmp.eq.s32.totalorder %s27, 0
    %p68 = por %p66, %p67
    %s70 = sadd.s32 %s69, 1
    %p73 = scmp.eq.s32.totalorder %s21, 9
    %p74 = scmp.ne.s32.totalorder %s69, %s71
    %p75 = scmp.eq.s32.totalorder %s21, 0
    %p76 = por %p74, %p75
    %p77 = scmp.ne.s32.totalorder %s69, %s71
    %p78 = scmp.eq.s32.totalorder %s26, 9
    %p79 = por %p77, %p78
    %p80 = scmp.ne.s32.totalorder %s71, %s72
    %p81 = scmp.eq.s32.totalorder %s26, 0
    %p82 = por %p80, %p81
    %p83 = scmp.ne.s32.totalorder %s71, %s72
    %p84 = scmp.eq.s32.totalorder %s27, 9
    %p85 = por %p83, %p84
    %p87 = scmp.ne.s32.totalorder %s72, %s86
    %p88 = scmp.eq.s32.totalorder %s27, 0
    %p89 = por %p87, %p88
    %s91 = sadd.s32 %s90, 1
    %p94 = scmp.eq.s32.totalorder %s21, 9
    %p95 = scmp.ne.s32.totalorder %s90, %s92
    %p96 = scmp.eq.s32.totalorder %s21, 0
    %p97 = por %p95, %p96
    %p98 = scmp.ne.s32.totalorder %s90, %s92
    %p99 = scmp.eq.s32.totalorder %s26, 9
    %p100 = por %p98, %p99
    %p101 = scmp.ne.s32.totalorder %s92, %s93
    %p102 = scmp.eq.s32.totalorder %s26, 0
    %p103 = por %p101, %p102
    %p104 = scmp.ne.s32.totalorder %s92, %s93
    %p105 = scmp.eq.s32.totalorder %s27, 9
    %p106 = por %p104, %p105
    %p108 = scmp.ne.s32.totalorder %s93, %s107
    %p109 = scmp.eq.s32.totalorder %s27, 0
    %p110 = por %p108, %p109
    %s112 = sadd.s32 %s111, 1
    %p115 = scmp.eq.s32.totalorder %s21, 9
    %p116 = scmp.ne.s32.totalorder %s111, %s113
    %p117 = scmp.eq.s32.totalorder %s21, 0
    %p118 = por %p116, %p117
    %p119 = scmp.ne.s32.totalorder %s111, %s113
    %p120 = scmp.eq.s32.totalorder %s26, 9
    %p121 = por %p119, %p120
    %p122 = scmp.ne.s32.totalorder %s113, %s114
    %p123 = scmp.eq.s32.totalorder %s26, 0
    %p124 = por %p122, %p123
    %p125 = scmp.ne.s32.totalorder %s113, %s114
    %p126 = scmp.eq.s32.totalorder %s27, 9
    %p127 = por %p125, %p126
    %p129 = scmp.ne.s32.totalorder %s114, %s128
    %p130 = scmp.eq.s32.totalorder %s27, 0
    %p131 = por %p129, %p130
    %s133 = sadd.s32 %s132, 1
    %p136 = scmp.eq.s32.totalorder %s21, 9
    %p137 = scmp.ne.s32.totalorder %s132, %s134
    %p138 = scmp.eq.s32.totalorder %s21, 0
    %p139 = por %p137, %p138
    %p140 = scmp.ne.s32.totalorder %s132, %s134
    %p141 = scmp.eq.s32.totalorder %s26, 9
    %p142 = por %p140, %p141
    %p143 = scmp.ne.s32.totalorder %s134, %s135
    %p144 = scmp.eq.s32.totalorder %s26, 0
    %p145 = por %p143, %p144
    %p146 = scmp.ne.s32.totalorder %s134, %s135
    %p147 = scmp.eq.s32.totalorder %s27, 9
    %p148 = por %p146, %p147
    %p150 = scmp.ne.s32.totalorder %s135, %s149
    %p151 = scmp.eq.s32.totalorder %s27, 0
    %p152 = por %p150, %p151
    %s154 = sadd.s32 %s153, 1
    %p157 = scmp.eq.s32.totalorder %s21, 9
    %p158 = scmp.ne.s32.totalorder %s153, %s155
    %p159 = scmp.eq.s32.totalorder %s21, 0
    %p160 = por %p158, %p159
    %p161 = scmp.ne.s32.totalorder %s153, %s155
    %p162 = scmp.eq.s32.totalorder %s26, 9
    %p163 = por %p161, %p162
    %p164 = scmp.ne.s32.totalorder %s155, %s156
    %p165 = scmp.eq.s32.totalorder %s26, 0
    %p166 = por %p164, %p165
    %p167 = scmp.ne.s32.totalorder %s155, %s156
    %p168 = scmp.eq.s32.totalorder %s27, 9
    %p169 = por %p167, %p168
    %p171 = scmp.ne.s32.totalorder %s156, %s170
    %p172 = scmp.eq.s32.totalorder %s27, 0
    %p173 = por %p171, %p172
    %s175 = sadd.s32 %s174, 1
    %p178 = scmp.eq.s32.totalorder %s21, 9
    %p179 = scmp.ne.s32.totalorder %s174, %s176
    %p180 = scmp.eq.s32.totalorder %s21, 0
    %p181 = por %p179, %p180
    %p182 = scmp.ne.s32.totalorder %s174, %s176
    %p183 = scmp.eq.s32.totalorder %s26, 9
    %p184 = por %p182, %p183
    %p185 = scmp.ne.s32.totalorder %s176, %s177
    %p186 = scmp.eq.s32.totalorder %s26, 0
    %p187 = por %p185, %p186
    %p188 = scmp.ne.s32.totalorder %s176, %s177
    %p189 = scmp.eq.s32.totalorder %s27, 9
    %p190 = por %p188, %p189
    %p192 = scmp.ne.s32.totalorder %s177, %s191
    %p193 = scmp.eq.s32.totalorder %s27, 0
    %p194 = por %p192, %p193
    %s196 = sadd.s32 %s195, 1
    %p199 = scmp.eq.s32.totalorder %s21, 9
    %p200 = scmp.ne.s32.totalorder %s195, %s197
    %p201 = scmp.eq.s32.totalorder %s21, 0
    %p202 = por %p200, %p201
    %p203 = scmp.ne.s32.totalorder %s195, %s197
    %p204 = scmp.eq.s32.totalorder %s26, 9
    %p205 = por %p203, %p204
    %p206 = scmp.ne.s32.totalorder %s197, %s198
    %p207 = scmp.eq.s32.totalorder %s26, 0
    %p208 = por %p206, %p207
    %p209 = scmp.ne.s32.totalorder %s197, %s198
    %p210 = scmp.eq.s32.totalorder %s27, 9
    %p211 = por %p209, %p210
    %p213 = scmp.ne.s32.totalorder %s198, %s212
    %p214 = scmp.eq.s32.totalorder %s27, 0
    %p215 = por %p213, %p214
    %s217 = sadd.s32 %s216, 1
    %p220 = scmp.eq.s32.totalorder %s21, 9
    %p221 = scmp.ne.s32.totalorder %s216, %s218
    %p222 = scmp.eq.s32.totalorder %s21, 0
    %p223 = por %p221, %p222
    %p224 = scmp.ne.s32.totalorder %s216, %s218
    %p225 = scmp.eq.s32.totalorder %s26, 9
    %p226 = por %p224, %p225
    %p227 = scmp.ne.s32.totalorder %s218, %s219
    %p228 = scmp.eq.s32.totalorder %s26, 0
    %p229 = por %p227, %p228
    %p230 = scmp.ne.s32.totalorder %s218, %s219
    %p231 = scmp.eq.s32.totalorder %s27, 9
    %p232 = por %p230, %p231
    %p234 = scmp.ne.s32.totalorder %s219, %s233
    %p235 = scmp.eq.s32.totalorder %s27, 0
    %p236 = por %p234, %p235
    %s238 = sadd.s32 %s237, 1
    %p241 = scmp.eq.s32.totalorder %s21, 9
    %p242 = scmp.ne.s32.totalorder %s237, %s239
    %p243 = scmp.eq.s32.totalorder %s21, 0
    %p244 = por %p242, %p243
    %p245 = scmp.ne.s32.totalorder %s237, %s239
    %p246 = scmp.eq.s32.totalorder %s26, 9
    %p247 = por %p245, %p246
    %p248 = scmp.ne.s32.totalorder %s239, %s240
    %p249 = scmp.eq.s32.totalorder %s26, 0
    %p250 = por %p248, %p249
    %p251 = scmp.ne.s32.totalorder %s239, %s240
    %p252 = scmp.eq.s32.totalorder %s27, 9
    %p253 = por %p251, %p252
    %p255 = scmp.ne.s32.totalorder %s240, %s254
    %p256 = scmp.eq.s32.totalorder %s27, 0
    %p257 = por %p255, %p256
    %s259 = sadd.s32 %s258, 1
    %p262 = scmp.eq.s32.totalorder %s21, 9
    %p263 = scmp.ne.s32.totalorder %s258, %s260
    %p264 = scmp.eq.s32.totalorder %s21, 0
    %p265 = por %p263, %p264
    %p266 = scmp.ne.s32.totalorder %s258, %s260
    %p267 = scmp.eq.s32.totalorder %s26, 9
    %p268 = por %p266, %p267
    %p269 = scmp.ne.s32.totalorder %s260, %s261
    %p270 = scmp.eq.s32.totalorder %s26, 0
    %p271 = por %p269, %p270
    %p272 = scmp.ne.s32.totalorder %s260, %s261
    %p273 = scmp.eq.s32.totalorder %s27, 9
    %p274 = por %p272, %p273
    %p276 = scmp.ne.s32.totalorder %s261, %s275
    %p277 = scmp.eq.s32.totalorder %s27, 0
    %p278 = por %p276, %p277
    %s280 = sadd.s32 %s279, 1
    %p283 = scmp.eq.s32.totalorder %s21, 9
    %p284 = scmp.ne.s32.totalorder %s279, %s281
    %p285 = scmp.eq.s32.totalorder %s21, 0
    %p286 = por %p284, %p285
    %p287 = scmp.ne.s32.totalorder %s279, %s281
    %p288 = scmp.eq.s32.totalorder %s26, 9
    %p289 = por %p287, %p288
    %p290 = scmp.ne.s32.totalorder %s281, %s282
    %p291 = scmp.eq.s32.totalorder %s26, 0
    %p292 = por %p290, %p291
    %p293 = scmp.ne.s32.totalorder %s281, %s282
    %p294 = scmp.eq.s32.totalorder %s27, 9
    %p295 = por %p293, %p294
    %p297 = scmp.ne.s32.totalorder %s282, %s296
    %p298 = scmp.eq.s32.totalorder %s27, 0
    %p299 = por %p297, %p298
    %s301 = sadd.s32 %s300, 1
    %p304 = scmp.eq.s32.totalorder %s21, 9
    %p305 = scmp.ne.s32.totalorder %s300, %s302
    %p306 = scmp.eq.s32.totalorder %s21, 0
    %p307 = por %p305, %p306
    %p308 = scmp.ne.s32.totalorder %s300, %s302
    %p309 = scmp.eq.s32.totalorder %s26, 9
    %p310 = por %p308, %p309
    %p311 = scmp.ne.s32.totalorder %s302, %s303
    %p312 = scmp.eq.s32.totalorder %s26, 0
    %p313 = por %p311, %p312
    %p314 = scmp.ne.s32.totalorder %s302, %s303
    %p315 = scmp.eq.s32.totalorder %s27, 9
    %p316 = por %p314, %p315
    %p318 = scmp.ne.s32.totalorder %s303, %s317
    %p319 = scmp.eq.s32.totalorder %s27, 0
    %p320 = por %p318, %p319
    %s322 = sadd.s32 %s321, 1
    %p325 = scmp.eq.s32.totalorder %s21, 9
    %p326 = scmp.ne.s32.totalorder %s321, %s323
    %p327 = scmp.eq.s32.totalorder %s21, 0
    %p328 = por %p326, %p327
    %p329 = scmp.ne.s32.totalorder %s321, %s323
    %p330 = scmp.eq.s32.totalorder %s26, 9
    %p331 = por %p329, %p330
    %p332 = scmp.ne.s32.totalorder %s323, %s324
    %p333 = scmp.eq.s32.totalorder %s26, 0
    %p334 = por %p332, %p333
    %p335 = scmp.ne.s32.totalorder %s323, %s324
    %p336 = scmp.eq.s32.totalorder %s27, 9
    %p337 = por %p335, %p336
    %p339 = scmp.ne.s32.totalorder %s324, %s338
    %p340 = scmp.eq.s32.totalorder %s27, 0
    %p341 = por %p339, %p340
    %s343 = sadd.s32 %s342, 1
    %p346 = scmp.eq.s32.totalorder %s21, 9
    %p347 = scmp.ne.s32.totalorder %s342, %s344
    %p348 = scmp.eq.s32.totalorder %s21, 0
    %p349 = por %p347, %p348
    %p350 = scmp.ne.s32.totalorder %s342, %s344
    %p351 = scmp.eq.s32.totalorder %s26, 9
    %p352 = por %p350, %p351
    %p353 = scmp.ne.s32.totalorder %s344, %s345
    %p354 = scmp.eq.s32.totalorder %s26, 0
    %p355 = por %p353, %p354
    %p356 = scmp.ne.s32.totalorder %s344, %s345
    %p357 = scmp.eq.s32.totalorder %s27, 9
    %p358 = por %p356, %p357
    %p360 = scmp.ne.s32.totalorder %s345, %s359
    %p361 = scmp.eq.s32.totalorder %s27, 0
    %p362 = por %p360, %p361
    %s363 = ssub.s32 %s28, %s40
    %s364 = ssub.s32 %s29, %s36
    %s365 = sor.u32 %s363, %s364
    %p366 = scmp.eq.s32.totalorder %s365, 0
    %s368 = sadd.s32 %s367, 1
    %s369 = scalar_select %p366, %s367, %s368
    %p372 = pneg %p366
    %p373 = scmp.eq.s32.totalorder %s21, 9
    %p374 = por %p372, %p373
    %p375 = scmp.ne.s32.totalorder %s367, %s370
    %p376 = scmp.eq.s32.totalorder %s21, 0
    %p377 = por %p375, %p376
    %p378 = scmp.ne.s32.totalorder %s367, %s370
    %p379 = scmp.eq.s32.totalorder %s26, 9
    %p380 = por %p378, %p379
    %p381 = scmp.ne.s32.totalorder %s370, %s371
    %p382 = scmp.eq.s32.totalorder %s26, 0
    %p383 = por %p381, %p382
    %p384 = scmp.ne.s32.totalorder %s370, %s371
    %p385 = scmp.eq.s32.totalorder %s27, 9
    %p386 = por %p384, %p385
    %p388 = scmp.ne.s32.totalorder %s371, %s387
    %p389 = scmp.eq.s32.totalorder %s27, 0
    %p390 = por %p388, %p389
    %p391 = scmp.le.s32.totalorder 1, %s21
    %p392 = scmp.lt.s32.totalorder %s21, 11
    %p393 = pnand %p391, %p392
    %p394 = pneg %p393
    // Predicated region
    $region9: #{hierachical_forward_train.6} parent=5 // pred_check
      _
    $region10: #{hierachical_forward_train.6} parent=5 // pred_check_branch
      %396 = sbr.rel (%p393) target = $region12
    $region11: #{hierachical_forward_train.6} parent=5 // pred_region
      %s397 = ssub.s32 %s21, 1
      // Predicated region
      $region13: #{hierachical_forward_train.6} parent=11 // pred_check
        %p398 = pneg %p82
      $region14: #{hierachical_forward_train.6} parent=11 // pred_check_branch
        %400 = sbr.rel (%p398) target = $region16
      $region15: #{hierachical_forward_train.6} parent=11 // pred_region
        _
      $region16: #{hierachical_forward_train.6} parent=11 // pred_fallthru
        _
      // Predicated region
      $region17: #{hierachical_forward_train.6} parent=11 // pred_check
        %p401 = pneg %p103
      $region18: #{hierachical_forward_train.6} parent=11 // pred_check_branch
        %403 = sbr.rel (%p401) target = $region20
      $region19: #{hierachical_forward_train.6} parent=11 // pred_region
        _
      $region20: #{hierachical_forward_train.6} parent=11 // pred_fallthru
        _
      // Predicated region
      $region21: #{hierachical_forward_train.6} parent=11 // pred_check
        %p404 = pneg %p124
      $region22: #{hierachical_forward_train.6} parent=11 // pred_check_branch
        %406 = sbr.rel (%p404) target = $region24
      $region23: #{hierachical_forward_train.6} parent=11 // pred_region
        _
      $region24: #{hierachical_forward_train.6} parent=11 // pred_fallthru
        _
      // Predicated region
      $region25: #{hierachical_forward_train.6} parent=11 // pred_check
        %p407 = pneg %p145
      $region26: #{hierachical_forward_train.6} parent=11 // pred_check_branch
        %409 = sbr.rel (%p407) target = $region28
      $region27: #{hierachical_forward_train.6} parent=11 // pred_region
        _
      $region28: #{hierachical_forward_train.6} parent=11 // pred_fallthru
        _
      // Predicated region
      $region29: #{hierachical_forward_train.6} parent=11 // pred_check
        %p410 = pneg %p166
      $region30: #{hierachical_forward_train.6} parent=11 // pred_check_branch
        %412 = sbr.rel (%p410) target = $region32
      $region31: #{hierachical_forward_train.6} parent=11 // pred_region
        _
      $region32: #{hierachical_forward_train.6} parent=11 // pred_fallthru
        _
      // Predicated region
      $region33: #{hierachical_forward_train.6} parent=11 // pred_check
        %p413 = pneg %p187
      $region34: #{hierachical_forward_train.6} parent=11 // pred_check_branch
        %415 = sbr.rel (%p413) target = $region36
      $region35: #{hierachical_forward_train.6} parent=11 // pred_region
        _
      $region36: #{hierachical_forward_train.6} parent=11 // pred_fallthru
        _
      // Predicated region
      $region37: #{hierachical_forward_train.6} parent=11 // pred_check
        %p416 = pneg %p208
      $region38: #{hierachical_forward_train.6} parent=11 // pred_check_branch
        %418 = sbr.rel (%p416) target = $region40
      $region39: #{hierachical_forward_train.6} parent=11 // pred_region
        _
      $region40: #{hierachical_forward_train.6} parent=11 // pred_fallthru
        _
      // Predicated region
      $region41: #{hierachical_forward_train.6} parent=11 // pred_check
        %p419 = pneg %p229
      $region42: #{hierachical_forward_train.6} parent=11 // pred_check_branch
        %421 = sbr.rel (%p419) target = $region44
      $region43: #{hierachical_forward_train.6} parent=11 // pred_region
        _
      $region44: #{hierachical_forward_train.6} parent=11 // pred_fallthru
        _
      // Predicated region
      $region45: #{hierachical_forward_train.6} parent=11 // pred_check
        %p422 = pneg %p250
      $region46: #{hierachical_forward_train.6} parent=11 // pred_check_branch
        %424 = sbr.rel (%p422) target = $region48
      $region47: #{hierachical_forward_train.6} parent=11 // pred_region
        _
      $region48: #{hierachical_forward_train.6} parent=11 // pred_fallthru
        _
      // Predicated region
      $region49: #{hierachical_forward_train.6} parent=11 // pred_check
        %p425 = pneg %p271
      $region50: #{hierachical_forward_train.6} parent=11 // pred_check_branch
        %427 = sbr.rel (%p425) target = $region52
      $region51: #{hierachical_forward_train.6} parent=11 // pred_region
        _
      $region52: #{hierachical_forward_train.6} parent=11 // pred_fallthru
        _
      // Predicated region
      $region53: #{hierachical_forward_train.6} parent=11 // pred_check
        %p428 = pneg %p292
      $region54: #{hierachical_forward_train.6} parent=11 // pred_check_branch
        %430 = sbr.rel (%p428) target = $region56
      $region55: #{hierachical_forward_train.6} parent=11 // pred_region
        _
      $region56: #{hierachical_forward_train.6} parent=11 // pred_fallthru
        _
      // Predicated region
      $region57: #{hierachical_forward_train.6} parent=11 // pred_check
        %p431 = pneg %p313
      $region58: #{hierachical_forward_train.6} parent=11 // pred_check_branch
        %433 = sbr.rel (%p431) target = $region60
      $region59: #{hierachical_forward_train.6} parent=11 // pred_region
        _
      $region60: #{hierachical_forward_train.6} parent=11 // pred_fallthru
        _
      // Predicated region
      $region61: #{hierachical_forward_train.6} parent=11 // pred_check
        %p434 = pneg %p334
      $region62: #{hierachical_forward_train.6} parent=11 // pred_check_branch
        %436 = sbr.rel (%p434) target = $region64
      $region63: #{hierachical_forward_train.6} parent=11 // pred_region
        _
      $region64: #{hierachical_forward_train.6} parent=11 // pred_fallthru
        _
      // Predicated region
      $region65: #{hierachical_forward_train.6} parent=11 // pred_check
        %p437 = pneg %p355
      $region66: #{hierachical_forward_train.6} parent=11 // pred_check_branch
        %439 = sbr.rel (%p437) target = $region68
      $region67: #{hierachical_forward_train.6} parent=11 // pred_region
        _
      $region68: #{hierachical_forward_train.6} parent=11 // pred_fallthru
        _
    $region12: #{hierachical_forward_train.6} parent=5 // pred_fallthru
      _
    %p440 = scmp.lt.s32.totalorder %s21, 10
    // Predicated region
    $region69: #{hierachical_forward_train.6} parent=5 // pred_check
      %p441 = pneg %p440
    $region70: #{hierachical_forward_train.6} parent=5 // pred_check_branch
      %443 = sbr.rel (%p441) target = $region72
    $region71: #{hierachical_forward_train.6} parent=5 // pred_region
      // Predicated region
      $region73: #{hierachical_forward_train.6} parent=71 // pred_check
        %p444 = pneg %p55
      $region74: #{hierachical_forward_train.6} parent=71 // pred_check_branch
        %446 = sbr.rel (%p444) target = $region76
      $region75: #{hierachical_forward_train.6} parent=71 // pred_region
        %p447 = scmp.lt.s32.totalorder %s28, 1
        %s448 = scalar_select %p447, %s28, 1
        %p449 = scmp.lt.s32.totalorder %s29, 4
        %s450 = scalar_select %p449, %s29, 4
        %s451 = smul.addr %s450, 4
        %s452 = smul.addr %s448, 20
        %s453 = sadd.s32 %s451, %s452
        %s454 = smul.addr %s453, 4
        %s455 = scalar_lea.vmem %s0, %s454
      $region76: #{hierachical_forward_train.6} parent=71 // pred_fallthru
        _
    $region72: #{hierachical_forward_train.6} parent=5 // pred_fallthru
      _
    %p456 = scmp.le.s32.totalorder 1, %s21
    %p457 = scmp.lt.s32.totalorder %s21, 11
    %p458 = pnand %p456, %p457
    %p459 = pneg %p458
    // Predicated region
    $region77: #{hierachical_forward_train.6} parent=5 // pred_check
      _
    $region78: #{hierachical_forward_train.6} parent=5 // pred_check_branch
      %461 = sbr.rel (%p458) target = $region80
    $region79: #{hierachical_forward_train.6} parent=5 // pred_region
      %s462 = ssub.s32 %s21, 1
      %p463 = scmp.lt.s32.totalorder %s30, 1
      %s464 = scalar_select %p463, %s30, 1
      %p465 = scmp.lt.s32.totalorder %s31, 4
      %s466 = scalar_select %p465, %s31, 4
      %s467 = smul.addr %s466, 4
      %s468 = smul.addr %s464, 20
      %s469 = sadd.s32 %s467, %s468
      %s470 = smul.addr %s469, 4
      %s471 = scalar_lea.vmem %s0, %s470
      %p472 = pneg %p61
      %p473 = pneg %p58
      %p474 = pneg %p82
      %p475 = pneg %p79
      %p476 = pneg %p103
      %p477 = pneg %p100
      %p478 = pneg %p124
      %p479 = pneg %p121
      %p480 = pneg %p145
      %p481 = pneg %p142
      %p482 = pneg %p166
      %p483 = pneg %p163
      %p484 = pneg %p187
      %p485 = pneg %p184
      %p486 = pneg %p208
      %p487 = pneg %p205
      %p488 = pneg %p229
      %p489 = pneg %p226
      %p490 = pneg %p250
      %p491 = pneg %p247
      %p492 = pneg %p271
      %p493 = pneg %p268
      %p494 = pneg %p292
      %p495 = pneg %p289
      %p496 = pneg %p313
      %p497 = pneg %p310
      %p498 = pneg %p334
      %p499 = pneg %p331
      %p500 = pneg %p355
      %p501 = pneg %p352
      %p502 = pneg %p383
      %p503 = pneg %p380
      %p504 = scmp.lt.s32.totalorder %s30, 1
      %s505 = scalar_select %p504, %s30, 1
      %p506 = scmp.lt.s32.totalorder %s31, 4
      %s507 = scalar_select %p506, %s31, 4
      %s508 = smul.addr %s505, 5
      %s509 = sadd.s32 %s507, %s508
      %s510 = smul.addr %s509, 8
      %s511 = scalar_lea.vmem %s15, %s510
      %p512 = scmp.lt.s32.totalorder %s30, 1
      %s513 = scalar_select %p512, %s30, 1
      %p514 = scmp.lt.s32.totalorder %s31, 4
      %s515 = scalar_select %p514, %s31, 4
      %s516 = smul.addr %s515, 4
      %s517 = smul.addr %s513, 20
      %s518 = sadd.s32 %s516, %s517
      %s519 = smul.addr %s518, 4
      %s520 = scalar_lea.vmem %s0, %s519
      %p521 = scmp.lt.s32.totalorder %s30, 1
      %s522 = scalar_select %p521, %s30, 1
      %p523 = scmp.lt.s32.totalorder %s31, 4
      %s524 = scalar_select %p523, %s31, 4
      %s525 = smul.addr %s522, 5
      %s526 = sadd.s32 %s524, %s525
      %s527 = smul.addr %s526, 8
      %s528 = scalar_lea.vmem %s15, %s527
      %p530 = scmp.eq.s32.totalorder %s30, 0
      %p531 = scmp.eq.s32.totalorder %s31, 0
      %p532 = pnand %p530, %p531
      %p533 = pneg %p532
      // Predicated region
      $region81: #{hierachical_forward_train.6} parent=79 // pred_check
        _
      $region82: #{hierachical_forward_train.6} parent=79 // pred_check_branch
        %535 = sbr.rel (%p532) target = $region84
      $region83: #{hierachical_forward_train.6} parent=79 // pred_region
        %v536 = vld [vmem:[%s1] sm:$0xff]
        %537 = vst [vmem:[#allocation2] sm:$0xff] %v536
        %v538 = vld [vmem:[%s2] sm:$0xff]
        %539 = vst [vmem:[#allocation3] sm:$0xff] %v538
        %v540 = vld [vmem:[%s1] sm:$0xff]
        %541 = vst [vmem:[#allocation4] sm:$0xff] %v540
        %v542 = vld [vmem:[%s2] sm:$0xff]
        %543 = vst [vmem:[#allocation5] sm:$0xff] %v542
      $region84: #{hierachical_forward_train.6} parent=79 // pred_fallthru
        _
      %v544 = vld [vmem:[%s520] sm:$0xff]
      %v545 = vld [vmem:[%s520 + $0x8] sm:$0xff]
      %v546 = vunpack.c.l.bf16 %v544
      %v547 = vunpack.c.h.bf16 %v544
      %v548 = vunpack.c.l.bf16 %v545
      %v549 = vunpack.c.h.bf16 %v545
      %v550 = vld [vmem:[#allocation2] sm:$0xff]
      %v551 = vpack.c.bf16 %v550, %v550
      %v552 = vld [vmem:[%s3] sm:$0xff]
      %v553 = vld [vmem:[%s3 + $0x8] sm:$0xff]
      %v554 = vld [vmem:[%s3 + $0x10] sm:$0xff]
      %v555 = vld [vmem:[%s3 + $0x18] sm:$0xff]
      %v556 = vld [vmem:[%s3 + $0x20] sm:$0xff]
      %v557 = vld [vmem:[%s3 + $0x28] sm:$0xff]
      %v558 = vld [vmem:[%s3 + $0x30] sm:$0xff]
      %v559 = vld [vmem:[%s3 + $0x38] sm:$0xff]
      %v560 = vld [vmem:[%s3 + $0x40] sm:$0xff]
      %v561 = vld [vmem:[%s3 + $0x48] sm:$0xff]
      %v562 = vld [vmem:[%s3 + $0x50] sm:$0xff]
      %v563 = vld [vmem:[%s3 + $0x58] sm:$0xff]
      %v564 = vld [vmem:[%s3 + $0x60] sm:$0xff]
      %v565 = vld [vmem:[%s3 + $0x68] sm:$0xff]
      %v566 = vld [vmem:[%s3 + $0x70] sm:$0xff]
      %v567 = vld [vmem:[%s3 + $0x78] sm:$0xff]
      %v568 = vld [vmem:[%s3 + $0x80] sm:$0xff]
      %v569 = vld [vmem:[%s3 + $0x88] sm:$0xff]
      %v570 = vld [vmem:[%s3 + $0x90] sm:$0xff]
      %v571 = vld [vmem:[%s3 + $0x98] sm:$0xff]
      %v572 = vld [vmem:[%s3 + $0xa0] sm:$0xff]
      %v573 = vld [vmem:[%s3 + $0xa8] sm:$0xff]
      %v574 = vld [vmem:[%s3 + $0xb0] sm:$0xff]
      %v575 = vld [vmem:[%s3 + $0xb8] sm:$0xff]
      %v576 = vld [vmem:[%s3 + $0xc0] sm:$0xff]
      %v577 = vld [vmem:[%s3 + $0xc8] sm:$0xff]
      %v578 = vld [vmem:[%s3 + $0xd0] sm:$0xff]
      %v579 = vld [vmem:[%s3 + $0xd8] sm:$0xff]
      %v580 = vld [vmem:[%s3 + $0xe0] sm:$0xff]
      %v581 = vld [vmem:[%s3 + $0xe8] sm:$0xff]
      %v582 = vld [vmem:[%s3 + $0xf0] sm:$0xff]
      %v583 = vld [vmem:[%s3 + $0xf8] sm:$0xff]
      %v616 = vunpack.c.l.b16 %v552
      %v617 = vunpack.c.h.b16 %v552
      %v618 = vunpack.c.l.b16 %v553
      %v619 = vunpack.c.h.b16 %v553
      %v620 = vunpack.c.l.b16 %v554
      %v621 = vunpack.c.h.b16 %v554
      %v622 = vunpack.c.l.b16 %v555
      %v623 = vunpack.c.h.b16 %v555
      %v624 = vunpack.c.l.b16 %v556
      %v625 = vunpack.c.h.b16 %v556
      %v626 = vunpack.c.l.b16 %v557
      %v627 = vunpack.c.h.b16 %v557
      %v628 = vunpack.c.l.b16 %v558
      %v629 = vunpack.c.h.b16 %v558
      %v630 = vunpack.c.l.b16 %v559
      %v631 = vunpack.c.h.b16 %v559
      %v632 = vunpack.c.l.b16 %v560
      %v633 = vunpack.c.h.b16 %v560
      %v634 = vunpack.c.l.b16 %v561
      %v635 = vunpack.c.h.b16 %v561
      %v636 = vunpack.c.l.b16 %v562
      %v637 = vunpack.c.h.b16 %v562
      %v638 = vunpack.c.l.b16 %v563
      %v639 = vunpack.c.h.b16 %v563
      %v640 = vunpack.c.l.b16 %v564
      %v641 = vunpack.c.h.b16 %v564
      %v642 = vunpack.c.l.b16 %v565
      %v643 = vunpack.c.h.b16 %v565
      %v644 = vunpack.c.l.b16 %v566
      %v645 = vunpack.c.h.b16 %v566
      %v646 = vunpack.c.l.b16 %v567
      %v647 = vunpack.c.h.b16 %v567
      %v648 = vunpack.c.l.b16 %v568
      %v649 = vunpack.c.h.b16 %v568
      %v650 = vunpack.c.l.b16 %v569
      %v651 = vunpack.c.h.b16 %v569
      %v652 = vunpack.c.l.b16 %v570
      %v653 = vunpack.c.h.b16 %v570
      %v654 = vunpack.c.l.b16 %v571
      %v655 = vunpack.c.h.b16 %v571
      %v656 = vunpack.c.l.b16 %v572
      %v657 = vunpack.c.h.b16 %v572
      %v658 = vunpack.c.l.b16 %v573
      %v659 = vunpack.c.h.b16 %v573
      %v660 = vunpack.c.l.b16 %v574
      %v661 = vunpack.c.h.b16 %v574
      %v662 = vunpack.c.l.b16 %v575
      %v663 = vunpack.c.h.b16 %v575
      %v664 = vunpack.c.l.b16 %v576
      %v665 = vunpack.c.h.b16 %v576
      %v666 = vunpack.c.l.b16 %v577
      %v667 = vunpack.c.h.b16 %v577
      %v668 = vunpack.c.l.b16 %v578
      %v669 = vunpack.c.h.b16 %v578
      %v670 = vunpack.c.l.b16 %v579
      %v671 = vunpack.c.h.b16 %v579
      %v672 = vunpack.c.l.b16 %v580
      %v673 = vunpack.c.h.b16 %v580
      %v674 = vunpack.c.l.b16 %v581
      %v675 = vunpack.c.h.b16 %v581
      %v676 = vunpack.c.l.b16 %v582
      %v677 = vunpack.c.h.b16 %v582
      %v678 = vunpack.c.l.b16 %v583
      %v679 = vunpack.c.h.b16 %v583
      %v680 = vpack.c.b16 %v620, %v616
      %v681 = vpack.c.b16 %v621, %v617
      %v682 = vpack.c.b16 %v622, %v618
      %v683 = vpack.c.b16 %v623, %v619
      %v684 = vpack.c.b16 %v628, %v624
      %v685 = vpack.c.b16 %v629, %v625
      %v686 = vpack.c.b16 %v630, %v626
      %v687 = vpack.c.b16 %v631, %v627
      %v688 = vpack.c.b16 %v636, %v632
      %v689 = vpack.c.b16 %v637, %v633
      %v690 = vpack.c.b16 %v638, %v634
      %v691 = vpack.c.b16 %v639, %v635
      %v692 = vpack.c.b16 %v644, %v640
      %v693 = vpack.c.b16 %v645, %v641
      %v694 = vpack.c.b16 %v646, %v642
      %v695 = vpack.c.b16 %v647, %v643
      %v696 = vpack.c.b16 %v652, %v648
      %v697 = vpack.c.b16 %v653, %v649
      %v698 = vpack.c.b16 %v654, %v650
      %v699 = vpack.c.b16 %v655, %v651
      %v700 = vpack.c.b16 %v660, %v656
      %v701 = vpack.c.b16 %v661, %v657
      %v702 = vpack.c.b16 %v662, %v658
      %v703 = vpack.c.b16 %v663, %v659
      %v704 = vpack.c.b16 %v668, %v664
      %v705 = vpack.c.b16 %v669, %v665
      %v706 = vpack.c.b16 %v670, %v666
      %v707 = vpack.c.b16 %v671, %v667
      %v708 = vpack.c.b16 %v676, %v672
      %v709 = vpack.c.b16 %v677, %v673
      %v710 = vpack.c.b16 %v678, %v674
      %v711 = vpack.c.b16 %v679, %v675
      %744 = vmatprep.subr.bf16.mxu0 %v681
      %745 = vmatpush1.bf16.msra.mxu0 %v680
      %746 = vmatprep.subr.bf16.mxu0 %v685
      %747 = vmatpush1.bf16.msra.mxu0 %v684
      %748 = vmatprep.subr.bf16.mxu0 %v689
      %749 = vmatpush1.bf16.msra.mxu0 %v688
      %750 = vmatprep.subr.bf16.mxu0 %v693
      %751 = vmatpush1.bf16.msra.mxu0 %v692
      %752 = vmatprep.subr.bf16.mxu0 %v697
      %753 = vmatpush1.bf16.msra.mxu0 %v696
      %754 = vmatprep.subr.bf16.mxu0 %v701
      %755 = vmatpush1.bf16.msra.mxu0 %v700
      %756 = vmatprep.subr.bf16.mxu0 %v705
      %757 = vmatpush1.bf16.msra.mxu0 %v704
      %758 = vmatprep.subr.bf16.mxu0 %v709
      %759 = vmatpush1.bf16.msra.mxu0 %v708
      %760 = vmatprep.subr.bf16.mxu0 0
      %761 = vmatpush1.bf16.msra.mxu0 0
      %762 = vmatprep.subr.bf16.mxu0 0
      %763 = vmatpush1.bf16.msra.mxu0 0
      %764 = vmatprep.subr.bf16.mxu0 0
      %765 = vmatpush1.bf16.msra.mxu0 0
      %766 = vmatprep.subr.bf16.mxu0 0
      %767 = vmatpush1.bf16.msra.mxu0 0
      %768 = vmatprep.subr.bf16.mxu0 0
      %769 = vmatpush1.bf16.msra.mxu0 0
      %770 = vmatprep.subr.bf16.mxu0 0
      %771 = vmatpush1.bf16.msra.mxu0 0
      %772 = vmatprep.subr.bf16.mxu0 0
      %773 = vmatpush1.bf16.msra.mxu0 0
      %774 = vmatprep.subr.bf16.mxu0 0
      %775 = vmatpush1.bf16.msra.mxu0 0
      %776 = vmatprep.mubr.bf16.mxu0 0
      %777 = vmatmul.mubr.bf16.gmra.mrb[0].mxu0 %v551
      %v778 = vpop.f32.mrb[0].mxu0
      %v779 = vadd.f32 0.0, %v778
      %v780 = vpop.f32.mrb[0].mxu0
      %v781 = vadd.f32 0.0, %v780
      %v782 = vpop.f32.mrb[0].mxu0
      %v783 = vpop.f32.mrb[0].mxu0
      %784 = vdwg.mxu0
      %785 = vmatprep.subr.bf16.mxu0 %v683
      %786 = vmatpush1.bf16.msra.mxu0 %v682
      %787 = vmatprep.subr.bf16.mxu0 %v687
      %788 = vmatpush1.bf16.msra.mxu0 %v686
      %789 = vmatprep.subr.bf16.mxu0 %v691
      %790 = vmatpush1.bf16.msra.mxu0 %v690
      %791 = vmatprep.subr.bf16.mxu0 %v695
      %792 = vmatpush1.bf16.msra.mxu0 %v694
      %793 = vmatprep.subr.bf16.mxu0 %v699
      %794 = vmatpush1.bf16.msra.mxu0 %v698
      %795 = vmatprep.subr.bf16.mxu0 %v703
      %796 = vmatpush1.bf16.msra.mxu0 %v702
      %797 = vmatprep.subr.bf16.mxu0 %v707
      %798 = vmatpush1.bf16.msra.mxu0 %v706
      %799 = vmatprep.subr.bf16.mxu0 %v711
      %800 = vmatpush1.bf16.msra.mxu0 %v710
      %801 = vmatprep.subr.bf16.mxu0 0
      %802 = vmatpush1.bf16.msra.mxu0 0
      %803 = vmatprep.subr.bf16.mxu0 0
      %804 = vmatpush1.bf16.msra.mxu0 0
      %805 = vmatprep.subr.bf16.mxu0 0
      %806 = vmatpush1.bf16.msra.mxu0 0
      %807 = vmatprep.subr.bf16.mxu0 0
      %808 = vmatpush1.bf16.msra.mxu0 0
      %809 = vmatprep.subr.bf16.mxu0 0
      %810 = vmatpush1.bf16.msra.mxu0 0
      %811 = vmatprep.subr.bf16.mxu0 0
      %812 = vmatpush1.bf16.msra.mxu0 0
      %813 = vmatprep.subr.bf16.mxu0 0
      %814 = vmatpush1.bf16.msra.mxu0 0
      %815 = vmatprep.subr.bf16.mxu0 0
      %816 = vmatpush1.bf16.msra.mxu0 0
      %817 = vmatprep.mubr.bf16.mxu0 0
      %818 = vmatmul.mubr.bf16.gmra.mrb[0].mxu0 %v551
      %v819 = vpop.f32.mrb[0].mxu0
      %v820 = vadd.f32 0.0, %v819
      %v821 = vpop.f32.mrb[0].mxu0
      %v822 = vadd.f32 0.0, %v821
      %v823 = vpop.f32.mrb[0].mxu0
      %v824 = vpop.f32.mrb[0].mxu0
      %825 = vdwg.mxu0
      %v826 = vadd.f32 %v546, %v779
      %v827 = vadd.f32 %v547, %v781
      %v828 = vadd.f32 %v548, %v820
      %v829 = vadd.f32 %v549, %v822
      %v830 = vld [vmem:[#allocation3] sm:$0xff]
      %v831 = vxor.u32 %v826, 2147483648
      %v832 = vmul.f32 %v831, 1.442695
      %v833 = vpow.pop %v832
      %v834 = vadd.f32 %v833, 1.0
      %v835 = vrcp.pop %v834
      %v836 = vmul.f32 1.0, %v835
      %v837 = vxor.u32 %v827, 2147483648
      %v838 = vmul.f32 %v837, 1.442695
      %v839 = vpow.pop %v838
      %v840 = vadd.f32 %v839, 1.0
      %v841 = vrcp.pop %v840
      %v842 = vmul.f32 1.0, %v841
      %v843 = vtanh.pop %v828
      %v844 = vxor.u32 %v829, 2147483648
      %v845 = vmul.f32 %v844, 1.442695
      %v846 = vpow.pop %v845
      %v847 = vadd.f32 %v846, 1.0
      %v848 = vrcp.pop %v847
      %v849 = vmul.f32 1.0, %v848
      %v850 = vmul.f32 %v842, %v830
      %v851 = vmul.f32 %v836, %v843
      %v852 = vadd.f32 %v850, %v851
      %v853 = vtanh.pop %v852
      %v854 = vmul.f32 %v849, %v853
      %855 = vst [vmem:[#allocation2] sm:$0xff] %v854
      %856 = vst [vmem:[#allocation3] sm:$0xff] %v852
      %857 = vst [vmem:[%s528] sm:$0xff] %v854
      %p858 = scmp.eq.s32.totalorder %s31, 4
      // Predicated region
      $region85: #{hierachical_forward_train.6} parent=79 // pred_check
        %p859 = pneg %p858
      $region86: #{hierachical_forward_train.6} parent=79 // pred_check_branch
        %861 = sbr.rel (%p859) target = $region88
      $region87: #{hierachical_forward_train.6} parent=79 // pred_region
        %v862 = vpack.c.bf16 %v854, %v854
        %v863 = vld [vmem:[%s7] sm:$0xff]
        %v864 = vld [vmem:[%s7 + $0x8] sm:$0xff]
        %v865 = vld [vmem:[%s7 + $0x10] sm:$0xff]
        %v866 = vld [vmem:[%s7 + $0x18] sm:$0xff]
        %v867 = vld [vmem:[%s7 + $0x20] sm:$0xff]
        %v868 = vld [vmem:[%s7 + $0x28] sm:$0xff]
        %v869 = vld [vmem:[%s7 + $0x30] sm:$0xff]
        %v870 = vld [vmem:[%s7 + $0x38] sm:$0xff]
        %v871 = vld [vmem:[%s7 + $0x40] sm:$0xff]
        %v872 = vld [vmem:[%s7 + $0x48] sm:$0xff]
        %v873 = vld [vmem:[%s7 + $0x50] sm:$0xff]
        %v874 = vld [vmem:[%s7 + $0x58] sm:$0xff]
        %v875 = vld [vmem:[%s7 + $0x60] sm:$0xff]
        %v876 = vld [vmem:[%s7 + $0x68] sm:$0xff]
        %v877 = vld [vmem:[%s7 + $0x70] sm:$0xff]
        %v878 = vld [vmem:[%s7 + $0x78] sm:$0xff]
        %v879 = vld [vmem:[%s7 + $0x80] sm:$0xff]
        %v880 = vld [vmem:[%s7 + $0x88] sm:$0xff]
        %v881 = vld [vmem:[%s7 + $0x90] sm:$0xff]
        %v882 = vld [vmem:[%s7 + $0x98] sm:$0xff]
        %v883 = vld [vmem:[%s7 + $0xa0] sm:$0xff]
        %v884 = vld [vmem:[%s7 + $0xa8] sm:$0xff]
        %v885 = vld [vmem:[%s7 + $0xb0] sm:$0xff]
        %v886 = vld [vmem:[%s7 + $0xb8] sm:$0xff]
        %v887 = vld [vmem:[%s7 + $0xc0] sm:$0xff]
        %v888 = vld [vmem:[%s7 + $0xc8] sm:$0xff]
        %v889 = vld [vmem:[%s7 + $0xd0] sm:$0xff]
        %v890 = vld [vmem:[%s7 + $0xd8] sm:$0xff]
        %v891 = vld [vmem:[%s7 + $0xe0] sm:$0xff]
        %v892 = vld [vmem:[%s7 + $0xe8] sm:$0xff]
        %v893 = vld [vmem:[%s7 + $0xf0] sm:$0xff]
        %v894 = vld [vmem:[%s7 + $0xf8] sm:$0xff]
        %v895 = vld [vmem:[#allocation4] sm:$0xff]
        %v896 = vpack.c.bf16 %v895, %v895
        %v897 = vld [vmem:[%s8] sm:$0xff]
        %v898 = vld [vmem:[%s8 + $0x8] sm:$0xff]
        %v899 = vld [vmem:[%s8 + $0x10] sm:$0xff]
        %v900 = vld [vmem:[%s8 + $0x18] sm:$0xff]
        %v901 = vld [vmem:[%s8 + $0x20] sm:$0xff]
        %v902 = vld [vmem:[%s8 + $0x28] sm:$0xff]
        %v903 = vld [vmem:[%s8 + $0x30] sm:$0xff]
        %v904 = vld [vmem:[%s8 + $0x38] sm:$0xff]
        %v905 = vld [vmem:[%s8 + $0x40] sm:$0xff]
        %v906 = vld [vmem:[%s8 + $0x48] sm:$0xff]
        %v907 = vld [vmem:[%s8 + $0x50] sm:$0xff]
        %v908 = vld [vmem:[%s8 + $0x58] sm:$0xff]
        %v909 = vld [vmem:[%s8 + $0x60] sm:$0xff]
        %v910 = vld [vmem:[%s8 + $0x68] sm:$0xff]
        %v911 = vld [vmem:[%s8 + $0x70] sm:$0xff]
        %v912 = vld [vmem:[%s8 + $0x78] sm:$0xff]
        %v913 = vld [vmem:[%s8 + $0x80] sm:$0xff]
        %v914 = vld [vmem:[%s8 + $0x88] sm:$0xff]
        %v915 = vld [vmem:[%s8 + $0x90] sm:$0xff]
        %v916 = vld [vmem:[%s8 + $0x98] sm:$0xff]
        %v917 = vld [vmem:[%s8 + $0xa0] sm:$0xff]
        %v918 = vld [vmem:[%s8 + $0xa8] sm:$0xff]
        %v919 = vld [vmem:[%s8 + $0xb0] sm:$0xff]
        %v920 = vld [vmem:[%s8 + $0xb8] sm:$0xff]
        %v921 = vld [vmem:[%s8 + $0xc0] sm:$0xff]
        %v922 = vld [vmem:[%s8 + $0xc8] sm:$0xff]
        %v923 = vld [vmem:[%s8 + $0xd0] sm:$0xff]
        %v924 = vld [vmem:[%s8 + $0xd8] sm:$0xff]
        %v925 = vld [vmem:[%s8 + $0xe0] sm:$0xff]
        %v926 = vld [vmem:[%s8 + $0xe8] sm:$0xff]
        %v927 = vld [vmem:[%s8 + $0xf0] sm:$0xff]
        %v928 = vld [vmem:[%s8 + $0xf8] sm:$0xff]
        %v961 = vunpack.c.l.b16 %v897
        %v962 = vunpack.c.h.b16 %v897
        %v963 = vunpack.c.l.b16 %v898
        %v964 = vunpack.c.h.b16 %v898
        %v965 = vunpack.c.l.b16 %v899
        %v966 = vunpack.c.h.b16 %v899
        %v967 = vunpack.c.l.b16 %v900
        %v968 = vunpack.c.h.b16 %v900
        %v969 = vunpack.c.l.b16 %v901
        %v970 = vunpack.c.h.b16 %v901
        %v971 = vunpack.c.l.b16 %v902
        %v972 = vunpack.c.h.b16 %v902
        %v973 = vunpack.c.l.b16 %v903
        %v974 = vunpack.c.h.b16 %v903
        %v975 = vunpack.c.l.b16 %v904
        %v976 = vunpack.c.h.b16 %v904
        %v977 = vunpack.c.l.b16 %v905
        %v978 = vunpack.c.h.b16 %v905
        %v979 = vunpack.c.l.b16 %v906
        %v980 = vunpack.c.h.b16 %v906
        %v981 = vunpack.c.l.b16 %v907
        %v982 = vunpack.c.h.b16 %v907
        %v983 = vunpack.c.l.b16 %v908
        %v984 = vunpack.c.h.b16 %v908
        %v985 = vunpack.c.l.b16 %v909
        %v986 = vunpack.c.h.b16 %v909
        %v987 = vunpack.c.l.b16 %v910
        %v988 = vunpack.c.h.b16 %v910
        %v989 = vunpack.c.l.b16 %v911
        %v990 = vunpack.c.h.b16 %v911
        %v991 = vunpack.c.l.b16 %v912
        %v992 = vunpack.c.h.b16 %v912
        %v993 = vunpack.c.l.b16 %v913
        %v994 = vunpack.c.h.b16 %v913
        %v995 = vunpack.c.l.b16 %v914
        %v996 = vunpack.c.h.b16 %v914
        %v997 = vunpack.c.l.b16 %v915
        %v998 = vunpack.c.h.b16 %v915
        %v999 = vunpack.c.l.b16 %v916
        %v1000 = vunpack.c.h.b16 %v916
        %v1001 = vunpack.c.l.b16 %v917
        %v1002 = vunpack.c.h.b16 %v917
        %v1003 = vunpack.c.l.b16 %v918
        %v1004 = vunpack.c.h.b16 %v918
        %v1005 = vunpack.c.l.b16 %v919
        %v1006 = vunpack.c.h.b16 %v919
        %v1007 = vunpack.c.l.b16 %v920
        %v1008 = vunpack.c.h.b16 %v920
        %v1009 = vunpack.c.l.b16 %v921
        %v1010 = vunpack.c.h.b16 %v921
        %v1011 = vunpack.c.l.b16 %v922
        %v1012 = vunpack.c.h.b16 %v922
        %v1013 = vunpack.c.l.b16 %v923
        %v1014 = vunpack.c.h.b16 %v923
        %v1015 = vunpack.c.l.b16 %v924
        %v1016 = vunpack.c.h.b16 %v924
        %v1017 = vunpack.c.l.b16 %v925
        %v1018 = vunpack.c.h.b16 %v925
        %v1019 = vunpack.c.l.b16 %v926
        %v1020 = vunpack.c.h.b16 %v926
        %v1021 = vunpack.c.l.b16 %v927
        %v1022 = vunpack.c.h.b16 %v927
        %v1023 = vunpack.c.l.b16 %v928
        %v1024 = vunpack.c.h.b16 %v928
        %v1025 = vpack.c.b16 %v965, %v961
        %v1026 = vpack.c.b16 %v966, %v962
        %v1027 = vpack.c.b16 %v967, %v963
        %v1028 = vpack.c.b16 %v968, %v964
        %v1029 = vpack.c.b16 %v973, %v969
        %v1030 = vpack.c.b16 %v974, %v970
        %v1031 = vpack.c.b16 %v975, %v971
        %v1032 = vpack.c.b16 %v976, %v972
        %v1033 = vpack.c.b16 %v981, %v977
        %v1034 = vpack.c.b16 %v982, %v978
        %v1035 = vpack.c.b16 %v983, %v979
        %v1036 = vpack.c.b16 %v984, %v980
        %v1037 = vpack.c.b16 %v989, %v985
        %v1038 = vpack.c.b16 %v990, %v986
        %v1039 = vpack.c.b16 %v991, %v987
        %v1040 = vpack.c.b16 %v992, %v988
        %v1041 = vpack.c.b16 %v997, %v993
        %v1042 = vpack.c.b16 %v998, %v994
        %v1043 = vpack.c.b16 %v999, %v995
        %v1044 = vpack.c.b16 %v1000, %v996
        %v1045 = vpack.c.b16 %v1005, %v1001
        %v1046 = vpack.c.b16 %v1006, %v1002
        %v1047 = vpack.c.b16 %v1007, %v1003
        %v1048 = vpack.c.b16 %v1008, %v1004
        %v1049 = vpack.c.b16 %v1013, %v1009
        %v1050 = vpack.c.b16 %v1014, %v1010
        %v1051 = vpack.c.b16 %v1015, %v1011
        %v1052 = vpack.c.b16 %v1016, %v1012
        %v1053 = vpack.c.b16 %v1021, %v1017
        %v1054 = vpack.c.b16 %v1022, %v1018
        %v1055 = vpack.c.b16 %v1023, %v1019
        %v1056 = vpack.c.b16 %v1024, %v1020
        %1089 = vmatprep.subr.bf16.mxu0 %v1026
        %1090 = vmatpush1.bf16.msra.mxu0 %v1025
        %1091 = vmatprep.subr.bf16.mxu0 %v1030
        %1092 = vmatpush1.bf16.msra.mxu0 %v1029
        %1093 = vmatprep.subr.bf16.mxu0 %v1034
        %1094 = vmatpush1.bf16.msra.mxu0 %v1033
        %1095 = vmatprep.subr.bf16.mxu0 %v1038
        %1096 = vmatpush1.bf16.msra.mxu0 %v1037
        %1097 = vmatprep.subr.bf16.mxu0 %v1042
        %1098 = vmatpush1.bf16.msra.mxu0 %v1041
        %1099 = vmatprep.subr.bf16.mxu0 %v1046
        %1100 = vmatpush1.bf16.msra.mxu0 %v1045
        %1101 = vmatprep.subr.bf16.mxu0 %v1050
        %1102 = vmatpush1.bf16.msra.mxu0 %v1049
        %1103 = vmatprep.subr.bf16.mxu0 %v1054
        %1104 = vmatpush1.bf16.msra.mxu0 %v1053
        %1105 = vmatprep.subr.bf16.mxu0 0
        %1106 = vmatpush1.bf16.msra.mxu0 0
        %1107 = vmatprep.subr.bf16.mxu0 0
        %1108 = vmatpush1.bf16.msra.mxu0 0
        %1109 = vmatprep.subr.bf16.mxu0 0
        %1110 = vmatpush1.bf16.msra.mxu0 0
        %1111 = vmatprep.subr.bf16.mxu0 0
        %1112 = vmatpush1.bf16.msra.mxu0 0
        %1113 = vmatprep.subr.bf16.mxu0 0
        %1114 = vmatpush1.bf16.msra.mxu0 0
        %1115 = vmatprep.subr.bf16.mxu0 0
        %1116 = vmatpush1.bf16.msra.mxu0 0
        %1117 = vmatprep.subr.bf16.mxu0 0
        %1118 = vmatpush1.bf16.msra.mxu0 0
        %1119 = vmatprep.subr.bf16.mxu0 0
        %1120 = vmatpush1.bf16.msra.mxu0 0
        %1121 = vmatprep.mubr.bf16.mxu0 0
        %1122 = vmatmul.mubr.bf16.gmra.mrb[0].mxu0 %v896
        %v1123 = vpop.f32.mrb[0].mxu0
        %v1124 = vadd.f32 0.0, %v1123
        %v1125 = vpop.f32.mrb[0].mxu0
        %v1126 = vadd.f32 0.0, %v1125
        %v1127 = vpop.f32.mrb[0].mxu0
        %v1128 = vpop.f32.mrb[0].mxu0
        %1129 = vdwg.mxu0
        %1130 = vmatprep.subr.bf16.mxu0 %v1028
        %1131 = vmatpush1.bf16.msra.mxu0 %v1027
        %1132 = vmatprep.subr.bf16.mxu0 %v1032
        %1133 = vmatpush1.bf16.msra.mxu0 %v1031
        %1134 = vmatprep.subr.bf16.mxu0 %v1036
        %1135 = vmatpush1.bf16.msra.mxu0 %v1035
        %1136 = vmatprep.subr.bf16.mxu0 %v1040
        %1137 = vmatpush1.bf16.msra.mxu0 %v1039
        %1138 = vmatprep.subr.bf16.mxu0 %v1044
        %1139 = vmatpush1.bf16.msra.mxu0 %v1043
        %1140 = vmatprep.subr.bf16.mxu0 %v1048
        %1141 = vmatpush1.bf16.msra.mxu0 %v1047
        %1142 = vmatprep.subr.bf16.mxu0 %v1052
        %1143 = vmatpush1.bf16.msra.mxu0 %v1051
        %1144 = vmatprep.subr.bf16.mxu0 %v1056
        %1145 = vmatpush1.bf16.msra.mxu0 %v1055
        %1146 = vmatprep.subr.bf16.mxu0 0
        %1147 = vmatpush1.bf16.msra.mxu0 0
        %1148 = vmatprep.subr.bf16.mxu0 0
        %1149 = vmatpush1.bf16.msra.mxu0 0
        %1150 = vmatprep.subr.bf16.mxu0 0
        %1151 = vmatpush1.bf16.msra.mxu0 0
        %1152 = vmatprep.subr.bf16.mxu0 0
        %1153 = vmatpush1.bf16.msra.mxu0 0
        %1154 = vmatprep.subr.bf16.mxu0 0
        %1155 = vmatpush1.bf16.msra.mxu0 0
        %1156 = vmatprep.subr.bf16.mxu0 0
        %1157 = vmatpush1.bf16.msra.mxu0 0
        %1158 = vmatprep.subr.bf16.mxu0 0
        %1159 = vmatpush1.bf16.msra.mxu0 0
        %1160 = vmatprep.subr.bf16.mxu0 0
        %1161 = vmatpush1.bf16.msra.mxu0 0
        %1162 = vmatprep.mubr.bf16.mxu0 0
        %1163 = vmatmul.mubr.bf16.gmra.mrb[0].mxu0 %v896
        %v1164 = vpop.f32.mrb[0].mxu0
        %v1165 = vadd.f32 0.0, %v1164
        %v1166 = vpop.f32.mrb[0].mxu0
        %v1167 = vadd.f32 0.0, %v1166
        %v1168 = vpop.f32.mrb[0].mxu0
        %v1169 = vpop.f32.mrb[0].mxu0
        %1170 = vdwg.mxu0
        %v1203 = vunpack.c.l.b16 %v863
        %v1204 = vunpack.c.h.b16 %v863
        %v1205 = vunpack.c.l.b16 %v864
        %v1206 = vunpack.c.h.b16 %v864
        %v1207 = vunpack.c.l.b16 %v865
        %v1208 = vunpack.c.h.b16 %v865
        %v1209 = vunpack.c.l.b16 %v866
        %v1210 = vunpack.c.h.b16 %v866
        %v1211 = vunpack.c.l.b16 %v867
        %v1212 = vunpack.c.h.b16 %v867
        %v1213 = vunpack.c.l.b16 %v868
        %v1214 = vunpack.c.h.b16 %v868
        %v1215 = vunpack.c.l.b16 %v869
        %v1216 = vunpack.c.h.b16 %v869
        %v1217 = vunpack.c.l.b16 %v870
        %v1218 = vunpack.c.h.b16 %v870
        %v1219 = vunpack.c.l.b16 %v871
        %v1220 = vunpack.c.h.b16 %v871
        %v1221 = vunpack.c.l.b16 %v872
        %v1222 = vunpack.c.h.b16 %v872
        %v1223 = vunpack.c.l.b16 %v873
        %v1224 = vunpack.c.h.b16 %v873
        %v1225 = vunpack.c.l.b16 %v874
        %v1226 = vunpack.c.h.b16 %v874
        %v1227 = vunpack.c.l.b16 %v875
        %v1228 = vunpack.c.h.b16 %v875
        %v1229 = vunpack.c.l.b16 %v876
        %v1230 = vunpack.c.h.b16 %v876
        %v1231 = vunpack.c.l.b16 %v877
        %v1232 = vunpack.c.h.b16 %v877
        %v1233 = vunpack.c.l.b16 %v878
        %v1234 = vunpack.c.h.b16 %v878
        %v1235 = vunpack.c.l.b16 %v879
        %v1236 = vunpack.c.h.b16 %v879
        %v1237 = vunpack.c.l.b16 %v880
        %v1238 = vunpack.c.h.b16 %v880
        %v1239 = vunpack.c.l.b16 %v881
        %v1240 = vunpack.c.h.b16 %v881
        %v1241 = vunpack.c.l.b16 %v882
        %v1242 = vunpack.c.h.b16 %v882
        %v1243 = vunpack.c.l.b16 %v883
        %v1244 = vunpack.c.h.b16 %v883
        %v1245 = vunpack.c.l.b16 %v884
        %v1246 = vunpack.c.h.b16 %v884
        %v1247 = vunpack.c.l.b16 %v885
        %v1248 = vunpack.c.h.b16 %v885
        %v1249 = vunpack.c.l.b16 %v886
        %v1250 = vunpack.c.h.b16 %v886
        %v1251 = vunpack.c.l.b16 %v887
        %v1252 = vunpack.c.h.b16 %v887
        %v1253 = vunpack.c.l.b16 %v888
        %v1254 = vunpack.c.h.b16 %v888
        %v1255 = vunpack.c.l.b16 %v889
        %v1256 = vunpack.c.h.b16 %v889
        %v1257 = vunpack.c.l.b16 %v890
        %v1258 = vunpack.c.h.b16 %v890
        %v1259 = vunpack.c.l.b16 %v891
        %v1260 = vunpack.c.h.b16 %v891
        %v1261 = vunpack.c.l.b16 %v892
        %v1262 = vunpack.c.h.b16 %v892
        %v1263 = vunpack.c.l.b16 %v893
        %v1264 = vunpack.c.h.b16 %v893
        %v1265 = vunpack.c.l.b16 %v894
        %v1266 = vunpack.c.h.b16 %v894
        %v1267 = vpack.c.b16 %v1207, %v1203
        %v1268 = vpack.c.b16 %v1208, %v1204
        %v1269 = vpack.c.b16 %v1209, %v1205
        %v1270 = vpack.c.b16 %v1210, %v1206
        %v1271 = vpack.c.b16 %v1215, %v1211
        %v1272 = vpack.c.b16 %v1216, %v1212
        %v1273 = vpack.c.b16 %v1217, %v1213
        %v1274 = vpack.c.b16 %v1218, %v1214
        %v1275 = vpack.c.b16 %v1223, %v1219
        %v1276 = vpack.c.b16 %v1224, %v1220
        %v1277 = vpack.c.b16 %v1225, %v1221
        %v1278 = vpack.c.b16 %v1226, %v1222
        %v1279 = vpack.c.b16 %v1231, %v1227
        %v1280 = vpack.c.b16 %v1232, %v1228
        %v1281 = vpack.c.b16 %v1233, %v1229
        %v1282 = vpack.c.b16 %v1234, %v1230
        %v1283 = vpack.c.b16 %v1239, %v1235
        %v1284 = vpack.c.b16 %v1240, %v1236
        %v1285 = vpack.c.b16 %v1241, %v1237
        %v1286 = vpack.c.b16 %v1242, %v1238
        %v1287 = vpack.c.b16 %v1247, %v1243
        %v1288 = vpack.c.b16 %v1248, %v1244
        %v1289 = vpack.c.b16 %v1249, %v1245
        %v1290 = vpack.c.b16 %v1250, %v1246
        %v1291 = vpack.c.b16 %v1255, %v1251
        %v1292 = vpack.c.b16 %v1256, %v1252
        %v1293 = vpack.c.b16 %v1257, %v1253
        %v1294 = vpack.c.b16 %v1258, %v1254
        %v1295 = vpack.c.b16 %v1263, %v1259
        %v1296 = vpack.c.b16 %v1264, %v1260
        %v1297 = vpack.c.b16 %v1265, %v1261
        %v1298 = vpack.c.b16 %v1266, %v1262
        %1331 = vmatprep.subr.bf16.mxu0 %v1268
        %1332 = vmatpush1.bf16.msra.mxu0 %v1267
        %1333 = vmatprep.subr.bf16.mxu0 %v1272
        %1334 = vmatpush1.bf16.msra.mxu0 %v1271
        %1335 = vmatprep.subr.bf16.mxu0 %v1276
        %1336 = vmatpush1.bf16.msra.mxu0 %v1275
        %1337 = vmatprep.subr.bf16.mxu0 %v1280
        %1338 = vmatpush1.bf16.msra.mxu0 %v1279
        %1339 = vmatprep.subr.bf16.mxu0 %v1284
        %1340 = vmatpush1.bf16.msra.mxu0 %v1283
        %1341 = vmatprep.subr.bf16.mxu0 %v1288
        %1342 = vmatpush1.bf16.msra.mxu0 %v1287
        %1343 = vmatprep.subr.bf16.mxu0 %v1292
        %1344 = vmatpush1.bf16.msra.mxu0 %v1291
        %1345 = vmatprep.subr.bf16.mxu0 %v1296
        %1346 = vmatpush1.bf16.msra.mxu0 %v1295
        %1347 = vmatprep.subr.bf16.mxu0 0
        %1348 = vmatpush1.bf16.msra.mxu0 0
        %1349 = vmatprep.subr.bf16.mxu0 0
        %1350 = vmatpush1.bf16.msra.mxu0 0
        %1351 = vmatprep.subr.bf16.mxu0 0
        %1352 = vmatpush1.bf16.msra.mxu0 0
        %1353 = vmatprep.subr.bf16.mxu0 0
        %1354 = vmatpush1.bf16.msra.mxu0 0
        %1355 = vmatprep.subr.bf16.mxu0 0
        %1356 = vmatpush1.bf16.msra.mxu0 0
        %1357 = vmatprep.subr.bf16.mxu0 0
        %1358 = vmatpush1.bf16.msra.mxu0 0
        %1359 = vmatprep.subr.bf16.mxu0 0
        %1360 = vmatpush1.bf16.msra.mxu0 0
        %1361 = vmatprep.subr.bf16.mxu0 0
        %1362 = vmatpush1.bf16.msra.mxu0 0
        %1363 = vmatprep.mubr.bf16.mxu0 0
        %1364 = vmatmul.mubr.bf16.gmra.mrb[0].mxu0 %v862
        %v1365 = vpop.f32.mrb[0].mxu0
        %v1366 = vadd.f32 %v1124, %v1365
        %v1367 = vpop.f32.mrb[0].mxu0
        %v1368 = vadd.f32 %v1126, %v1367
        %v1369 = vpop.f32.mrb[0].mxu0
        %v1370 = vpop.f32.mrb[0].mxu0
        %1371 = vdwg.mxu0
        %1372 = vmatprep.subr.bf16.mxu0 %v1270
        %1373 = vmatpush1.bf16.msra.mxu0 %v1269
        %1374 = vmatprep.subr.bf16.mxu0 %v1274
        %1375 = vmatpush1.bf16.msra.mxu0 %v1273
        %1376 = vmatprep.subr.bf16.mxu0 %v1278
        %1377 = vmatpush1.bf16.msra.mxu0 %v1277
        %1378 = vmatprep.subr.bf16.mxu0 %v1282
        %1379 = vmatpush1.bf16.msra.mxu0 %v1281
        %1380 = vmatprep.subr.bf16.mxu0 %v1286
        %1381 = vmatpush1.bf16.msra.mxu0 %v1285
        %1382 = vmatprep.subr.bf16.mxu0 %v1290
        %1383 = vmatpush1.bf16.msra.mxu0 %v1289
        %1384 = vmatprep.subr.bf16.mxu0 %v1294
        %1385 = vmatpush1.bf16.msra.mxu0 %v1293
        %1386 = vmatprep.subr.bf16.mxu0 %v1298
        %1387 = vmatpush1.bf16.msra.mxu0 %v1297
        %1388 = vmatprep.subr.bf16.mxu0 0
        %1389 = vmatpush1.bf16.msra.mxu0 0
        %1390 = vmatprep.subr.bf16.mxu0 0
        %1391 = vmatpush1.bf16.msra.mxu0 0
        %1392 = vmatprep.subr.bf16.mxu0 0
        %1393 = vmatpush1.bf16.msra.mxu0 0
        %1394 = vmatprep.subr.bf16.mxu0 0
        %1395 = vmatpush1.bf16.msra.mxu0 0
        %1396 = vmatprep.subr.bf16.mxu0 0
        %1397 = vmatpush1.bf16.msra.mxu0 0
        %1398 = vmatprep.subr.bf16.mxu0 0
        %1399 = vmatpush1.bf16.msra.mxu0 0
        %1400 = vmatprep.subr.bf16.mxu0 0
        %1401 = vmatpush1.bf16.msra.mxu0 0
        %1402 = vmatprep.subr.bf16.mxu0 0
        %1403 = vmatpush1.bf16.msra.mxu0 0
        %1404 = vmatprep.mubr.bf16.mxu0 0
        %1405 = vmatmul.mubr.bf16.gmra.mrb[0].mxu0 %v862
        %v1406 = vpop.f32.mrb[0].mxu0
        %v1407 = vadd.f32 %v1165, %v1406
        %v1408 = vpop.f32.mrb[0].mxu0
        %v1409 = vadd.f32 %v1167, %v1408
        %v1410 = vpop.f32.mrb[0].mxu0
        %v1411 = vpop.f32.mrb[0].mxu0
        %1412 = vdwg.mxu0
        %v1413 = vld [vmem:[%s9] sm:$0xf]
        %v1415 = vlaneseq
        %v1416 = vshrl.u32 %v1415, 7
        %v1417 = vsub.s32 0, %v1416
        %v1418 = vrot.slane %v1413, %v1417
        %v1419 = vlaneseq
        %v1420 = vshrl.u32 %v1419, 7
        %v1421 = vsub.s32 1, %v1420
        %v1422 = vrot.slane %v1413, %v1421
        %v1423 = vlaneseq
        %v1424 = vshrl.u32 %v1423, 7
        %v1425 = vsub.s32 2, %v1424
        %v1426 = vrot.slane %v1413, %v1425
        %v1427 = vlaneseq
        %v1428 = vshrl.u32 %v1427, 7
        %v1429 = vsub.s32 3, %v1428
        %v1430 = vrot.slane %v1413, %v1429
        %v1435 = vadd.f32 %v1366, %v1418
        %v1436 = vadd.f32 %v1368, %v1422
        %v1437 = vadd.f32 %v1407, %v1426
        %v1438 = vadd.f32 %v1409, %v1430
        %v1439 = vld [vmem:[#allocation5] sm:$0xff]
        %v1440 = vxor.u32 %v1435, 2147483648
        %v1441 = vmul.f32 %v1440, 1.442695
        %v1442 = vpow.pop %v1441
        %v1443 = vadd.f32 %v1442, 1.0
        %v1444 = vrcp.pop %v1443
        %v1445 = vmul.f32 1.0, %v1444
        %v1446 = vxor.u32 %v1436, 2147483648
        %v1447 = vmul.f32 %v1446, 1.442695
        %v1448 = vpow.pop %v1447
        %v1449 = vadd.f32 %v1448, 1.0
        %v1450 = vrcp.pop %v1449
        %v1451 = vmul.f32 1.0, %v1450
        %v1452 = vtanh.pop %v1437
        %v1453 = vxor.u32 %v1438, 2147483648
        %v1454 = vmul.f32 %v1453, 1.442695
        %v1455 = vpow.pop %v1454
        %v1456 = vadd.f32 %v1455, 1.0
        %v1457 = vrcp.pop %v1456
        %v1458 = vmul.f32 1.0, %v1457
        %v1459 = vmul.f32 %v1451, %v1439
        %v1460 = vmul.f32 %v1445, %v1452
        %v1461 = vadd.f32 %v1459, %v1460
        %v1462 = vtanh.pop %v1461
        %v1463 = vmul.f32 %v1458, %v1462
        %v1464 = vpack.c.bf16 %v1463, %v1463
        %v1465 = vld [vmem:[%s10] sm:$0xf]
        %v1466 = vld [vmem:[%s10 + $0x4] sm:$0xf]
        %v1467 = vld [vmem:[%s10 + $0x8] sm:$0xf]
        %v1468 = vld [vmem:[%s10 + $0xc] sm:$0xf]
        %v1469 = vld [vmem:[%s10 + $0x10] sm:$0xf]
        %v1470 = vld [vmem:[%s10 + $0x14] sm:$0xf]
        %v1471 = vld [vmem:[%s10 + $0x18] sm:$0xf]
        %v1472 = vld [vmem:[%s10 + $0x1c] sm:$0xf]
        %v1473 = vld [vmem:[%s10 + $0x20] sm:$0xf]
        %v1474 = vld [vmem:[%s10 + $0x24] sm:$0xf]
        %v1475 = vld [vmem:[%s10 + $0x28] sm:$0xf]
        %v1476 = vld [vmem:[%s10 + $0x2c] sm:$0xf]
        %v1477 = vld [vmem:[%s10 + $0x30] sm:$0xf]
        %v1478 = vld [vmem:[%s10 + $0x34] sm:$0xf]
        %v1479 = vld [vmem:[%s10 + $0x38] sm:$0xf]
        %v1480 = vld [vmem:[%s10 + $0x3c] sm:$0xf]
        %v1497 = vunpack.c.l.b16 %v1465
        %v1498 = vunpack.c.l.b16 %v1466
        %v1499 = vunpack.c.l.b16 %v1467
        %v1500 = vunpack.c.l.b16 %v1468
        %v1501 = vunpack.c.l.b16 %v1469
        %v1502 = vunpack.c.l.b16 %v1470
        %v1503 = vunpack.c.l.b16 %v1471
        %v1504 = vunpack.c.l.b16 %v1472
        %v1505 = vunpack.c.l.b16 %v1473
        %v1506 = vunpack.c.l.b16 %v1474
        %v1507 = vunpack.c.l.b16 %v1475
        %v1508 = vunpack.c.l.b16 %v1476
        %v1509 = vunpack.c.l.b16 %v1477
        %v1510 = vunpack.c.l.b16 %v1478
        %v1511 = vunpack.c.l.b16 %v1479
        %v1512 = vunpack.c.l.b16 %v1480
        %v1513 = vpack.c.b16 %v1498, %v1497
        %v1514 = vpack.c.b16 %v1500, %v1499
        %v1515 = vpack.c.b16 %v1502, %v1501
        %v1516 = vpack.c.b16 %v1504, %v1503
        %v1517 = vpack.c.b16 %v1506, %v1505
        %v1518 = vpack.c.b16 %v1508, %v1507
        %v1519 = vpack.c.b16 %v1510, %v1509
        %v1520 = vpack.c.b16 %v1512, %v1511
        %1529 = vmatprep.subr.bf16.mxu0 0
        %1530 = vmatpush1.bf16.msra.mxu0 %v1513
        %1531 = vmatprep.subr.bf16.mxu0 0
        %1532 = vmatpush1.bf16.msra.mxu0 %v1514
        %1533 = vmatprep.subr.bf16.mxu0 0
        %1534 = vmatpush1.bf16.msra.mxu0 %v1515
        %1535 = vmatprep.subr.bf16.mxu0 0
        %1536 = vmatpush1.bf16.msra.mxu0 %v1516
        %1537 = vmatprep.subr.bf16.mxu0 0
        %1538 = vmatpush1.bf16.msra.mxu0 %v1517
        %1539 = vmatprep.subr.bf16.mxu0 0
        %1540 = vmatpush1.bf16.msra.mxu0 %v1518
        %1541 = vmatprep.subr.bf16.mxu0 0
        %1542 = vmatpush1.bf16.msra.mxu0 %v1519
        %1543 = vmatprep.subr.bf16.mxu0 0
        %1544 = vmatpush1.bf16.msra.mxu0 %v1520
        %1545 = vmatprep.subr.bf16.mxu0 0
        %1546 = vmatpush1.bf16.msra.mxu0 0
        %1547 = vmatprep.subr.bf16.mxu0 0
        %1548 = vmatpush1.bf16.msra.mxu0 0
        %1549 = vmatprep.subr.bf16.mxu0 0
        %1550 = vmatpush1.bf16.msra.mxu0 0
        %1551 = vmatprep.subr.bf16.mxu0 0
        %1552 = vmatpush1.bf16.msra.mxu0 0
        %1553 = vmatprep.subr.bf16.mxu0 0
        %1554 = vmatpush1.bf16.msra.mxu0 0
        %1555 = vmatprep.subr.bf16.mxu0 0
        %1556 = vmatpush1.bf16.msra.mxu0 0
        %1557 = vmatprep.subr.bf16.mxu0 0
        %1558 = vmatpush1.bf16.msra.mxu0 0
        %1559 = vmatprep.subr.bf16.mxu0 0
        %1560 = vmatpush1.bf16.msra.mxu0 0
        %1561 = vmatprep.mubr.bf16.mxu0 0
        %1562 = vmatmul.mubr.bf16.gmra.mrb[0].mxu0 %v1464
        %v1563 = vpop.f32.mrb[0].mxu0
        %v1564 = vadd.f32 0.0, %v1563
        %v1565 = vpop.f32.mrb[0].mxu0
        %v1566 = vpop.f32.mrb[0].mxu0
        %v1567 = vpop.f32.mrb[0].mxu0
        %1568 = vdwg.mxu0
        %v1569 = vld [vmem:[%s5] sm:$0xff]
        %v1570 = vld [vmem:[%s5 + $0x8] sm:$0xff]
        %v1571 = vld [vmem:[%s5 + $0x10] sm:$0xff]
        %v1572 = vld [vmem:[%s5 + $0x18] sm:$0xff]
        %v1573 = vadd.f32 %v1569, %v1564
        %v1574 = vadd.f32 %v1570, %v1564
        %v1575 = vadd.f32 %v1571, %v1564
        %v1576 = vadd.f32 %v1572, %v1564
        %v1577 = vtanh.pop %v1573
        %v1578 = vtanh.pop %v1574
        %v1579 = vtanh.pop %v1575
        %v1580 = vtanh.pop %v1576
        %v1581 = vld [vmem:[%s11] sm:$0x1]
        %v1583 = vlaneseq
        %v1584 = vshrl.u32 %v1583, 7
        %v1585 = vsub.s32 0, %v1584
        %v1586 = vrot.slane %v1581, %v1585
        %v1588 = vmul.f32 %v1577, %v1586
        %v1589 = vmul.f32 %v1578, %v1586
        %v1590 = vmul.f32 %v1579, %v1586
        %v1591 = vmul.f32 %v1580, %v1586
        %1592 = vadd.xlane.f32.xlu0 %v1588
        %v1593 = vpop.xlane.xlu0 %1592
        %1594 = vadd.xlane.f32.xlu0 %v1589
        %v1595 = vpop.xlane.xlu0 %1594
        %1596 = vadd.xlane.f32.xlu0 %v1590
        %v1597 = vpop.xlane.xlu0 %1596
        %1598 = vadd.xlane.f32.xlu0 %v1591
        %v1599 = vpop.xlane.xlu0 %1598
        %v1600 = vld [vmem:[%s6] sm:$0xff]
        %v1601 = vld [vmem:[%s6 + $0x8] sm:$0xff]
        %v1602 = vld [vmem:[%s6 + $0x10] sm:$0xff]
        %v1603 = vld [vmem:[%s6 + $0x18] sm:$0xff]
        %vm1604 = vcmp.gt.f32.partialorder %v1600, 0.0
        %vm1605 = vcmp.gt.f32.partialorder %v1601, 0.0
        %vm1606 = vcmp.gt.f32.partialorder %v1602, 0.0
        %vm1607 = vcmp.gt.f32.partialorder %v1603, 0.0
        %v1608 = vsel %vm1604, %v1593, -1e+30
        %v1609 = vsel %vm1605, %v1595, -1e+30
        %v1610 = vsel %vm1606, %v1597, -1e+30
        %v1611 = vsel %vm1607, %v1599, -1e+30
        %vm1612 = vcmask 7168
        %v1613 = vsel %vm1612, %v1608, -inf
        %v1614 = vsel %vm1612, %v1609, -inf
        %v1615 = vsel %vm1612, %v1610, -inf
        %v1616 = vsel %vm1612, %v1611, -inf
        %v1617 = vmax.f32 %v1613, %v1614
        %v1618 = vmax.f32 %v1615, %v1616
        %v1619 = vmax.f32 %v1617, %v1618
        %v1620 = vsub.f32 %v1608, %v1619
        %v1621 = vsub.f32 %v1609, %v1619
        %v1622 = vsub.f32 %v1610, %v1619
        %v1623 = vsub.f32 %v1611, %v1619
        %v1624 = vmul.f32 %v1620, 1.442695
        %v1625 = vpow.pop %v1624
        %v1626 = vmul.f32 %v1621, 1.442695
        %v1627 = vpow.pop %v1626
        %v1628 = vmul.f32 %v1622, 1.442695
        %v1629 = vpow.pop %v1628
        %v1630 = vmul.f32 %v1623, 1.442695
        %v1631 = vpow.pop %v1630
        %v1632 = vsel %vm1612, %v1625, 0.0
        %v1633 = vsel %vm1612, %v1627, 0.0
        %v1634 = vadd.f32 %v1632, %v1633
        %v1635 = vsel %vm1612, %v1629, 0.0
        %v1636 = vadd.f32 %v1634, %v1635
        %v1637 = vsel %vm1612, %v1631, 0.0
        %v1638 = vadd.f32 %v1636, %v1637
        %v1639 = vrcp.pop %v1638
        %v1640 = vmul.f32 %v1625, %v1639
        %v1641 = vmul.f32 %v1627, %v1639
        %v1642 = vmul.f32 %v1629, %v1639
        %v1643 = vmul.f32 %v1631, %v1639
        %v1644 = vld [vmem:[%s4] sm:$0xff]
        %v1645 = vld [vmem:[%s4 + $0x8] sm:$0xff]
        %v1646 = vld [vmem:[%s4 + $0x10] sm:$0xff]
        %v1647 = vld [vmem:[%s4 + $0x18] sm:$0xff]
        %1649 = vset.pattern.permute.xlu0 0
        %1650 = vperm.xlu0 %1649, %v1640
        %v1651 = vpop.permute.xlu0 %1650
        %1654 = vset.pattern.permute.xlu0 0
        %1655 = vperm.xlu0 %1654, %v1641
        %v1656 = vpop.permute.xlu0 %1655
        %1659 = vset.pattern.permute.xlu0 0
        %1660 = vperm.xlu0 %1659, %v1642
        %v1661 = vpop.permute.xlu0 %1660
        %1664 = vset.pattern.permute.xlu0 0
        %1665 = vperm.xlu0 %1664, %v1643
        %v1666 = vpop.permute.xlu0 %1665
        %v1668 = vmul.f32 %v1651, %v1644
        %v1669 = vmul.f32 %v1656, %v1645
        %v1670 = vmul.f32 %v1661, %v1646
        %v1671 = vmul.f32 %v1666, %v1647
        %v1672 = vadd.f32 %v1668, %v1669
        %v1673 = vadd.f32 %v1672, %v1670
        %v1674 = vadd.f32 %v1673, %v1671
        %v1675 = vpack.c.bf16 %v1674, %v1674
        %v1676 = vld [vmem:[%s12] sm:$0xf]
        %v1677 = vld [vmem:[%s12 + $0x4] sm:$0xf]
        %v1678 = vld [vmem:[%s12 + $0x8] sm:$0xf]
        %v1679 = vld [vmem:[%s12 + $0xc] sm:$0xf]
        %v1680 = vld [vmem:[%s12 + $0x10] sm:$0xf]
        %v1681 = vld [vmem:[%s12 + $0x14] sm:$0xf]
        %v1682 = vld [vmem:[%s12 + $0x18] sm:$0xf]
        %v1683 = vld [vmem:[%s12 + $0x1c] sm:$0xf]
        %v1684 = vld [vmem:[%s12 + $0x20] sm:$0xf]
        %v1685 = vld [vmem:[%s12 + $0x24] sm:$0xf]
        %v1686 = vld [vmem:[%s12 + $0x28] sm:$0xf]
        %v1687 = vld [vmem:[%s12 + $0x2c] sm:$0xf]
        %v1688 = vld [vmem:[%s12 + $0x30] sm:$0xf]
        %v1689 = vld [vmem:[%s12 + $0x34] sm:$0xf]
        %v1690 = vld [vmem:[%s12 + $0x38] sm:$0xf]
        %v1691 = vld [vmem:[%s12 + $0x3c] sm:$0xf]
        %v1692 = vld [vmem:[%s13] sm:$0xf]
        %v1693 = vld [vmem:[%s13 + $0x4] sm:$0xf]
        %v1694 = vld [vmem:[%s13 + $0x8] sm:$0xf]
        %v1695 = vld [vmem:[%s13 + $0xc] sm:$0xf]
        %v1696 = vld [vmem:[%s13 + $0x10] sm:$0xf]
        %v1697 = vld [vmem:[%s13 + $0x14] sm:$0xf]
        %v1698 = vld [vmem:[%s13 + $0x18] sm:$0xf]
        %v1699 = vld [vmem:[%s13 + $0x1c] sm:$0xf]
        %v1700 = vld [vmem:[%s13 + $0x20] sm:$0xf]
        %v1701 = vld [vmem:[%s13 + $0x24] sm:$0xf]
        %v1702 = vld [vmem:[%s13 + $0x28] sm:$0xf]
        %v1703 = vld [vmem:[%s13 + $0x2c] sm:$0xf]
        %v1704 = vld [vmem:[%s13 + $0x30] sm:$0xf]
        %v1705 = vld [vmem:[%s13 + $0x34] sm:$0xf]
        %v1706 = vld [vmem:[%s13 + $0x38] sm:$0xf]
        %v1707 = vld [vmem:[%s13 + $0x3c] sm:$0xf]
        %v1724 = vunpack.c.l.b16 %v1692
        %v1725 = vunpack.c.l.b16 %v1693
        %v1726 = vunpack.c.l.b16 %v1694
        %v1727 = vunpack.c.l.b16 %v1695
        %v1728 = vunpack.c.l.b16 %v1696
        %v1729 = vunpack.c.l.b16 %v1697
        %v1730 = vunpack.c.l.b16 %v1698
        %v1731 = vunpack.c.l.b16 %v1699
        %v1732 = vunpack.c.l.b16 %v1700
        %v1733 = vunpack.c.l.b16 %v1701
        %v1734 = vunpack.c.l.b16 %v1702
        %v1735 = vunpack.c.l.b16 %v1703
        %v1736 = vunpack.c.l.b16 %v1704
        %v1737 = vunpack.c.l.b16 %v1705
        %v1738 = vunpack.c.l.b16 %v1706
        %v1739 = vunpack.c.l.b16 %v1707
        %v1740 = vpack.c.b16 %v1725, %v1724
        %v1741 = vpack.c.b16 %v1727, %v1726
        %v1742 = vpack.c.b16 %v1729, %v1728
        %v1743 = vpack.c.b16 %v1731, %v1730
        %v1744 = vpack.c.b16 %v1733, %v1732
        %v1745 = vpack.c.b16 %v1735, %v1734
        %v1746 = vpack.c.b16 %v1737, %v1736
        %v1747 = vpack.c.b16 %v1739, %v1738
        %1756 = vmatprep.subr.bf16.mxu0 0
        %1757 = vmatpush1.bf16.msra.mxu0 %v1740
        %1758 = vmatprep.subr.bf16.mxu0 0
        %1759 = vmatpush1.bf16.msra.mxu0 %v1741
        %1760 = vmatprep.subr.bf16.mxu0 0
        %1761 = vmatpush1.bf16.msra.mxu0 %v1742
        %1762 = vmatprep.subr.bf16.mxu0 0
        %1763 = vmatpush1.bf16.msra.mxu0 %v1743
        %1764 = vmatprep.subr.bf16.mxu0 0
        %1765 = vmatpush1.bf16.msra.mxu0 %v1744
        %1766 = vmatprep.subr.bf16.mxu0 0
        %1767 = vmatpush1.bf16.msra.mxu0 %v1745
        %1768 = vmatprep.subr.bf16.mxu0 0
        %1769 = vmatpush1.bf16.msra.mxu0 %v1746
        %1770 = vmatprep.subr.bf16.mxu0 0
        %1771 = vmatpush1.bf16.msra.mxu0 %v1747
        %1772 = vmatprep.subr.bf16.mxu0 0
        %1773 = vmatpush1.bf16.msra.mxu0 0
        %1774 = vmatprep.subr.bf16.mxu0 0
        %1775 = vmatpush1.bf16.msra.mxu0 0
        %1776 = vmatprep.subr.bf16.mxu0 0
        %1777 = vmatpush1.bf16.msra.mxu0 0
        %1778 = vmatprep.subr.bf16.mxu0 0
        %1779 = vmatpush1.bf16.msra.mxu0 0
        %1780 = vmatprep.subr.bf16.mxu0 0
        %1781 = vmatpush1.bf16.msra.mxu0 0
        %1782 = vmatprep.subr.bf16.mxu0 0
        %1783 = vmatpush1.bf16.msra.mxu0 0
        %1784 = vmatprep.subr.bf16.mxu0 0
        %1785 = vmatpush1.bf16.msra.mxu0 0
        %1786 = vmatprep.subr.bf16.mxu0 0
        %1787 = vmatpush1.bf16.msra.mxu0 0
        %1788 = vmatprep.mubr.bf16.mxu0 0
        %1789 = vmatmul.mubr.bf16.gmra.mrb[0].mxu0 %v1464
        %v1790 = vpop.f32.mrb[0].mxu0
        %v1791 = vadd.f32 0.0, %v1790
        %v1792 = vpop.f32.mrb[0].mxu0
        %v1793 = vpop.f32.mrb[0].mxu0
        %v1794 = vpop.f32.mrb[0].mxu0
        %1795 = vdwg.mxu0
        %v1812 = vunpack.c.l.b16 %v1676
        %v1813 = vunpack.c.l.b16 %v1677
        %v1814 = vunpack.c.l.b16 %v1678
        %v1815 = vunpack.c.l.b16 %v1679
        %v1816 = vunpack.c.l.b16 %v1680
        %v1817 = vunpack.c.l.b16 %v1681
        %v1818 = vunpack.c.l.b16 %v1682
        %v1819 = vunpack.c.l.b16 %v1683
        %v1820 = vunpack.c.l.b16 %v1684
        %v1821 = vunpack.c.l.b16 %v1685
        %v1822 = vunpack.c.l.b16 %v1686
        %v1823 = vunpack.c.l.b16 %v1687
        %v1824 = vunpack.c.l.b16 %v1688
        %v1825 = vunpack.c.l.b16 %v1689
        %v1826 = vunpack.c.l.b16 %v1690
        %v1827 = vunpack.c.l.b16 %v1691
        %v1828 = vpack.c.b16 %v1813, %v1812
        %v1829 = vpack.c.b16 %v1815, %v1814
        %v1830 = vpack.c.b16 %v1817, %v1816
        %v1831 = vpack.c.b16 %v1819, %v1818
        %v1832 = vpack.c.b16 %v1821, %v1820
        %v1833 = vpack.c.b16 %v1823, %v1822
        %v1834 = vpack.c.b16 %v1825, %v1824
        %v1835 = vpack.c.b16 %v1827, %v1826
        %1844 = vmatprep.subr.bf16.mxu0 0
        %1845 = vmatpush1.bf16.msra.mxu0 %v1828
        %1846 = vmatprep.subr.bf16.mxu0 0
        %1847 = vmatpush1.bf16.msra.mxu0 %v1829
        %1848 = vmatprep.subr.bf16.mxu0 0
        %1849 = vmatpush1.bf16.msra.mxu0 %v1830
        %1850 = vmatprep.subr.bf16.mxu0 0
        %1851 = vmatpush1.bf16.msra.mxu0 %v1831
        %1852 = vmatprep.subr.bf16.mxu0 0
        %1853 = vmatpush1.bf16.msra.mxu0 %v1832
        %1854 = vmatprep.subr.bf16.mxu0 0
        %1855 = vmatpush1.bf16.msra.mxu0 %v1833
        %1856 = vmatprep.subr.bf16.mxu0 0
        %1857 = vmatpush1.bf16.msra.mxu0 %v1834
        %1858 = vmatprep.subr.bf16.mxu0 0
        %1859 = vmatpush1.bf16.msra.mxu0 %v1835
        %1860 = vmatprep.subr.bf16.mxu0 0
        %1861 = vmatpush1.bf16.msra.mxu0 0
        %1862 = vmatprep.subr.bf16.mxu0 0
        %1863 = vmatpush1.bf16.msra.mxu0 0
        %1864 = vmatprep.subr.bf16.mxu0 0
        %1865 = vmatpush1.bf16.msra.mxu0 0
        %1866 = vmatprep.subr.bf16.mxu0 0
        %1867 = vmatpush1.bf16.msra.mxu0 0
        %1868 = vmatprep.subr.bf16.mxu0 0
        %1869 = vmatpush1.bf16.msra.mxu0 0
        %1870 = vmatprep.subr.bf16.mxu0 0
        %1871 = vmatpush1.bf16.msra.mxu0 0
        %1872 = vmatprep.subr.bf16.mxu0 0
        %1873 = vmatpush1.bf16.msra.mxu0 0
        %1874 = vmatprep.subr.bf16.mxu0 0
        %1875 = vmatpush1.bf16.msra.mxu0 0
        %1876 = vmatprep.mubr.bf16.mxu0 0
        %1877 = vmatmul.mubr.bf16.gmra.mrb[0].mxu0 %v1675
        %v1878 = vpop.f32.mrb[0].mxu0
        %v1879 = vadd.f32 %v1791, %v1878
        %v1880 = vpop.f32.mrb[0].mxu0
        %v1881 = vpop.f32.mrb[0].mxu0
        %v1882 = vpop.f32.mrb[0].mxu0
        %1883 = vdwg.mxu0
        %v1884 = vld [vmem:[%s14] sm:$0x1]
        %v1886 = vlaneseq
        %v1887 = vshrl.u32 %v1886, 7
        %v1888 = vsub.s32 0, %v1887
        %v1889 = vrot.slane %v1884, %v1888
        %v1891 = vadd.f32 %v1879, %v1889
        %v1892 = vtanh.pop %v1891
        %1893 = vst [vmem:[#allocation4] sm:$0xff] %v1892
        %1894 = vst [vmem:[#allocation2] sm:$0xff] %v1892
        %1895 = vst [vmem:[#allocation5] sm:$0xff] %v1461
        %1896 = vst [vmem:[#allocation3] sm:$0xff] %v1461
      $region88: #{hierachical_forward_train.6} parent=79 // pred_fallthru
        _
      %p1897 = scmp.lt.s32.totalorder %s30, 1
      %s1898 = scalar_select %p1897, %s30, 1
      %p1899 = scmp.lt.s32.totalorder %s31, 4
      %s1900 = scalar_select %p1899, %s31, 4
      %s1901 = smul.addr %s1898, 5
      %s1902 = sadd.s32 %s1900, %s1901
      %s1903 = smul.addr %s1902, 8
      %s1904 = scalar_lea.vmem %s15, %s1903
      // Predicated region
      $region89: #{hierachical_forward_train.6} parent=79 // pred_check
        %p1905 = pneg %p380
      $region90: #{hierachical_forward_train.6} parent=79 // pred_check_branch
        %1907 = sbr.rel (%p1905) target = $region92
      $region91: #{hierachical_forward_train.6} parent=79 // pred_region
        _
      $region92: #{hierachical_forward_train.6} parent=79 // pred_fallthru
        _
    $region80: #{hierachical_forward_train.6} parent=5 // pred_fallthru
      _
    %p1908 = scmp.le.s32.totalorder 2, %s21
    // Predicated region
    $region93: #{hierachical_forward_train.6} parent=5 // pred_check
      %p1909 = pneg %p1908
    $region94: #{hierachical_forward_train.6} parent=5 // pred_check_branch
      %1911 = sbr.rel (%p1909) target = $region96
    $region95: #{hierachical_forward_train.6} parent=5 // pred_region
      %s1912 = ssub.s32 %s21, 2
      // Predicated region
      $region97: #{hierachical_forward_train.6} parent=95 // pred_check
        %p1913 = pneg %p386
      $region98: #{hierachical_forward_train.6} parent=95 // pred_check_branch
        %1915 = sbr.rel (%p1913) target = $region100
      $region99: #{hierachical_forward_train.6} parent=95 // pred_region
        %p1916 = scmp.lt.s32.totalorder %s32, 1
        %s1917 = scalar_select %p1916, %s32, 1
        %p1918 = scmp.lt.s32.totalorder %s33, 4
        %s1919 = scalar_select %p1918, %s33, 4
        %s1920 = smul.addr %s1917, 5
        %s1921 = sadd.s32 %s1919, %s1920
        %s1922 = smul.addr %s1921, 8
        %s1923 = scalar_lea.vmem %s15, %s1922
      $region100: #{hierachical_forward_train.6} parent=95 // pred_fallthru
        _
    $region96: #{hierachical_forward_train.6} parent=5 // pred_fallthru
      _
  $region6: #{hierachical_forward_train.6} parent=0 // loop_footer
    %s25 = sadd.s32 1, %s21
  $region7: #{hierachical_forward_train.6} parent=0 // loop_footer_branch
    %20 = sbr.rel target = $region3
  $region8: #{hierachical_forward_train.6} parent=0 // loop_exit
    _

</llo_original>
